<compile_context>
chip_gen: v7x
topology: tpu7x:2x2x1
jax: 0.10.0
libtpu: 0.0.40
codegen_flags: <defaults>
</compile_context>

<pallas_src>
import functools
import math

import jax
import jax.numpy as jnp
from jax.experimental import pallas as pl
from jax.experimental.pallas import tpu as pltpu


# ----------------------------------------------------------------------------
# Fused kernel: EdgeConv (two Fourier-KAN layers + max over k) + linear1 +
#               per-graph max/mean pooling + linear2.
#   grid = (num_graphs, point_tiles_per_graph)
#   input : edge rows (1, TP*K, 6) tile of one graph; stacked f32 weights
#   output: (1, 1, out_channels) per graph (written on the last point tile)
# ----------------------------------------------------------------------------
def _phi(v):
    """[cos(v), sin(v)] computed as a single lane-dense cos pass (sin(v)=cos(v-pi/2))."""
    return jnp.cos(jnp.concatenate([v, v - (math.pi / 2)], axis=-1))


def fused_kernel(e_ref, w1_ref, b1_ref, w2_ref, b2_ref, w3_ref, b3_ref,
                 w4_ref, b4_ref, o_ref, max_acc, sum_acc, *, k, inv_p):
    j = pl.program_id(1)

    @pl.when(j == 0)
    def _():
        max_acc[...] = jnp.full(max_acc.shape, -jnp.inf, max_acc.dtype)
        sum_acc[...] = jnp.zeros(sum_acc.shape, sum_acc.dtype)

    e = e_ref[0]                                                     # (TR, 6), TR = tp*k

    # KAN 6 -> 64 : stacked W = [Wc; Ws] so phi = cos([e, e-pi/2]) needs one matmul.
    # (A transposed-layer-1 layout would further densify these 12 lanes; phi2 dominates,
    #  so it is left row-major for simplicity.)
    h1 = jnp.dot(_phi(e), w1_ref[...],
                 preferred_element_type=jnp.float32) + b1_ref[...]   # (TR, 64)

    # KAN 64 -> 128 : single 128-deep contraction.
    h2 = jnp.dot(_phi(h1), w2_ref[...],
                 preferred_element_type=jnp.float32) + b2_ref[...]   # (TR, 128)

    # aggr='max' over the k neighbours (rows of one point are consecutive).
    x1 = jnp.max(h2.reshape(h2.shape[0] // k, k, h2.shape[-1]), axis=1)   # (TP, 128)

    # linear1 : KAN 128 -> emb, fused (data already resident in vregs).
    x = jnp.dot(_phi(x1), w3_ref[...],
                preferred_element_type=jnp.float32) + b3_ref[...]    # (TP, emb)

    # global max / mean pool: running per-graph accumulators over point tiles.
    max_acc[...] = jnp.maximum(max_acc[...], jnp.max(x, axis=0, keepdims=True))
    sum_acc[...] = sum_acc[...] + jnp.sum(x, axis=0, keepdims=True)

    @pl.when(j == pl.num_programs(1) - 1)
    def _():
        cat = jnp.concatenate([max_acc[...], sum_acc[...] * inv_p], axis=-1)   # (1, 2*emb)
        out = jnp.dot(_phi(cat), w4_ref[...],
                      preferred_element_type=jnp.float32) + b4_ref[...]        # (1, out)
        o_ref[...] = out[None]


def _choose_point_tile(p, k, target=512):
    """Largest tp <= target with tp | p and (tp*k) % 8 == 0 (sublane alignment).
    Falls back to tp = p (block == full per-graph extent).
    TODO(synk): cap `target` lower on v7x (64 MiB VMEM) for very large graphs."""
    for tp in range(min(target, p), 0, -1):
        if p % tp == 0 and (tp * k) % 8 == 0:
            return tp
    return p


def kan_lite_dgcnn_pallas(edge_rows, num_graphs, pts_per_graph, k, params,
                          tp_target=512):
    """edge_rows: (N*k, 6) f32 (contiguous equal-sized graphs). Returns (B, out)."""
    w1, b1, w2, b2, w3, b3, w4, b4 = params
    emb = w3.shape[1]
    out_dim = w4.shape[1]
    c = edge_rows.shape[-1]

    rows = edge_rows.reshape(num_graphs, pts_per_graph * k, c)

    tp = _choose_point_tile(pts_per_graph, k, tp_target)
    n_pt_tiles = pts_per_graph // tp
    tr = tp * k

    def const(shape):
        return pl.BlockSpec(shape, lambda g, j: (0,) * len(shape))

    out = pl.pallas_call(
        functools.partial(fused_kernel, k=k, inv_p=1.0 / pts_per_graph),
        out_shape=jax.ShapeDtypeStruct((num_graphs, 1, out_dim), jnp.float32),
        grid=(num_graphs, n_pt_tiles),
        in_specs=[
            pl.BlockSpec((1, tr, c), lambda g, j: (g, j, 0)),   # edge rows, pipelined
            const(w1.shape), const(b1.shape),                   # weights: constant index
            const(w2.shape), const(b2.shape),                   #   maps -> no re-DMA
            const(w3.shape), const(b3.shape),
            const(w4.shape), const(b4.shape),
        ],
        out_specs=pl.BlockSpec((1, 1, out_dim), lambda g, j: (g, 0, 0)),
        scratch_shapes=[pltpu.VMEM((1, emb), jnp.float32),      # per-graph max pool
                        pltpu.VMEM((1, emb), jnp.float32)],     # per-graph sum pool
        compiler_params=pltpu.CompilerParams(
            dimension_semantics=("parallel", "arbitrary"),      # graphs shard over TCs
            vmem_limit_bytes=32 * 1024 * 1024),                 # explicit (v5e default 16MiB)
    )(rows, w1, b1, w2, b2, w3, b3, w4, b4)
    return out[:, 0, :]


# ----------------------------------------------------------------------------
# Plain-JAX glue: kNN graph (within each graph), edge-row gather, params.
# ----------------------------------------------------------------------------
def knn_indices(pos, num_graphs, pts_per_graph, k):
    """Per-graph kNN; self-match included (matches torch_cluster.knn(x, x, k)
    as used by DynamicEdgeConv).  Returns global indices (N, k)."""
    posb = pos.reshape(num_graphs, pts_per_graph, 3)
    d2 = jnp.sum((posb[:, :, None, :] - posb[:, None, :, :]) ** 2, axis=-1)
    _, idx = jax.lax.top_k(-d2, k)                          # (B, P, k) local indices
    offs = (jnp.arange(num_graphs) * pts_per_graph)[:, None, None]
    return (idx + offs).reshape(num_graphs * pts_per_graph, k)


def build_edge_rows(pos, idx):
    """DynamicEdgeConv message input cat([x_i, x_j - x_i], -1) as 2-D rows
    (point i's k rows are consecutive)."""
    n, k = idx.shape
    x_i = jnp.repeat(pos, k, axis=0)                        # (N*k, 3)
    x_j = pos[idx.reshape(-1)]                              # (N*k, 3)
    return jnp.concatenate([x_i, x_j - x_i], axis=-1)       # (N*k, 6)


def fourier_kan_params(key, in_dim, out_dim, gridsize=1):
    """NaiveFourierKANLayer params (gridsize=1): Wc, Ws ~ N(0,1)/(sqrt(in)*sqrt(grid)), b=0."""
    kc, ks = jax.random.split(key)
    scale = 1.0 / (math.sqrt(in_dim) * math.sqrt(gridsize))
    wc = jax.random.normal(kc, (in_dim, out_dim), jnp.float32) * scale
    ws = jax.random.normal(ks, (in_dim, out_dim), jnp.float32) * scale
    b = jnp.zeros((1, out_dim), jnp.float32)
    return wc, ws, b


def stack_fourier(wc, ws):
    """phi = cos([x, x - pi/2]) = [cos(x), sin(x)]  ->  W = [Wc; Ws] (one matmul)."""
    return jnp.concatenate([wc, ws], axis=0)


def kan_lite_dgcnn(pos, num_graphs, pts_per_graph, k, params):
    # TODO(synk): ragged batches (unequal graph sizes) would need masked pooling.
    idx = knn_indices(pos, num_graphs, pts_per_graph, k)
    rows = build_edge_rows(pos, idx)                        # (N*k, 6)
    return kan_lite_dgcnn_pallas(rows, num_graphs, pts_per_graph, k, params)


# ----------------------------------------------------------------------------
# Pure-JAX f32 reference (matches the PyTorch module) for validation.
# ----------------------------------------------------------------------------
def _kan_layer_ref(x, wc, ws, b):
    hi = jax.lax.Precision.HIGHEST
    return (jnp.dot(jnp.cos(x), wc, precision=hi)
            + jnp.dot(jnp.sin(x), ws, precision=hi) + b)


def forward_ref(pos, num_graphs, pts_per_graph, k, raw_params):
    (wc1, ws1, b1), (wc2, ws2, b2), (wc3, ws3, b3), (wc4, ws4, b4) = raw_params
    idx = knn_indices(pos, num_graphs, pts_per_graph, k)
    rows = build_edge_rows(pos, idx)
    h1 = _kan_layer_ref(rows, wc1, ws1, b1)
    h2 = _kan_layer_ref(h1, wc2, ws2, b2)
    x1 = jnp.max(h2.reshape(-1, k, h2.shape[-1]), axis=1)            # EdgeConv max aggr
    x = _kan_layer_ref(x1, wc3, ws3, b3)                             # linear1
    xb = x.reshape(num_graphs, pts_per_graph, -1)
    cat = jnp.concatenate([xb.max(axis=1), xb.mean(axis=1)], axis=-1)
    return _kan_layer_ref(cat, wc4, ws4, b4)                         # linear2


if __name__ == "__main__":
    B, P, K_NEIGH, EMB_DIMS, OUT_CH = 2, 16, 4, 32, 7
    N = B * P

    key = jax.random.PRNGKey(0)
    k_pos, k_e1, k_e2, k_l1, k_l2 = jax.random.split(key, 5)

    pos = jax.random.normal(k_pos, (N, 3), jnp.float32)              # data.pos
    batch = jnp.repeat(jnp.arange(B, dtype=jnp.int32), P)            # data.batch (contiguous)

    raw1 = fourier_kan_params(k_e1, 2 * 3, 64)                       # MultiLayerKAN[6 -> 64]
    raw2 = fourier_kan_params(k_e2, 64, 128)                         # MultiLayerKAN[64 -> 128]
    raw3 = fourier_kan_params(k_l1, 128, EMB_DIMS)                   # linear1
    raw4 = fourier_kan_params(k_l2, 2 * EMB_DIMS, OUT_CH)            # linear2

    params = (stack_fourier(raw1[0], raw1[1]), raw1[2],
              stack_fourier(raw2[0], raw2[1]), raw2[2],
              stack_fourier(raw3[0], raw3[1]), raw3[2],
              stack_fourier(raw4[0], raw4[1]), raw4[2])

    out = kan_lite_dgcnn(pos, B, P, K_NEIGH, params)
    out = jax.block_until_ready(out)
    assert out.shape == (B, OUT_CH) and out.dtype == jnp.float32

    ref = forward_ref(pos, B, P, K_NEIGH, (raw1, raw2, raw3, raw4))
    err = float(jnp.max(jnp.abs(out - ref)))
    assert err < 1e-2, f"mismatch vs f32 reference: max|err|={err}"
    print("KERNEL_OK")
</pallas_src>

<mosaic_0001>
module attributes {stable_mosaic.version = 11 : i64} {
  func.func @fused_kernel(%arg0: i32, %arg1: i32, %arg2: memref<1x64x6xf32, #tpu.memory_space<vmem>>, %arg3: memref<12x64xf32, #tpu.memory_space<vmem>>, %arg4: memref<1x64xf32, #tpu.memory_space<vmem>>, %arg5: memref<128x128xf32, #tpu.memory_space<vmem>>, %arg6: memref<1x128xf32, #tpu.memory_space<vmem>>, %arg7: memref<256x32xf32, #tpu.memory_space<vmem>>, %arg8: memref<1x32xf32, #tpu.memory_space<vmem>>, %arg9: memref<128x7xf32, #tpu.memory_space<vmem>>, %arg10: memref<1x7xf32, #tpu.memory_space<vmem>>, %arg11: memref<1x1x7xf32, #tpu.memory_space<vmem>>, %arg12: memref<1x32xf32, #tpu.memory_space<vmem>>, %arg13: memref<1x32xf32, #tpu.memory_space<vmem>>) attributes {dimension_semantics = [#tpu.dimension_semantics<parallel>, #tpu.dimension_semantics<arbitrary>], iteration_bounds = array<i64: 2, 1>, scalar_prefetch = 0 : i64, scratch_operands = 2 : i64, tpu.core_type = #tpu.core_type<tc>, window_params = [{transform_indices = @transform_0, window_bounds = array<i64: 1, 64, 6>}, {pipeline_mode = #tpu.pipeline_mode<synchronous>, transform_indices = @transform_1, window_bounds = array<i64: 12, 64>}, {pipeline_mode = #tpu.pipeline_mode<synchronous>, transform_indices = @transform_2, window_bounds = array<i64: 1, 64>}, {pipeline_mode = #tpu.pipeline_mode<synchronous>, transform_indices = @transform_3, window_bounds = array<i64: 128, 128>}, {pipeline_mode = #tpu.pipeline_mode<synchronous>, transform_indices = @transform_4, window_bounds = array<i64: 1, 128>}, {pipeline_mode = #tpu.pipeline_mode<synchronous>, transform_indices = @transform_5, window_bounds = array<i64: 256, 32>}, {pipeline_mode = #tpu.pipeline_mode<synchronous>, transform_indices = @transform_6, window_bounds = array<i64: 1, 32>}, {pipeline_mode = #tpu.pipeline_mode<synchronous>, transform_indices = @transform_7, window_bounds = array<i64: 128, 7>}, {pipeline_mode = #tpu.pipeline_mode<synchronous>, transform_indices = @transform_8, window_bounds = array<i64: 1, 7>}, {transform_indices = @transform_9, window_bounds = array<i64: 1, 1, 7>}]} {
    %c0_i32 = arith.constant 0 : i32
    %0 = arith.cmpi eq, %arg1, %c0_i32 : i32
    %1 = arith.extui %0 : i1 to i32
    %c0_i32_0 = arith.constant 0 : i32
    %2 = arith.cmpi ne, %1, %c0_i32_0 : i32
    scf.if %2 {
      %cst_33 = arith.constant 0xFF800000 : f32
      %47 = vector.broadcast %cst_33 : f32 to vector<1x32xf32>
      %c0_34 = arith.constant 0 : index
      %c0_35 = arith.constant 0 : index
      %48 = vector.load %arg12[%c0_34, %c0_35] : memref<1x32xf32, #tpu.memory_space<vmem>>, vector<1x32xf32>
      tpu.vector_store %arg12[%c0_34, %c0_35], %47 {strides = array<i32>} : memref<1x32xf32, #tpu.memory_space<vmem>>, vector<1x32xf32>,
      %cst_36 = arith.constant 0.000000e+00 : f32
      %49 = vector.broadcast %cst_36 : f32 to vector<1x32xf32>
      %c0_37 = arith.constant 0 : index
      %c0_38 = arith.constant 0 : index
      %50 = vector.load %arg13[%c0_37, %c0_38] : memref<1x32xf32, #tpu.memory_space<vmem>>, vector<1x32xf32>
      tpu.vector_store %arg13[%c0_37, %c0_38], %49 {strides = array<i32>} : memref<1x32xf32, #tpu.memory_space<vmem>>, vector<1x32xf32>,
    } else {
    }
    %c0 = arith.constant 0 : index
    %c0_1 = arith.constant 0 : index
    %c0_2 = arith.constant 0 : index
    %3 = vector.load %arg2[%c0, %c0_1, %c0_2] : memref<1x64x6xf32, #tpu.memory_space<vmem>>, vector<1x64x6xf32>
    %4 = vector.shape_cast %3 : vector<1x64x6xf32> to vector<64x6xf32>
    %cst = arith.constant 1.57079637 : f32
    %5 = vector.broadcast %cst : f32 to vector<64x6xf32>
    %6 = arith.subf %4, %5 : vector<64x6xf32>
    %7 = tpu.concatenate %4, %6 in 1 : vector<64x6xf32>, vector<64x6xf32> -> vector<64x12xf32>
    %8 = math.cos %7 : vector<64x12xf32>
    %c0_3 = arith.constant 0 : index
    %c0_4 = arith.constant 0 : index
    %9 = vector.load %arg3[%c0_3, %c0_4] : memref<12x64xf32, #tpu.memory_space<vmem>>, vector<12x64xf32>
    %cst_5 = arith.constant dense<0.000000e+00> : vector<64x64xf32>
    %10 = tpu.matmul %8, %9, %cst_5 {dimension_numbers = #tpu.dot_dimension_numbers<[1], [0], [0], [1], [0, 0, 1, 1], [], []>} : vector<64x12xf32>, vector<12x64xf32>, vector<64x64xf32> -> vector<64x64xf32>
    %c0_6 = arith.constant 0 : index
    %c0_7 = arith.constant 0 : index
    %11 = vector.load %arg4[%c0_6, %c0_7] : memref<1x64xf32, #tpu.memory_space<vmem>>, vector<1x64xf32>
    %12 = vector.broadcast %11 : vector<1x64xf32> to vector<64x64xf32>
    %13 = arith.addf %10, %12 : vector<64x64xf32>
    %cst_8 = arith.constant 1.57079637 : f32
    %14 = vector.broadcast %cst_8 : f32 to vector<64x64xf32>
    %15 = arith.subf %13, %14 : vector<64x64xf32>
    %16 = tpu.concatenate %13, %15 in 1 : vector<64x64xf32>, vector<64x64xf32> -> vector<64x128xf32>
    %17 = math.cos %16 : vector<64x128xf32>
    %c0_9 = arith.constant 0 : index
    %c0_10 = arith.constant 0 : index
    %18 = vector.load %arg5[%c0_9, %c0_10] : memref<128x128xf32, #tpu.memory_space<vmem>>, vector<128x128xf32>
    %cst_11 = arith.constant dense<0.000000e+00> : vector<64x128xf32>
    %19 = tpu.matmul %17, %18, %cst_11 {dimension_numbers = #tpu.dot_dimension_numbers<[1], [0], [0], [1], [0, 0, 1, 1], [], []>} : vector<64x128xf32>, vector<128x128xf32>, vector<64x128xf32> -> vector<64x128xf32>
    %c0_12 = arith.constant 0 : index
    %c0_13 = arith.constant 0 : index
    %20 = vector.load %arg6[%c0_12, %c0_13] : memref<1x128xf32, #tpu.memory_space<vmem>>, vector<1x128xf32>
    %21 = vector.broadcast %20 : vector<1x128xf32> to vector<64x128xf32>
    %22 = arith.addf %19, %21 : vector<64x128xf32>
    %23 = vector.shape_cast %22 : vector<64x128xf32> to vector<16x4x128xf32>
    %cst_14 = arith.constant dense<0xFF800000> : vector<16x128xf32>
    %24 = vector.multi_reduction <maximumf>, %23, %cst_14 [1] : vector<16x4x128xf32> to vector<16x128xf32>
    %cst_15 = arith.constant 1.57079637 : f32
    %25 = vector.broadcast %cst_15 : f32 to vector<16x128xf32>
    %26 = arith.subf %24, %25 : vector<16x128xf32>
    %27 = tpu.concatenate %24, %26 in 1 : vector<16x128xf32>, vector<16x128xf32> -> vector<16x256xf32>
    %28 = math.cos %27 : vector<16x256xf32>
    %c0_16 = arith.constant 0 : index
    %c0_17 = arith.constant 0 : index
    %29 = vector.load %arg7[%c0_16, %c0_17] : memref<256x32xf32, #tpu.memory_space<vmem>>, vector<256x32xf32>
    %cst_18 = arith.constant dense<0.000000e+00> : vector<16x32xf32>
    %30 = tpu.matmul %28, %29, %cst_18 {dimension_numbers = #tpu.dot_dimension_numbers<[1], [0], [0], [1], [0, 0, 1, 1], [], []>} : vector<16x256xf32>, vector<256x32xf32>, vector<16x32xf32> -> vector<16x32xf32>
    %c0_19 = arith.constant 0 : index
    %c0_20 = arith.constant 0 : index
    %31 = vector.load %arg8[%c0_19, %c0_20] : memref<1x32xf32, #tpu.memory_space<vmem>>, vector<1x32xf32>
    %32 = vector.broadcast %31 : vector<1x32xf32> to vector<16x32xf32>
    %33 = arith.addf %30, %32 : vector<16x32xf32>
    %c0_21 = arith.constant 0 : index
    %c0_22 = arith.constant 0 : index
    %34 = vector.load %arg12[%c0_21, %c0_22] : memref<1x32xf32, #tpu.memory_space<vmem>>, vector<1x32xf32>
    %cst_23 = arith.constant dense<0xFF800000> : vector<32xf32>
    %35 = vector.multi_reduction <maximumf>, %33, %cst_23 [0] : vector<16x32xf32> to vector<32xf32>
    %36 = vector.shape_cast %35 : vector<32xf32> to vector<1x32xf32>
    %37 = arith.maximumf %34, %36 : vector<1x32xf32>
    %c0_24 = arith.constant 0 : index
    %c0_25 = arith.constant 0 : index
    %38 = vector.load %arg12[%c0_24, %c0_25] : memref<1x32xf32, #tpu.memory_space<vmem>>, vector<1x32xf32>
    tpu.vector_store %arg12[%c0_24, %c0_25], %37 {strides = array<i32>} : memref<1x32xf32, #tpu.memory_space<vmem>>, vector<1x32xf32>,
    %c0_26 = arith.constant 0 : index
    %c0_27 = arith.constant 0 : index
    %39 = vector.load %arg13[%c0_26, %c0_27] : memref<1x32xf32, #tpu.memory_space<vmem>>, vector<1x32xf32>
    %cst_28 = arith.constant dense<0.000000e+00> : vector<32xf32>
    %40 = vector.multi_reduction <add>, %33, %cst_28 [0] : vector<16x32xf32> to vector<32xf32>
    %41 = vector.shape_cast %40 : vector<32xf32> to vector<1x32xf32>
    %42 = arith.addf %39, %41 : vector<1x32xf32>
    %c0_29 = arith.constant 0 : index
    %c0_30 = arith.constant 0 : index
    %43 = vector.load %arg13[%c0_29, %c0_30] : memref<1x32xf32, #tpu.memory_space<vmem>>, vector<1x32xf32>
    tpu.vector_store %arg13[%c0_29, %c0_30], %42 {strides = array<i32>} : memref<1x32xf32, #tpu.memory_space<vmem>>, vector<1x32xf32>,
    %c0_i32_31 = arith.constant 0 : i32
    %44 = arith.cmpi eq, %arg1, %c0_i32_31 : i32
    %45 = arith.extui %44 : i1 to i32
    %c0_i32_32 = arith.constant 0 : i32
    %46 = arith.cmpi ne, %45, %c0_i32_32 : i32
    scf.if %46 {
      %c0_33 = arith.constant 0 : index
      %c0_34 = arith.constant 0 : index
      %47 = vector.load %arg12[%c0_33, %c0_34] : memref<1x32xf32, #tpu.memory_space<vmem>>, vector<1x32xf32>
      %c0_35 = arith.constant 0 : index
      %c0_36 = arith.constant 0 : index
      %48 = vector.load %arg13[%c0_35, %c0_36] : memref<1x32xf32, #tpu.memory_space<vmem>>, vector<1x32xf32>
      %cst_37 = arith.constant 6.250000e-02 : f32
      %49 = vector.broadcast %cst_37 : f32 to vector<1x32xf32>
      %50 = arith.mulf %48, %49 : vector<1x32xf32>
      %51 = tpu.concatenate %47, %50 in 1 : vector<1x32xf32>, vector<1x32xf32> -> vector<1x64xf32>
      %cst_38 = arith.constant 1.57079637 : f32
      %52 = vector.broadcast %cst_38 : f32 to vector<1x64xf32>
      %53 = arith.subf %51, %52 : vector<1x64xf32>
      %54 = tpu.concatenate %51, %53 in 1 : vector<1x64xf32>, vector<1x64xf32> -> vector<1x128xf32>
      %55 = math.cos %54 : vector<1x128xf32>
      %c0_39 = arith.constant 0 : index
      %c0_40 = arith.constant 0 : index
      %56 = vector.load %arg9[%c0_39, %c0_40] : memref<128x7xf32, #tpu.memory_space<vmem>>, vector<128x7xf32>
      %cst_41 = arith.constant dense<0.000000e+00> : vector<1x7xf32>
      %57 = tpu.matmul %55, %56, %cst_41 {dimension_numbers = #tpu.dot_dimension_numbers<[1], [0], [0], [1], [0, 0, 1, 1], [], []>} : vector<1x128xf32>, vector<128x7xf32>, vector<1x7xf32> -> vector<1x7xf32>
      %c0_42 = arith.constant 0 : index
      %c0_43 = arith.constant 0 : index
      %58 = vector.load %arg10[%c0_42, %c0_43] : memref<1x7xf32, #tpu.memory_space<vmem>>, vector<1x7xf32>
      %59 = arith.addf %57, %58 : vector<1x7xf32>
      %60 = vector.shape_cast %59 : vector<1x7xf32> to vector<1x1x7xf32>
      %c0_44 = arith.constant 0 : index
      %c0_45 = arith.constant 0 : index
      %c0_46 = arith.constant 0 : index
      %61 = vector.load %arg11[%c0_44, %c0_45, %c0_46] : memref<1x1x7xf32, #tpu.memory_space<vmem>>, vector<1x1x7xf32>
      tpu.vector_store %arg11[%c0_44, %c0_45, %c0_46], %60 {strides = array<i32>} : memref<1x1x7xf32, #tpu.memory_space<vmem>>, vector<1x1x7xf32>,
    } else {
    }
    return
  }
  func.func @transform_0(%arg0: i32, %arg1: i32) -> (i32, i32, i32) {
    %c0_i32 = arith.constant 0 : i32
    %c0_i32_0 = arith.constant 0 : i32
    return %arg0, %arg1, %c0_i32 : i32, i32, i32
  }
  func.func @transform_1(%arg0: i32, %arg1: i32) -> (i32, i32) {
    %c0_i32 = arith.constant 0 : i32
    %c0_i32_0 = arith.constant 0 : i32
    %c0_i32_1 = arith.constant 0 : i32
    return %c0_i32, %c0_i32_0 : i32, i32
  }
  func.func @transform_2(%arg0: i32, %arg1: i32) -> (i32, i32) {
    %c0_i32 = arith.constant 0 : i32
    %c0_i32_0 = arith.constant 0 : i32
    %c0_i32_1 = arith.constant 0 : i32
    return %c0_i32, %c0_i32_0 : i32, i32
  }
  func.func @transform_3(%arg0: i32, %arg1: i32) -> (i32, i32) {
    %c0_i32 = arith.constant 0 : i32
    %c0_i32_0 = arith.constant 0 : i32
    %c0_i32_1 = arith.constant 0 : i32
    return %c0_i32, %c0_i32_0 : i32, i32
  }
  func.func @transform_4(%arg0: i32, %arg1: i32) -> (i32, i32) {
    %c0_i32 = arith.constant 0 : i32
    %c0_i32_0 = arith.constant 0 : i32
    %c0_i32_1 = arith.constant 0 : i32
    return %c0_i32, %c0_i32_0 : i32, i32
  }
  func.func @transform_5(%arg0: i32, %arg1: i32) -> (i32, i32) {
    %c0_i32 = arith.constant 0 : i32
    %c0_i32_0 = arith.constant 0 : i32
    %c0_i32_1 = arith.constant 0 : i32
    return %c0_i32, %c0_i32_0 : i32, i32
  }
  func.func @transform_6(%arg0: i32, %arg1: i32) -> (i32, i32) {
    %c0_i32 = arith.constant 0 : i32
    %c0_i32_0 = arith.constant 0 : i32
    %c0_i32_1 = arith.constant 0 : i32
    return %c0_i32, %c0_i32_0 : i32, i32
  }
  func.func @transform_7(%arg0: i32, %arg1: i32) -> (i32, i32) {
    %c0_i32 = arith.constant 0 : i32
    %c0_i32_0 = arith.constant 0 : i32
    %c0_i32_1 = arith.constant 0 : i32
    return %c0_i32, %c0_i32_0 : i32, i32
  }
  func.func @transform_8(%arg0: i32, %arg1: i32) -> (i32, i32) {
    %c0_i32 = arith.constant 0 : i32
    %c0_i32_0 = arith.constant 0 : i32
    %c0_i32_1 = arith.constant 0 : i32
    return %c0_i32, %c0_i32_0 : i32, i32
  }
  func.func @transform_9(%arg0: i32, %arg1: i32) -> (i32, i32, i32) {
    %c0_i32 = arith.constant 0 : i32
    %c0_i32_0 = arith.constant 0 : i32
    %c0_i32_1 = arith.constant 0 : i32
    return %arg0, %c0_i32, %c0_i32_0 : i32, i32, i32
  }
}

</mosaic_0001>

<llo_original>
// kernel: tpu_custom_call.1
$region0: #{tpu_custom_call.1}
  #allocation0 [shape = 'u32[]', space=smem, size = 0x4, offset = 0x4, fixed_abs, tag = 'smem constant byte address 0x4 - core index']
  #allocation1 [shape = 'u32[144,128]{1,0:T(1,128)}', space=vmem, size = 0x12000, scoped, tag = 'internal scratch']
  #allocation2 [shape = 'f32[1,32]{1,0:T(1,128)}', space=vmem, size = 0x200, scoped, tag = 'scratch operand']
  #allocation3 [shape = 'f32[1,32]{1,0:T(1,128)}', space=vmem, size = 0x200, scoped, tag = 'scratch operand']
  %s0 = inlined_call_operand.vmem [shape: f32[2,64,6], index: 0, kind: input, shape index: {}]
  %s1 = inlined_call_operand.vmem [shape: f32[12,64], index: 1, kind: input, shape index: {}]
  %s2 = inlined_call_operand.vmem [shape: f32[1,64], index: 2, kind: input, shape index: {}]
  %s3 = inlined_call_operand.vmem [shape: f32[128,128], index: 3, kind: input, shape index: {}]
  %s4 = inlined_call_operand.vmem [shape: f32[1,128], index: 4, kind: input, shape index: {}]
  %s5 = inlined_call_operand.vmem [shape: f32[256,32], index: 5, kind: input, shape index: {}]
  %s6 = inlined_call_operand.vmem [shape: f32[1,32], index: 6, kind: input, shape index: {}]
  %s7 = inlined_call_operand.vmem [shape: f32[128,7], index: 7, kind: input, shape index: {}]
  %s8 = inlined_call_operand.vmem [shape: f32[1,7], index: 8, kind: input, shape index: {}]
  %s9 = inlined_call_operand.hbm [shape: f32[2,1,7], index: 9, kind: output, shape index: {}]
  %s10 = sld [smem:[#allocation0]]
  $region77: #{tpu_custom_call.1} parent=0
    _
  %s12 = ssub.s32 1, %s10
  %s13 = scalar_select 0, %s12, %s10
  $region1: #{tpu_custom_call.1} parent=0
    #allocation4 [shape = 'u8[1024]{0}', space=vmem, size = 0x400, scoped, tag = 'output window, operand 0']
    #allocation5 [shape = 's32[2]{0}', space=sflag, size = 0x8, scoped, tag = 'scoped memory for tpu_custom_call.1']
    %14 = vsyncpa [#allocation5], 0
    %s15 = scalar_lea.sflag [#allocation5], 1
    %16 = vsyncpa %s15, 0
    loop: start=0, step=1, limit=4
    $region2: #{tpu_custom_call.1} parent=1 // loop_pre_header
      _
    $region3: #{tpu_custom_call.1} parent=1 // loop_header
      %s18 = sphi 0, %s22
      %p19 = scmp.ge.s32.totalorder %s18, 4
      %s25 = sphi 0, %s37
      %s26 = sphi 0, %s33
      %s27 = sphi 0, %s25
      %s28 = sphi 0, %s26
      %s29 = sphi 0, %s27
      %s30 = sphi 0, %s28
      %s42 = sphi 0, %s44
      %s45 = sphi 0, %s42
      %s46 = sphi 0, %s45
      %s62 = sphi 0, %s46
      %s66 = sphi 0, %s66
      %s68 = sphi 0, %s66
      %s69 = sphi 0, %s68
      %s83 = sphi 0, %s69
      %s87 = sphi 0, %s87
      %s89 = sphi 0, %s87
      %s90 = sphi 0, %s89
      %s104 = sphi 0, %s90
      %s108 = sphi 0, %s108
      %s110 = sphi 0, %s108
      %s111 = sphi 0, %s110
      %s125 = sphi 0, %s111
      %s129 = sphi 0, %s129
      %s131 = sphi 0, %s129
      %s132 = sphi 0, %s131
      %s146 = sphi 0, %s132
      %s150 = sphi 0, %s150
      %s152 = sphi 0, %s150
      %s153 = sphi 0, %s152
      %s167 = sphi 0, %s153
      %s171 = sphi 0, %s171
      %s173 = sphi 0, %s171
      %s174 = sphi 0, %s173
      %s188 = sphi 0, %s174
      %s192 = sphi 0, %s192
      %s194 = sphi 0, %s192
      %s195 = sphi 0, %s194
      %s209 = sphi 0, %s195
      %s213 = sphi 0, %s213
      %s215 = sphi 0, %s213
      %s216 = sphi 0, %s215
      %s230 = sphi 0, %s216
      %s236 = sphi 0, %s238
      %s239 = sphi 0, %s236
      %s240 = sphi 0, %s239
      %s256 = sphi 0, %s240
    $region4: #{tpu_custom_call.1} parent=1 // loop_header_branch
      %21 = sbr.rel (%p19) target = $region8
    $region5: #{tpu_custom_call.1} parent=1 // loop_body
      %s23 = ssub.s32 %s18, 1
      %s24 = ssub.s32 %s18, 2
      %s31 = sadd.s32 1, %s26
      %p32 = scmp.ge.s32.totalorder %s31, 1
      %s33 = scalar_select %p32, 0, %s31
      %s34 = sadd.s32 1, %s25
      %s35 = scalar_select %p32, %s34, %s25
      %p36 = scmp.ge.s32.totalorder %s35, 2
      %s37 = scalar_select %p36, 0, %s35
      %s38 = ssub.s32 %s25, %s37
      %s39 = ssub.s32 %s26, %s33
      %s40 = sor.u32 %s38, %s39
      %p41 = scmp.eq.s32.totalorder %s40, 0
      %s43 = sadd.s32 %s42, 1
      %s44 = scalar_select %p41, %s42, %s43
      %p47 = pneg %p41
      %p48 = scmp.eq.s32.totalorder %s18, 1
      %p49 = por %p47, %p48
      %p50 = scmp.ne.s32.totalorder %s42, %s45
      %p51 = scmp.eq.s32.totalorder %s18, 0
      %p52 = por %p50, %p51
      %p53 = scmp.ne.s32.totalorder %s42, %s45
      %p54 = scmp.eq.s32.totalorder %s23, 1
      %p55 = por %p53, %p54
      %p56 = scmp.ne.s32.totalorder %s45, %s46
      %p57 = scmp.eq.s32.totalorder %s23, 0
      %p58 = por %p56, %p57
      %p59 = scmp.ne.s32.totalorder %s45, %s46
      %p60 = scmp.eq.s32.totalorder %s24, 1
      %p61 = por %p59, %p60
      %p63 = scmp.ne.s32.totalorder %s46, %s62
      %p64 = scmp.eq.s32.totalorder %s24, 0
      %p65 = por %p63, %p64
      %s67 = sadd.s32 %s66, 1
      %p70 = scmp.eq.s32.totalorder %s18, 1
      %p71 = scmp.ne.s32.totalorder %s66, %s68
      %p72 = scmp.eq.s32.totalorder %s18, 0
      %p73 = por %p71, %p72
      %p74 = scmp.ne.s32.totalorder %s66, %s68
      %p75 = scmp.eq.s32.totalorder %s23, 1
      %p76 = por %p74, %p75
      %p77 = scmp.ne.s32.totalorder %s68, %s69
      %p78 = scmp.eq.s32.totalorder %s23, 0
      %p79 = por %p77, %p78
      %p80 = scmp.ne.s32.totalorder %s68, %s69
      %p81 = scmp.eq.s32.totalorder %s24, 1
      %p82 = por %p80, %p81
      %p84 = scmp.ne.s32.totalorder %s69, %s83
      %p85 = scmp.eq.s32.totalorder %s24, 0
      %p86 = por %p84, %p85
      %s88 = sadd.s32 %s87, 1
      %p91 = scmp.eq.s32.totalorder %s18, 1
      %p92 = scmp.ne.s32.totalorder %s87, %s89
      %p93 = scmp.eq.s32.totalorder %s18, 0
      %p94 = por %p92, %p93
      %p95 = scmp.ne.s32.totalorder %s87, %s89
      %p96 = scmp.eq.s32.totalorder %s23, 1
      %p97 = por %p95, %p96
      %p98 = scmp.ne.s32.totalorder %s89, %s90
      %p99 = scmp.eq.s32.totalorder %s23, 0
      %p100 = por %p98, %p99
      %p101 = scmp.ne.s32.totalorder %s89, %s90
      %p102 = scmp.eq.s32.totalorder %s24, 1
      %p103 = por %p101, %p102
      %p105 = scmp.ne.s32.totalorder %s90, %s104
      %p106 = scmp.eq.s32.totalorder %s24, 0
      %p107 = por %p105, %p106
      %s109 = sadd.s32 %s108, 1
      %p112 = scmp.eq.s32.totalorder %s18, 1
      %p113 = scmp.ne.s32.totalorder %s108, %s110
      %p114 = scmp.eq.s32.totalorder %s18, 0
      %p115 = por %p113, %p114
      %p116 = scmp.ne.s32.totalorder %s108, %s110
      %p117 = scmp.eq.s32.totalorder %s23, 1
      %p118 = por %p116, %p117
      %p119 = scmp.ne.s32.totalorder %s110, %s111
      %p120 = scmp.eq.s32.totalorder %s23, 0
      %p121 = por %p119, %p120
      %p122 = scmp.ne.s32.totalorder %s110, %s111
      %p123 = scmp.eq.s32.totalorder %s24, 1
      %p124 = por %p122, %p123
      %p126 = scmp.ne.s32.totalorder %s111, %s125
      %p127 = scmp.eq.s32.totalorder %s24, 0
      %p128 = por %p126, %p127
      %s130 = sadd.s32 %s129, 1
      %p133 = scmp.eq.s32.totalorder %s18, 1
      %p134 = scmp.ne.s32.totalorder %s129, %s131
      %p135 = scmp.eq.s32.totalorder %s18, 0
      %p136 = por %p134, %p135
      %p137 = scmp.ne.s32.totalorder %s129, %s131
      %p138 = scmp.eq.s32.totalorder %s23, 1
      %p139 = por %p137, %p138
      %p140 = scmp.ne.s32.totalorder %s131, %s132
      %p141 = scmp.eq.s32.totalorder %s23, 0
      %p142 = por %p140, %p141
      %p143 = scmp.ne.s32.totalorder %s131, %s132
      %p144 = scmp.eq.s32.totalorder %s24, 1
      %p145 = por %p143, %p144
      %p147 = scmp.ne.s32.totalorder %s132, %s146
      %p148 = scmp.eq.s32.totalorder %s24, 0
      %p149 = por %p147, %p148
      %s151 = sadd.s32 %s150, 1
      %p154 = scmp.eq.s32.totalorder %s18, 1
      %p155 = scmp.ne.s32.totalorder %s150, %s152
      %p156 = scmp.eq.s32.totalorder %s18, 0
      %p157 = por %p155, %p156
      %p158 = scmp.ne.s32.totalorder %s150, %s152
      %p159 = scmp.eq.s32.totalorder %s23, 1
      %p160 = por %p158, %p159
      %p161 = scmp.ne.s32.totalorder %s152, %s153
      %p162 = scmp.eq.s32.totalorder %s23, 0
      %p163 = por %p161, %p162
      %p164 = scmp.ne.s32.totalorder %s152, %s153
      %p165 = scmp.eq.s32.totalorder %s24, 1
      %p166 = por %p164, %p165
      %p168 = scmp.ne.s32.totalorder %s153, %s167
      %p169 = scmp.eq.s32.totalorder %s24, 0
      %p170 = por %p168, %p169
      %s172 = sadd.s32 %s171, 1
      %p175 = scmp.eq.s32.totalorder %s18, 1
      %p176 = scmp.ne.s32.totalorder %s171, %s173
      %p177 = scmp.eq.s32.totalorder %s18, 0
      %p178 = por %p176, %p177
      %p179 = scmp.ne.s32.totalorder %s171, %s173
      %p180 = scmp.eq.s32.totalorder %s23, 1
      %p181 = por %p179, %p180
      %p182 = scmp.ne.s32.totalorder %s173, %s174
      %p183 = scmp.eq.s32.totalorder %s23, 0
      %p184 = por %p182, %p183
      %p185 = scmp.ne.s32.totalorder %s173, %s174
      %p186 = scmp.eq.s32.totalorder %s24, 1
      %p187 = por %p185, %p186
      %p189 = scmp.ne.s32.totalorder %s174, %s188
      %p190 = scmp.eq.s32.totalorder %s24, 0
      %p191 = por %p189, %p190
      %s193 = sadd.s32 %s192, 1
      %p196 = scmp.eq.s32.totalorder %s18, 1
      %p197 = scmp.ne.s32.totalorder %s192, %s194
      %p198 = scmp.eq.s32.totalorder %s18, 0
      %p199 = por %p197, %p198
      %p200 = scmp.ne.s32.totalorder %s192, %s194
      %p201 = scmp.eq.s32.totalorder %s23, 1
      %p202 = por %p200, %p201
      %p203 = scmp.ne.s32.totalorder %s194, %s195
      %p204 = scmp.eq.s32.totalorder %s23, 0
      %p205 = por %p203, %p204
      %p206 = scmp.ne.s32.totalorder %s194, %s195
      %p207 = scmp.eq.s32.totalorder %s24, 1
      %p208 = por %p206, %p207
      %p210 = scmp.ne.s32.totalorder %s195, %s209
      %p211 = scmp.eq.s32.totalorder %s24, 0
      %p212 = por %p210, %p211
      %s214 = sadd.s32 %s213, 1
      %p217 = scmp.eq.s32.totalorder %s18, 1
      %p218 = scmp.ne.s32.totalorder %s213, %s215
      %p219 = scmp.eq.s32.totalorder %s18, 0
      %p220 = por %p218, %p219
      %p221 = scmp.ne.s32.totalorder %s213, %s215
      %p222 = scmp.eq.s32.totalorder %s23, 1
      %p223 = por %p221, %p222
      %p224 = scmp.ne.s32.totalorder %s215, %s216
      %p225 = scmp.eq.s32.totalorder %s23, 0
      %p226 = por %p224, %p225
      %p227 = scmp.ne.s32.totalorder %s215, %s216
      %p228 = scmp.eq.s32.totalorder %s24, 1
      %p229 = por %p227, %p228
      %p231 = scmp.ne.s32.totalorder %s216, %s230
      %p232 = scmp.eq.s32.totalorder %s24, 0
      %p233 = por %p231, %p232
      %s234 = ssub.s32 %s25, %s37
      %p235 = scmp.eq.s32.totalorder %s234, 0
      %s237 = sadd.s32 %s236, 1
      %s238 = scalar_select %p235, %s236, %s237
      %p241 = pneg %p235
      %p242 = scmp.eq.s32.totalorder %s18, 1
      %p243 = por %p241, %p242
      %p244 = scmp.ne.s32.totalorder %s236, %s239
      %p245 = scmp.eq.s32.totalorder %s18, 0
      %p246 = por %p244, %p245
      %p247 = scmp.ne.s32.totalorder %s236, %s239
      %p248 = scmp.eq.s32.totalorder %s23, 1
      %p249 = por %p247, %p248
      %p250 = scmp.ne.s32.totalorder %s239, %s240
      %p251 = scmp.eq.s32.totalorder %s23, 0
      %p252 = por %p250, %p251
      %p253 = scmp.ne.s32.totalorder %s239, %s240
      %p254 = scmp.eq.s32.totalorder %s24, 1
      %p255 = por %p253, %p254
      %p257 = scmp.ne.s32.totalorder %s240, %s256
      %p258 = scmp.eq.s32.totalorder %s24, 0
      %p259 = por %p257, %p258
      %p260 = scmp.le.s32.totalorder 1, %s18
      %p261 = scmp.lt.s32.totalorder %s18, 3
      %p262 = pnand %p260, %p261
      %p263 = pneg %p262
      // Predicated region
      $region9: #{tpu_custom_call.1} parent=5 // pred_check
        _
      $region10: #{tpu_custom_call.1} parent=5 // pred_check_branch
        %265 = sbr.rel (%p262) target = $region12
      $region11: #{tpu_custom_call.1} parent=5 // pred_region
        %s266 = ssub.s32 %s18, 1
        // Predicated region
        $region13: #{tpu_custom_call.1} parent=11 // pred_check
          %p267 = pneg %p79
        $region14: #{tpu_custom_call.1} parent=11 // pred_check_branch
          %269 = sbr.rel (%p267) target = $region16
        $region15: #{tpu_custom_call.1} parent=11 // pred_region
          _
        $region16: #{tpu_custom_call.1} parent=11 // pred_fallthru
          _
        // Predicated region
        $region17: #{tpu_custom_call.1} parent=11 // pred_check
          %p270 = pneg %p100
        $region18: #{tpu_custom_call.1} parent=11 // pred_check_branch
          %272 = sbr.rel (%p270) target = $region20
        $region19: #{tpu_custom_call.1} parent=11 // pred_region
          _
        $region20: #{tpu_custom_call.1} parent=11 // pred_fallthru
          _
        // Predicated region
        $region21: #{tpu_custom_call.1} parent=11 // pred_check
          %p273 = pneg %p121
        $region22: #{tpu_custom_call.1} parent=11 // pred_check_branch
          %275 = sbr.rel (%p273) target = $region24
        $region23: #{tpu_custom_call.1} parent=11 // pred_region
          _
        $region24: #{tpu_custom_call.1} parent=11 // pred_fallthru
          _
        // Predicated region
        $region25: #{tpu_custom_call.1} parent=11 // pred_check
          %p276 = pneg %p142
        $region26: #{tpu_custom_call.1} parent=11 // pred_check_branch
          %278 = sbr.rel (%p276) target = $region28
        $region27: #{tpu_custom_call.1} parent=11 // pred_region
          _
        $region28: #{tpu_custom_call.1} parent=11 // pred_fallthru
          _
        // Predicated region
        $region29: #{tpu_custom_call.1} parent=11 // pred_check
          %p279 = pneg %p163
        $region30: #{tpu_custom_call.1} parent=11 // pred_check_branch
          %281 = sbr.rel (%p279) target = $region32
        $region31: #{tpu_custom_call.1} parent=11 // pred_region
          _
        $region32: #{tpu_custom_call.1} parent=11 // pred_fallthru
          _
        // Predicated region
        $region33: #{tpu_custom_call.1} parent=11 // pred_check
          %p282 = pneg %p184
        $region34: #{tpu_custom_call.1} parent=11 // pred_check_branch
          %284 = sbr.rel (%p282) target = $region36
        $region35: #{tpu_custom_call.1} parent=11 // pred_region
          _
        $region36: #{tpu_custom_call.1} parent=11 // pred_fallthru
          _
        // Predicated region
        $region37: #{tpu_custom_call.1} parent=11 // pred_check
          %p285 = pneg %p205
        $region38: #{tpu_custom_call.1} parent=11 // pred_check_branch
          %287 = sbr.rel (%p285) target = $region40
        $region39: #{tpu_custom_call.1} parent=11 // pred_region
          _
        $region40: #{tpu_custom_call.1} parent=11 // pred_fallthru
          _
        // Predicated region
        $region41: #{tpu_custom_call.1} parent=11 // pred_check
          %p288 = pneg %p226
        $region42: #{tpu_custom_call.1} parent=11 // pred_check_branch
          %290 = sbr.rel (%p288) target = $region44
        $region43: #{tpu_custom_call.1} parent=11 // pred_region
          _
        $region44: #{tpu_custom_call.1} parent=11 // pred_fallthru
          _
      $region12: #{tpu_custom_call.1} parent=5 // pred_fallthru
        _
      %p291 = scmp.lt.s32.totalorder %s18, 2
      // Predicated region
      $region45: #{tpu_custom_call.1} parent=5 // pred_check
        %p292 = pneg %p291
      $region46: #{tpu_custom_call.1} parent=5 // pred_check_branch
        %294 = sbr.rel (%p292) target = $region48
      $region47: #{tpu_custom_call.1} parent=5 // pred_region
        // Predicated region
        $region49: #{tpu_custom_call.1} parent=47 // pred_check
          %p295 = pneg %p52
        $region50: #{tpu_custom_call.1} parent=47 // pred_check_branch
          %297 = sbr.rel (%p295) target = $region52
        $region51: #{tpu_custom_call.1} parent=47 // pred_region
          %s298 = smul.u32 8, %s26
          %p299 = scmp.lt.s32.totalorder %s25, 1
          %s300 = scalar_select %p299, %s25, 1
          %p301 = scmp.lt.s32.totalorder %s298, 7
          %s302 = scalar_select %p301, %s298, 7
          %s303 = smul.addr %s300, 8
          %s304 = sadd.s32 %s302, %s303
          %s305 = smul.addr %s304, 8
          %s306 = scalar_lea.vmem %s0, %s305
          %s307 = smul.u32 8, %s26
        $region52: #{tpu_custom_call.1} parent=47 // pred_fallthru
          _
      $region48: #{tpu_custom_call.1} parent=5 // pred_fallthru
        _
      %p308 = scmp.le.s32.totalorder 1, %s18
      %p309 = scmp.lt.s32.totalorder %s18, 3
      %p310 = pnand %p308, %p309
      %p311 = pneg %p310
      // Predicated region
      $region53: #{tpu_custom_call.1} parent=5 // pred_check
        _
      $region54: #{tpu_custom_call.1} parent=5 // pred_check_branch
        %313 = sbr.rel (%p310) target = $region56
      $region55: #{tpu_custom_call.1} parent=5 // pred_region
        %s314 = ssub.s32 %s18, 1
        %s315 = smul.u32 8, %s28
        %p316 = scmp.lt.s32.totalorder %s27, 1
        %s317 = scalar_select %p316, %s27, 1
        %p318 = scmp.lt.s32.totalorder %s315, 7
        %s319 = scalar_select %p318, %s315, 7
        %s320 = smul.addr %s317, 8
        %s321 = sadd.s32 %s319, %s320
        %s322 = smul.addr %s321, 8
        %s323 = scalar_lea.vmem %s0, %s322
        %p324 = pneg %p58
        %p325 = pneg %p55
        %p326 = pneg %p79
        %p327 = pneg %p76
        %p328 = pneg %p100
        %p329 = pneg %p97
        %p330 = pneg %p121
        %p331 = pneg %p118
        %p332 = pneg %p142
        %p333 = pneg %p139
        %p334 = pneg %p163
        %p335 = pneg %p160
        %p336 = pneg %p184
        %p337 = pneg %p181
        %p338 = pneg %p205
        %p339 = pneg %p202
        %p340 = pneg %p226
        %p341 = pneg %p223
        %p342 = pneg %p252
        %p343 = pneg %p249
        %s344 = sand.u32 %s239, 1
        %s345 = scalar_lea.sflag [#allocation5], %s344
        %s346 = sand.u32 %s239, 1
        %s347 = scalar_lea.vmem [#allocation4], %s346
        %s348 = smul.u32 8, %s28
        %p349 = scmp.lt.s32.totalorder %s27, 1
        %s350 = scalar_select %p349, %s27, 1
        %p351 = scmp.lt.s32.totalorder %s348, 7
        %s352 = scalar_select %p351, %s348, 7
        %s353 = smul.addr %s350, 8
        %s354 = sadd.s32 %s352, %s353
        %s355 = smul.addr %s354, 8
        %s356 = scalar_lea.vmem %s0, %s355
        %s357 = smul.u32 8, %s28
        %p358 = scmp.eq.s32.totalorder %s28, 0
        // Predicated region
        $region57: #{tpu_custom_call.1} parent=55 // pred_check
          %p359 = pneg %p358
        $region58: #{tpu_custom_call.1} parent=55 // pred_check_branch
          %361 = sbr.rel (%p359) target = $region60
        $region59: #{tpu_custom_call.1} parent=55 // pred_region
          %vm362 = vcmask 253952
          %363 = vst.msk [vmem:[#allocation2] sm:$0x1] %vm362, -inf
          %364 = vst.msk [vmem:[#allocation3] sm:$0x1] %vm362, 0.0
        $region60: #{tpu_custom_call.1} parent=55 // pred_fallthru
          _
        %v365 = vld [vmem:[%s356] sm:$0xff]
        %v366 = vld [vmem:[%s356 + $0x8] sm:$0xff]
        %v367 = vld [vmem:[%s356 + $0x10] sm:$0xff]
        %v368 = vld [vmem:[%s356 + $0x18] sm:$0xff]
        %v369 = vld [vmem:[%s356 + $0x20] sm:$0xff]
        %v370 = vld [vmem:[%s356 + $0x28] sm:$0xff]
        %v371 = vld [vmem:[%s356 + $0x30] sm:$0xff]
        %v372 = vld [vmem:[%s356 + $0x38] sm:$0xff]
        %v373 = vsub.f32 %v365, 1.5707964
        %v374 = vsub.f32 %v366, 1.5707964
        %v375 = vsub.f32 %v367, 1.5707964
        %v376 = vsub.f32 %v368, 1.5707964
        %v377 = vsub.f32 %v369, 1.5707964
        %v378 = vsub.f32 %v370, 1.5707964
        %v379 = vsub.f32 %v371, 1.5707964
        %v380 = vsub.f32 %v372, 1.5707964
        %389 = vrot.lane.b32.xlu0 %v373, 6
        %v390 = vpop.permute.xlu0 %389
        %391 = vrot.lane.b32.xlu0 %v374, 6
        %v392 = vpop.permute.xlu0 %391
        %393 = vrot.lane.b32.xlu0 %v375, 6
        %v394 = vpop.permute.xlu0 %393
        %395 = vrot.lane.b32.xlu0 %v376, 6
        %v396 = vpop.permute.xlu0 %395
        %397 = vrot.lane.b32.xlu0 %v377, 6
        %v398 = vpop.permute.xlu0 %397
        %399 = vrot.lane.b32.xlu0 %v378, 6
        %v400 = vpop.permute.xlu0 %399
        %401 = vrot.lane.b32.xlu0 %v379, 6
        %v402 = vpop.permute.xlu0 %401
        %403 = vrot.lane.b32.xlu0 %v380, 6
        %v404 = vpop.permute.xlu0 %403
        %vm413 = vcmask 48128
        %v414 = vsel %vm413, %v365, %v390
        %v415 = vsel %vm413, %v366, %v392
        %v416 = vsel %vm413, %v367, %v394
        %v417 = vsel %vm413, %v368, %v396
        %v418 = vsel %vm413, %v369, %v398
        %v419 = vsel %vm413, %v370, %v400
        %v420 = vsel %vm413, %v371, %v402
        %v421 = vsel %vm413, %v372, %v404
        %v422 = vand.u32 2147483647, %v414
        %vm423 = vcmp.le.f32.partialorder %v422, 0.7853982
        %vm424 = vcmp.lt.s32.totalorder %v414, 0
        %v425 = vand.u32 %v414, 2139095040
        %v426 = vshrl.u32 %v425, 23
        %v427 = vsub.s32 %v426, 127
        %v428 = vand.u32 2147483647, %v414
        %v429 = vand.u32 %v428, 8388607
        %v430 = vor.u32 %v429, 8388608
        %v431 = vsub.s32 0, %v430
        %v432 = vadd.s32 %v427, 1
        %vm433 = vcmp.gt.s32.totalorder %v432, 0
        %v434 = vsel %vm433, %v432, 0
        %v435 = vshrl.u32 %v434, 5
        %v436 = vand.u32 %v434, 31
        %v437 = vsub.s32 32, %v436
        %v438 = vshrl.u32 683565275, %v437
        %v439 = vshll.u32 683565275, %v436
        %v440 = vshrl.u32 2475754826, %v437
        %v441 = vor.u32 %v439, %v440
        %v442 = vshll.u32 2475754826, %v436
        %v443 = vshrl.u32 2131351028, %v437
        %v444 = vor.u32 %v442, %v443
        %v445 = vshll.u32 2131351028, %v436
        %v446 = vshrl.u32 2102212464, %v437
        %v447 = vor.u32 %v445, %v446
        %v448 = vshll.u32 2102212464, %v436
        %v449 = vshrl.u32 920167782, %v437
        %v450 = vor.u32 %v448, %v449
        %v451 = vshll.u32 920167782, %v436
        %v452 = vshrl.u32 1326507024, %v437
        %v453 = vor.u32 %v451, %v452
        %vm454 = vcmp.lt.s32.totalorder %v435, 1
        %vm455 = vcmp.lt.s32.totalorder %v435, 2
        %vm456 = vcmp.lt.s32.totalorder %v435, 3
        %vm457 = vcmp.lt.s32.totalorder %v435, 4
        %v458 = vsel %vm454, %v438, %v441
        %v459 = vsel %vm457, %v447, 2102212464
        %v460 = vsel %vm456, %v444, %v459
        %v461 = vsel %vm455, %v458, %v460
        %v462 = vsel %vm454, %v441, %v444
        %v463 = vsel %vm457, %v450, 920167782
        %v464 = vsel %vm456, %v447, %v463
        %v465 = vsel %vm455, %v462, %v464
        %v466 = vsel %vm454, %v444, %v447
        %v467 = vsel %vm457, %v453, 1326507024
        %v468 = vsel %vm456, %v450, %v467
        %v469 = vsel %vm455, %v466, %v468
        %v470 = vshll.u32 %v430, 8
        %v471 = vmul.u32.u64.compose %v470, %v469
        %v472 = vextract.low.u32 %v471
        %v473 = vextract.high.u32 %v471
        %v474 = vmul.u32.u64.compose %v470, %v465
        %v475 = vextract.low.u32 %v474
        %v476 = vextract.high.u32 %v474
        %v477 = vmul.u32 %v470, %v461
        %v478 = vadd.s32 %v473, %v475
        %vm479 = vc.u32 %v473, %v475
        %v480 = vadd.s32 %v476, 1
        %v481 = vsel %vm479, %v480, %v476
        %v482 = vadd.s32 %v477, %v481
        %v483 = vadd.s32 %v482, 536870912
        %v484 = vshrl.u32 %v483, 30
        %v485 = vshll.u32 %v484, 30
        %v486 = vsub.s32 %v482, %v485
        %vm487 = vcmp.lt.s32.totalorder %v486, 0
        %v488 = vsub.s32 0, %v486
        %v489 = vsel %vm487, %v488, %v486
        %v490 = vclz %v489
        %v491 = vsub.s32 %v490, 2
        %vm492 = vcmp.gt.s32.totalorder 0, %v491
        %v493 = vsel %vm492, 0, %v491
        %v494 = vsub.s32 32, %v493
        %v495 = vshll.u32 %v486, %v493
        %v496 = vshrl.u32 %v478, %v494
        %v497 = vor.u32 %v495, %v496
        %v498 = vsub.s32 4294967266, %v493
        %v499 = vadd.s32 %v498, 127
        %v500 = vshll.u32 %v499, 23
        %v501 = vor.u32 4788187, %v500
        %v502 = vand.u32 2147483647, %v501
        %v504 = vcvt.s32.f32 %v497
        %v505 = vmul.f32 %v504, %v502
        %v506 = vxor.u32 %v505, 2147483648
        %v507 = vsel %vm424, %v506, %v505
        %v508 = vsub.s32 4, %v484
        %v509 = vsel %vm424, %v508, %v484
        %v510 = vsel %vm423, %v414, %v507
        %v511 = vsel %vm423, 0, %v509
        %v512 = vcosq.f32.pop %v510
        %v513 = vsinq.f32.pop %v510
        %vm514 = vweird.f32 %v414
        %v515 = vand.u32 %v511, 3
        %vm516 = vcmp.lt.s32.totalorder %v515, 2
        %vm517 = vcmp.eq.s32.totalorder %v515, 0
        %v518 = vxor.u32 %v513, 2147483648
        %v519 = vsel %vm517, %v512, %v518
        %vm520 = vcmp.eq.s32.totalorder %v515, 2
        %v521 = vxor.u32 %v512, 2147483648
        %v522 = vsel %vm520, %v521, %v513
        %v523 = vsel %vm516, %v519, %v522
        %v524 = vsel %vm514, nan, %v523
        %v525 = vand.u32 2147483647, %v415
        %vm526 = vcmp.le.f32.partialorder %v525, 0.7853982
        %vm527 = vcmp.lt.s32.totalorder %v415, 0
        %v528 = vand.u32 %v415, 2139095040
        %v529 = vshrl.u32 %v528, 23
        %v530 = vsub.s32 %v529, 127
        %v531 = vand.u32 2147483647, %v415
        %v532 = vand.u32 %v531, 8388607
        %v533 = vor.u32 %v532, 8388608
        %v534 = vsub.s32 0, %v533
        %v535 = vadd.s32 %v530, 1
        %vm536 = vcmp.gt.s32.totalorder %v535, 0
        %v537 = vsel %vm536, %v535, 0
        %v538 = vshrl.u32 %v537, 5
        %v539 = vand.u32 %v537, 31
        %v540 = vsub.s32 32, %v539
        %v541 = vshrl.u32 683565275, %v540
        %v542 = vshll.u32 683565275, %v539
        %v543 = vshrl.u32 2475754826, %v540
        %v544 = vor.u32 %v542, %v543
        %v545 = vshll.u32 2475754826, %v539
        %v546 = vshrl.u32 2131351028, %v540
        %v547 = vor.u32 %v545, %v546
        %v548 = vshll.u32 2131351028, %v539
        %v549 = vshrl.u32 2102212464, %v540
        %v550 = vor.u32 %v548, %v549
        %v551 = vshll.u32 2102212464, %v539
        %v552 = vshrl.u32 920167782, %v540
        %v553 = vor.u32 %v551, %v552
        %v554 = vshll.u32 920167782, %v539
        %v555 = vshrl.u32 1326507024, %v540
        %v556 = vor.u32 %v554, %v555
        %vm557 = vcmp.lt.s32.totalorder %v538, 1
        %vm558 = vcmp.lt.s32.totalorder %v538, 2
        %vm559 = vcmp.lt.s32.totalorder %v538, 3
        %vm560 = vcmp.lt.s32.totalorder %v538, 4
        %v561 = vsel %vm557, %v541, %v544
        %v562 = vsel %vm560, %v550, 2102212464
        %v563 = vsel %vm559, %v547, %v562
        %v564 = vsel %vm558, %v561, %v563
        %v565 = vsel %vm557, %v544, %v547
        %v566 = vsel %vm560, %v553, 920167782
        %v567 = vsel %vm559, %v550, %v566
        %v568 = vsel %vm558, %v565, %v567
        %v569 = vsel %vm557, %v547, %v550
        %v570 = vsel %vm560, %v556, 1326507024
        %v571 = vsel %vm559, %v553, %v570
        %v572 = vsel %vm558, %v569, %v571
        %v573 = vshll.u32 %v533, 8
        %v574 = vmul.u32.u64.compose %v573, %v572
        %v575 = vextract.low.u32 %v574
        %v576 = vextract.high.u32 %v574
        %v577 = vmul.u32.u64.compose %v573, %v568
        %v578 = vextract.low.u32 %v577
        %v579 = vextract.high.u32 %v577
        %v580 = vmul.u32 %v573, %v564
        %v581 = vadd.s32 %v576, %v578
        %vm582 = vc.u32 %v576, %v578
        %v583 = vadd.s32 %v579, 1
        %v584 = vsel %vm582, %v583, %v579
        %v585 = vadd.s32 %v580, %v584
        %v586 = vadd.s32 %v585, 536870912
        %v587 = vshrl.u32 %v586, 30
        %v588 = vshll.u32 %v587, 30
        %v589 = vsub.s32 %v585, %v588
        %vm590 = vcmp.lt.s32.totalorder %v589, 0
        %v591 = vsub.s32 0, %v589
        %v592 = vsel %vm590, %v591, %v589
        %v593 = vclz %v592
        %v594 = vsub.s32 %v593, 2
        %vm595 = vcmp.gt.s32.totalorder 0, %v594
        %v596 = vsel %vm595, 0, %v594
        %v597 = vsub.s32 32, %v596
        %v598 = vshll.u32 %v589, %v596
        %v599 = vshrl.u32 %v581, %v597
        %v600 = vor.u32 %v598, %v599
        %v601 = vsub.s32 4294967266, %v596
        %v602 = vadd.s32 %v601, 127
        %v603 = vshll.u32 %v602, 23
        %v604 = vor.u32 4788187, %v603
        %v605 = vand.u32 2147483647, %v604
        %v607 = vcvt.s32.f32 %v600
        %v608 = vmul.f32 %v607, %v605
        %v609 = vxor.u32 %v608, 2147483648
        %v610 = vsel %vm527, %v609, %v608
        %v611 = vsub.s32 4, %v587
        %v612 = vsel %vm527, %v611, %v587
        %v613 = vsel %vm526, %v415, %v610
        %v614 = vsel %vm526, 0, %v612
        %v615 = vcosq.f32.pop %v613
        %v616 = vsinq.f32.pop %v613
        %vm617 = vweird.f32 %v415
        %v618 = vand.u32 %v614, 3
        %vm619 = vcmp.lt.s32.totalorder %v618, 2
        %vm620 = vcmp.eq.s32.totalorder %v618, 0
        %v621 = vxor.u32 %v616, 2147483648
        %v622 = vsel %vm620, %v615, %v621
        %vm623 = vcmp.eq.s32.totalorder %v618, 2
        %v624 = vxor.u32 %v615, 2147483648
        %v625 = vsel %vm623, %v624, %v616
        %v626 = vsel %vm619, %v622, %v625
        %v627 = vsel %vm617, nan, %v626
        %v628 = vand.u32 2147483647, %v416
        %vm629 = vcmp.le.f32.partialorder %v628, 0.7853982
        %vm630 = vcmp.lt.s32.totalorder %v416, 0
        %v631 = vand.u32 %v416, 2139095040
        %v632 = vshrl.u32 %v631, 23
        %v633 = vsub.s32 %v632, 127
        %v634 = vand.u32 2147483647, %v416
        %v635 = vand.u32 %v634, 8388607
        %v636 = vor.u32 %v635, 8388608
        %v637 = vsub.s32 0, %v636
        %v638 = vadd.s32 %v633, 1
        %vm639 = vcmp.gt.s32.totalorder %v638, 0
        %v640 = vsel %vm639, %v638, 0
        %v641 = vshrl.u32 %v640, 5
        %v642 = vand.u32 %v640, 31
        %v643 = vsub.s32 32, %v642
        %v644 = vshrl.u32 683565275, %v643
        %v645 = vshll.u32 683565275, %v642
        %v646 = vshrl.u32 2475754826, %v643
        %v647 = vor.u32 %v645, %v646
        %v648 = vshll.u32 2475754826, %v642
        %v649 = vshrl.u32 2131351028, %v643
        %v650 = vor.u32 %v648, %v649
        %v651 = vshll.u32 2131351028, %v642
        %v652 = vshrl.u32 2102212464, %v643
        %v653 = vor.u32 %v651, %v652
        %v654 = vshll.u32 2102212464, %v642
        %v655 = vshrl.u32 920167782, %v643
        %v656 = vor.u32 %v654, %v655
        %v657 = vshll.u32 920167782, %v642
        %v658 = vshrl.u32 1326507024, %v643
        %v659 = vor.u32 %v657, %v658
        %vm660 = vcmp.lt.s32.totalorder %v641, 1
        %vm661 = vcmp.lt.s32.totalorder %v641, 2
        %vm662 = vcmp.lt.s32.totalorder %v641, 3
        %vm663 = vcmp.lt.s32.totalorder %v641, 4
        %v664 = vsel %vm660, %v644, %v647
        %v665 = vsel %vm663, %v653, 2102212464
        %v666 = vsel %vm662, %v650, %v665
        %v667 = vsel %vm661, %v664, %v666
        %v668 = vsel %vm660, %v647, %v650
        %v669 = vsel %vm663, %v656, 920167782
        %v670 = vsel %vm662, %v653, %v669
        %v671 = vsel %vm661, %v668, %v670
        %v672 = vsel %vm660, %v650, %v653
        %v673 = vsel %vm663, %v659, 1326507024
        %v674 = vsel %vm662, %v656, %v673
        %v675 = vsel %vm661, %v672, %v674
        %v676 = vshll.u32 %v636, 8
        %v677 = vmul.u32.u64.compose %v676, %v675
        %v678 = vextract.low.u32 %v677
        %v679 = vextract.high.u32 %v677
        %v680 = vmul.u32.u64.compose %v676, %v671
        %v681 = vextract.low.u32 %v680
        %v682 = vextract.high.u32 %v680
        %v683 = vmul.u32 %v676, %v667
        %v684 = vadd.s32 %v679, %v681
        %vm685 = vc.u32 %v679, %v681
        %v686 = vadd.s32 %v682, 1
        %v687 = vsel %vm685, %v686, %v682
        %v688 = vadd.s32 %v683, %v687
        %v689 = vadd.s32 %v688, 536870912
        %v690 = vshrl.u32 %v689, 30
        %v691 = vshll.u32 %v690, 30
        %v692 = vsub.s32 %v688, %v691
        %vm693 = vcmp.lt.s32.totalorder %v692, 0
        %v694 = vsub.s32 0, %v692
        %v695 = vsel %vm693, %v694, %v692
        %v696 = vclz %v695
        %v697 = vsub.s32 %v696, 2
        %vm698 = vcmp.gt.s32.totalorder 0, %v697
        %v699 = vsel %vm698, 0, %v697
        %v700 = vsub.s32 32, %v699
        %v701 = vshll.u32 %v692, %v699
        %v702 = vshrl.u32 %v684, %v700
        %v703 = vor.u32 %v701, %v702
        %v704 = vsub.s32 4294967266, %v699
        %v705 = vadd.s32 %v704, 127
        %v706 = vshll.u32 %v705, 23
        %v707 = vor.u32 4788187, %v706
        %v708 = vand.u32 2147483647, %v707
        %v710 = vcvt.s32.f32 %v703
        %v711 = vmul.f32 %v710, %v708
        %v712 = vxor.u32 %v711, 2147483648
        %v713 = vsel %vm630, %v712, %v711
        %v714 = vsub.s32 4, %v690
        %v715 = vsel %vm630, %v714, %v690
        %v716 = vsel %vm629, %v416, %v713
        %v717 = vsel %vm629, 0, %v715
        %v718 = vcosq.f32.pop %v716
        %v719 = vsinq.f32.pop %v716
        %vm720 = vweird.f32 %v416
        %v721 = vand.u32 %v717, 3
        %vm722 = vcmp.lt.s32.totalorder %v721, 2
        %vm723 = vcmp.eq.s32.totalorder %v721, 0
        %v724 = vxor.u32 %v719, 2147483648
        %v725 = vsel %vm723, %v718, %v724
        %vm726 = vcmp.eq.s32.totalorder %v721, 2
        %v727 = vxor.u32 %v718, 2147483648
        %v728 = vsel %vm726, %v727, %v719
        %v729 = vsel %vm722, %v725, %v728
        %v730 = vsel %vm720, nan, %v729
        %v731 = vand.u32 2147483647, %v417
        %vm732 = vcmp.le.f32.partialorder %v731, 0.7853982
        %vm733 = vcmp.lt.s32.totalorder %v417, 0
        %v734 = vand.u32 %v417, 2139095040
        %v735 = vshrl.u32 %v734, 23
        %v736 = vsub.s32 %v735, 127
        %v737 = vand.u32 2147483647, %v417
        %v738 = vand.u32 %v737, 8388607
        %v739 = vor.u32 %v738, 8388608
        %v740 = vsub.s32 0, %v739
        %v741 = vadd.s32 %v736, 1
        %vm742 = vcmp.gt.s32.totalorder %v741, 0
        %v743 = vsel %vm742, %v741, 0
        %v744 = vshrl.u32 %v743, 5
        %v745 = vand.u32 %v743, 31
        %v746 = vsub.s32 32, %v745
        %v747 = vshrl.u32 683565275, %v746
        %v748 = vshll.u32 683565275, %v745
        %v749 = vshrl.u32 2475754826, %v746
        %v750 = vor.u32 %v748, %v749
        %v751 = vshll.u32 2475754826, %v745
        %v752 = vshrl.u32 2131351028, %v746
        %v753 = vor.u32 %v751, %v752
        %v754 = vshll.u32 2131351028, %v745
        %v755 = vshrl.u32 2102212464, %v746
        %v756 = vor.u32 %v754, %v755
        %v757 = vshll.u32 2102212464, %v745
        %v758 = vshrl.u32 920167782, %v746
        %v759 = vor.u32 %v757, %v758
        %v760 = vshll.u32 920167782, %v745
        %v761 = vshrl.u32 1326507024, %v746
        %v762 = vor.u32 %v760, %v761
        %vm763 = vcmp.lt.s32.totalorder %v744, 1
        %vm764 = vcmp.lt.s32.totalorder %v744, 2
        %vm765 = vcmp.lt.s32.totalorder %v744, 3
        %vm766 = vcmp.lt.s32.totalorder %v744, 4
        %v767 = vsel %vm763, %v747, %v750
        %v768 = vsel %vm766, %v756, 2102212464
        %v769 = vsel %vm765, %v753, %v768
        %v770 = vsel %vm764, %v767, %v769
        %v771 = vsel %vm763, %v750, %v753
        %v772 = vsel %vm766, %v759, 920167782
        %v773 = vsel %vm765, %v756, %v772
        %v774 = vsel %vm764, %v771, %v773
        %v775 = vsel %vm763, %v753, %v756
        %v776 = vsel %vm766, %v762, 1326507024
        %v777 = vsel %vm765, %v759, %v776
        %v778 = vsel %vm764, %v775, %v777
        %v779 = vshll.u32 %v739, 8
        %v780 = vmul.u32.u64.compose %v779, %v778
        %v781 = vextract.low.u32 %v780
        %v782 = vextract.high.u32 %v780
        %v783 = vmul.u32.u64.compose %v779, %v774
        %v784 = vextract.low.u32 %v783
        %v785 = vextract.high.u32 %v783
        %v786 = vmul.u32 %v779, %v770
        %v787 = vadd.s32 %v782, %v784
        %vm788 = vc.u32 %v782, %v784
        %v789 = vadd.s32 %v785, 1
        %v790 = vsel %vm788, %v789, %v785
        %v791 = vadd.s32 %v786, %v790
        %v792 = vadd.s32 %v791, 536870912
        %v793 = vshrl.u32 %v792, 30
        %v794 = vshll.u32 %v793, 30
        %v795 = vsub.s32 %v791, %v794
        %vm796 = vcmp.lt.s32.totalorder %v795, 0
        %v797 = vsub.s32 0, %v795
        %v798 = vsel %vm796, %v797, %v795
        %v799 = vclz %v798
        %v800 = vsub.s32 %v799, 2
        %vm801 = vcmp.gt.s32.totalorder 0, %v800
        %v802 = vsel %vm801, 0, %v800
        %v803 = vsub.s32 32, %v802
        %v804 = vshll.u32 %v795, %v802
        %v805 = vshrl.u32 %v787, %v803
        %v806 = vor.u32 %v804, %v805
        %v807 = vsub.s32 4294967266, %v802
        %v808 = vadd.s32 %v807, 127
        %v809 = vshll.u32 %v808, 23
        %v810 = vor.u32 4788187, %v809
        %v811 = vand.u32 2147483647, %v810
        %v813 = vcvt.s32.f32 %v806
        %v814 = vmul.f32 %v813, %v811
        %v815 = vxor.u32 %v814, 2147483648
        %v816 = vsel %vm733, %v815, %v814
        %v817 = vsub.s32 4, %v793
        %v818 = vsel %vm733, %v817, %v793
        %v819 = vsel %vm732, %v417, %v816
        %v820 = vsel %vm732, 0, %v818
        %v821 = vcosq.f32.pop %v819
        %v822 = vsinq.f32.pop %v819
        %vm823 = vweird.f32 %v417
        %v824 = vand.u32 %v820, 3
        %vm825 = vcmp.lt.s32.totalorder %v824, 2
        %vm826 = vcmp.eq.s32.totalorder %v824, 0
        %v827 = vxor.u32 %v822, 2147483648
        %v828 = vsel %vm826, %v821, %v827
        %vm829 = vcmp.eq.s32.totalorder %v824, 2
        %v830 = vxor.u32 %v821, 2147483648
        %v831 = vsel %vm829, %v830, %v822
        %v832 = vsel %vm825, %v828, %v831
        %v833 = vsel %vm823, nan, %v832
        %v834 = vand.u32 2147483647, %v418
        %vm835 = vcmp.le.f32.partialorder %v834, 0.7853982
        %vm836 = vcmp.lt.s32.totalorder %v418, 0
        %v837 = vand.u32 %v418, 2139095040
        %v838 = vshrl.u32 %v837, 23
        %v839 = vsub.s32 %v838, 127
        %v840 = vand.u32 2147483647, %v418
        %v841 = vand.u32 %v840, 8388607
        %v842 = vor.u32 %v841, 8388608
        %v843 = vsub.s32 0, %v842
        %v844 = vadd.s32 %v839, 1
        %vm845 = vcmp.gt.s32.totalorder %v844, 0
        %v846 = vsel %vm845, %v844, 0
        %v847 = vshrl.u32 %v846, 5
        %v848 = vand.u32 %v846, 31
        %v849 = vsub.s32 32, %v848
        %v850 = vshrl.u32 683565275, %v849
        %v851 = vshll.u32 683565275, %v848
        %v852 = vshrl.u32 2475754826, %v849
        %v853 = vor.u32 %v851, %v852
        %v854 = vshll.u32 2475754826, %v848
        %v855 = vshrl.u32 2131351028, %v849
        %v856 = vor.u32 %v854, %v855
        %v857 = vshll.u32 2131351028, %v848
        %v858 = vshrl.u32 2102212464, %v849
        %v859 = vor.u32 %v857, %v858
        %v860 = vshll.u32 2102212464, %v848
        %v861 = vshrl.u32 920167782, %v849
        %v862 = vor.u32 %v860, %v861
        %v863 = vshll.u32 920167782, %v848
        %v864 = vshrl.u32 1326507024, %v849
        %v865 = vor.u32 %v863, %v864
        %vm866 = vcmp.lt.s32.totalorder %v847, 1
        %vm867 = vcmp.lt.s32.totalorder %v847, 2
        %vm868 = vcmp.lt.s32.totalorder %v847, 3
        %vm869 = vcmp.lt.s32.totalorder %v847, 4
        %v870 = vsel %vm866, %v850, %v853
        %v871 = vsel %vm869, %v859, 2102212464
        %v872 = vsel %vm868, %v856, %v871
        %v873 = vsel %vm867, %v870, %v872
        %v874 = vsel %vm866, %v853, %v856
        %v875 = vsel %vm869, %v862, 920167782
        %v876 = vsel %vm868, %v859, %v875
        %v877 = vsel %vm867, %v874, %v876
        %v878 = vsel %vm866, %v856, %v859
        %v879 = vsel %vm869, %v865, 1326507024
        %v880 = vsel %vm868, %v862, %v879
        %v881 = vsel %vm867, %v878, %v880
        %v882 = vshll.u32 %v842, 8
        %v883 = vmul.u32.u64.compose %v882, %v881
        %v884 = vextract.low.u32 %v883
        %v885 = vextract.high.u32 %v883
        %v886 = vmul.u32.u64.compose %v882, %v877
        %v887 = vextract.low.u32 %v886
        %v888 = vextract.high.u32 %v886
        %v889 = vmul.u32 %v882, %v873
        %v890 = vadd.s32 %v885, %v887
        %vm891 = vc.u32 %v885, %v887
        %v892 = vadd.s32 %v888, 1
        %v893 = vsel %vm891, %v892, %v888
        %v894 = vadd.s32 %v889, %v893
        %v895 = vadd.s32 %v894, 536870912
        %v896 = vshrl.u32 %v895, 30
        %v897 = vshll.u32 %v896, 30
        %v898 = vsub.s32 %v894, %v897
        %vm899 = vcmp.lt.s32.totalorder %v898, 0
        %v900 = vsub.s32 0, %v898
        %v901 = vsel %vm899, %v900, %v898
        %v902 = vclz %v901
        %v903 = vsub.s32 %v902, 2
        %vm904 = vcmp.gt.s32.totalorder 0, %v903
        %v905 = vsel %vm904, 0, %v903
        %v906 = vsub.s32 32, %v905
        %v907 = vshll.u32 %v898, %v905
        %v908 = vshrl.u32 %v890, %v906
        %v909 = vor.u32 %v907, %v908
        %v910 = vsub.s32 4294967266, %v905
        %v911 = vadd.s32 %v910, 127
        %v912 = vshll.u32 %v911, 23
        %v913 = vor.u32 4788187, %v912
        %v914 = vand.u32 2147483647, %v913
        %v916 = vcvt.s32.f32 %v909
        %v917 = vmul.f32 %v916, %v914
        %v918 = vxor.u32 %v917, 2147483648
        %v919 = vsel %vm836, %v918, %v917
        %v920 = vsub.s32 4, %v896
        %v921 = vsel %vm836, %v920, %v896
        %v922 = vsel %vm835, %v418, %v919
        %v923 = vsel %vm835, 0, %v921
        %v924 = vcosq.f32.pop %v922
        %v925 = vsinq.f32.pop %v922
        %vm926 = vweird.f32 %v418
        %v927 = vand.u32 %v923, 3
        %vm928 = vcmp.lt.s32.totalorder %v927, 2
        %vm929 = vcmp.eq.s32.totalorder %v927, 0
        %v930 = vxor.u32 %v925, 2147483648
        %v931 = vsel %vm929, %v924, %v930
        %vm932 = vcmp.eq.s32.totalorder %v927, 2
        %v933 = vxor.u32 %v924, 2147483648
        %v934 = vsel %vm932, %v933, %v925
        %v935 = vsel %vm928, %v931, %v934
        %v936 = vsel %vm926, nan, %v935
        %v937 = vand.u32 2147483647, %v419
        %vm938 = vcmp.le.f32.partialorder %v937, 0.7853982
        %vm939 = vcmp.lt.s32.totalorder %v419, 0
        %v940 = vand.u32 %v419, 2139095040
        %v941 = vshrl.u32 %v940, 23
        %v942 = vsub.s32 %v941, 127
        %v943 = vand.u32 2147483647, %v419
        %v944 = vand.u32 %v943, 8388607
        %v945 = vor.u32 %v944, 8388608
        %v946 = vsub.s32 0, %v945
        %v947 = vadd.s32 %v942, 1
        %vm948 = vcmp.gt.s32.totalorder %v947, 0
        %v949 = vsel %vm948, %v947, 0
        %v950 = vshrl.u32 %v949, 5
        %v951 = vand.u32 %v949, 31
        %v952 = vsub.s32 32, %v951
        %v953 = vshrl.u32 683565275, %v952
        %v954 = vshll.u32 683565275, %v951
        %v955 = vshrl.u32 2475754826, %v952
        %v956 = vor.u32 %v954, %v955
        %v957 = vshll.u32 2475754826, %v951
        %v958 = vshrl.u32 2131351028, %v952
        %v959 = vor.u32 %v957, %v958
        %v960 = vshll.u32 2131351028, %v951
        %v961 = vshrl.u32 2102212464, %v952
        %v962 = vor.u32 %v960, %v961
        %v963 = vshll.u32 2102212464, %v951
        %v964 = vshrl.u32 920167782, %v952
        %v965 = vor.u32 %v963, %v964
        %v966 = vshll.u32 920167782, %v951
        %v967 = vshrl.u32 1326507024, %v952
        %v968 = vor.u32 %v966, %v967
        %vm969 = vcmp.lt.s32.totalorder %v950, 1
        %vm970 = vcmp.lt.s32.totalorder %v950, 2
        %vm971 = vcmp.lt.s32.totalorder %v950, 3
        %vm972 = vcmp.lt.s32.totalorder %v950, 4
        %v973 = vsel %vm969, %v953, %v956
        %v974 = vsel %vm972, %v962, 2102212464
        %v975 = vsel %vm971, %v959, %v974
        %v976 = vsel %vm970, %v973, %v975
        %v977 = vsel %vm969, %v956, %v959
        %v978 = vsel %vm972, %v965, 920167782
        %v979 = vsel %vm971, %v962, %v978
        %v980 = vsel %vm970, %v977, %v979
        %v981 = vsel %vm969, %v959, %v962
        %v982 = vsel %vm972, %v968, 1326507024
        %v983 = vsel %vm971, %v965, %v982
        %v984 = vsel %vm970, %v981, %v983
        %v985 = vshll.u32 %v945, 8
        %v986 = vmul.u32.u64.compose %v985, %v984
        %v987 = vextract.low.u32 %v986
        %v988 = vextract.high.u32 %v986
        %v989 = vmul.u32.u64.compose %v985, %v980
        %v990 = vextract.low.u32 %v989
        %v991 = vextract.high.u32 %v989
        %v992 = vmul.u32 %v985, %v976
        %v993 = vadd.s32 %v988, %v990
        %vm994 = vc.u32 %v988, %v990
        %v995 = vadd.s32 %v991, 1
        %v996 = vsel %vm994, %v995, %v991
        %v997 = vadd.s32 %v992, %v996
        %v998 = vadd.s32 %v997, 536870912
        %v999 = vshrl.u32 %v998, 30
        %v1000 = vshll.u32 %v999, 30
        %v1001 = vsub.s32 %v997, %v1000
        %vm1002 = vcmp.lt.s32.totalorder %v1001, 0
        %v1003 = vsub.s32 0, %v1001
        %v1004 = vsel %vm1002, %v1003, %v1001
        %v1005 = vclz %v1004
        %v1006 = vsub.s32 %v1005, 2
        %vm1007 = vcmp.gt.s32.totalorder 0, %v1006
        %v1008 = vsel %vm1007, 0, %v1006
        %v1009 = vsub.s32 32, %v1008
        %v1010 = vshll.u32 %v1001, %v1008
        %v1011 = vshrl.u32 %v993, %v1009
        %v1012 = vor.u32 %v1010, %v1011
        %v1013 = vsub.s32 4294967266, %v1008
        %v1014 = vadd.s32 %v1013, 127
        %v1015 = vshll.u32 %v1014, 23
        %v1016 = vor.u32 4788187, %v1015
        %v1017 = vand.u32 2147483647, %v1016
        %v1019 = vcvt.s32.f32 %v1012
        %v1020 = vmul.f32 %v1019, %v1017
        %v1021 = vxor.u32 %v1020, 2147483648
        %v1022 = vsel %vm939, %v1021, %v1020
        %v1023 = vsub.s32 4, %v999
        %v1024 = vsel %vm939, %v1023, %v999
        %v1025 = vsel %vm938, %v419, %v1022
        %v1026 = vsel %vm938, 0, %v1024
        %v1027 = vcosq.f32.pop %v1025
        %v1028 = vsinq.f32.pop %v1025
        %vm1029 = vweird.f32 %v419
        %v1030 = vand.u32 %v1026, 3
        %vm1031 = vcmp.lt.s32.totalorder %v1030, 2
        %vm1032 = vcmp.eq.s32.totalorder %v1030, 0
        %v1033 = vxor.u32 %v1028, 2147483648
        %v1034 = vsel %vm1032, %v1027, %v1033
        %vm1035 = vcmp.eq.s32.totalorder %v1030, 2
        %v1036 = vxor.u32 %v1027, 2147483648
        %v1037 = vsel %vm1035, %v1036, %v1028
        %v1038 = vsel %vm1031, %v1034, %v1037
        %v1039 = vsel %vm1029, nan, %v1038
        %v1040 = vand.u32 2147483647, %v420
        %vm1041 = vcmp.le.f32.partialorder %v1040, 0.7853982
        %vm1042 = vcmp.lt.s32.totalorder %v420, 0
        %v1043 = vand.u32 %v420, 2139095040
        %v1044 = vshrl.u32 %v1043, 23
        %v1045 = vsub.s32 %v1044, 127
        %v1046 = vand.u32 2147483647, %v420
        %v1047 = vand.u32 %v1046, 8388607
        %v1048 = vor.u32 %v1047, 8388608
        %v1049 = vsub.s32 0, %v1048
        %v1050 = vadd.s32 %v1045, 1
        %vm1051 = vcmp.gt.s32.totalorder %v1050, 0
        %v1052 = vsel %vm1051, %v1050, 0
        %v1053 = vshrl.u32 %v1052, 5
        %v1054 = vand.u32 %v1052, 31
        %v1055 = vsub.s32 32, %v1054
        %v1056 = vshrl.u32 683565275, %v1055
        %v1057 = vshll.u32 683565275, %v1054
        %v1058 = vshrl.u32 2475754826, %v1055
        %v1059 = vor.u32 %v1057, %v1058
        %v1060 = vshll.u32 2475754826, %v1054
        %v1061 = vshrl.u32 2131351028, %v1055
        %v1062 = vor.u32 %v1060, %v1061
        %v1063 = vshll.u32 2131351028, %v1054
        %v1064 = vshrl.u32 2102212464, %v1055
        %v1065 = vor.u32 %v1063, %v1064
        %v1066 = vshll.u32 2102212464, %v1054
        %v1067 = vshrl.u32 920167782, %v1055
        %v1068 = vor.u32 %v1066, %v1067
        %v1069 = vshll.u32 920167782, %v1054
        %v1070 = vshrl.u32 1326507024, %v1055
        %v1071 = vor.u32 %v1069, %v1070
        %vm1072 = vcmp.lt.s32.totalorder %v1053, 1
        %vm1073 = vcmp.lt.s32.totalorder %v1053, 2
        %vm1074 = vcmp.lt.s32.totalorder %v1053, 3
        %vm1075 = vcmp.lt.s32.totalorder %v1053, 4
        %v1076 = vsel %vm1072, %v1056, %v1059
        %v1077 = vsel %vm1075, %v1065, 2102212464
        %v1078 = vsel %vm1074, %v1062, %v1077
        %v1079 = vsel %vm1073, %v1076, %v1078
        %v1080 = vsel %vm1072, %v1059, %v1062
        %v1081 = vsel %vm1075, %v1068, 920167782
        %v1082 = vsel %vm1074, %v1065, %v1081
        %v1083 = vsel %vm1073, %v1080, %v1082
        %v1084 = vsel %vm1072, %v1062, %v1065
        %v1085 = vsel %vm1075, %v1071, 1326507024
        %v1086 = vsel %vm1074, %v1068, %v1085
        %v1087 = vsel %vm1073, %v1084, %v1086
        %v1088 = vshll.u32 %v1048, 8
        %v1089 = vmul.u32.u64.compose %v1088, %v1087
        %v1090 = vextract.low.u32 %v1089
        %v1091 = vextract.high.u32 %v1089
        %v1092 = vmul.u32.u64.compose %v1088, %v1083
        %v1093 = vextract.low.u32 %v1092
        %v1094 = vextract.high.u32 %v1092
        %v1095 = vmul.u32 %v1088, %v1079
        %v1096 = vadd.s32 %v1091, %v1093
        %vm1097 = vc.u32 %v1091, %v1093
        %v1098 = vadd.s32 %v1094, 1
        %v1099 = vsel %vm1097, %v1098, %v1094
        %v1100 = vadd.s32 %v1095, %v1099
        %v1101 = vadd.s32 %v1100, 536870912
        %v1102 = vshrl.u32 %v1101, 30
        %v1103 = vshll.u32 %v1102, 30
        %v1104 = vsub.s32 %v1100, %v1103
        %vm1105 = vcmp.lt.s32.totalorder %v1104, 0
        %v1106 = vsub.s32 0, %v1104
        %v1107 = vsel %vm1105, %v1106, %v1104
        %v1108 = vclz %v1107
        %v1109 = vsub.s32 %v1108, 2
        %vm1110 = vcmp.gt.s32.totalorder 0, %v1109
        %v1111 = vsel %vm1110, 0, %v1109
        %v1112 = vsub.s32 32, %v1111
        %v1113 = vshll.u32 %v1104, %v1111
        %v1114 = vshrl.u32 %v1096, %v1112
        %v1115 = vor.u32 %v1113, %v1114
        %v1116 = vsub.s32 4294967266, %v1111
        %v1117 = vadd.s32 %v1116, 127
        %v1118 = vshll.u32 %v1117, 23
        %v1119 = vor.u32 4788187, %v1118
        %v1120 = vand.u32 2147483647, %v1119
        %v1122 = vcvt.s32.f32 %v1115
        %v1123 = vmul.f32 %v1122, %v1120
        %v1124 = vxor.u32 %v1123, 2147483648
        %v1125 = vsel %vm1042, %v1124, %v1123
        %v1126 = vsub.s32 4, %v1102
        %v1127 = vsel %vm1042, %v1126, %v1102
        %v1128 = vsel %vm1041, %v420, %v1125
        %v1129 = vsel %vm1041, 0, %v1127
        %v1130 = vcosq.f32.pop %v1128
        %v1131 = vsinq.f32.pop %v1128
        %vm1132 = vweird.f32 %v420
        %v1133 = vand.u32 %v1129, 3
        %vm1134 = vcmp.lt.s32.totalorder %v1133, 2
        %vm1135 = vcmp.eq.s32.totalorder %v1133, 0
        %v1136 = vxor.u32 %v1131, 2147483648
        %v1137 = vsel %vm1135, %v1130, %v1136
        %vm1138 = vcmp.eq.s32.totalorder %v1133, 2
        %v1139 = vxor.u32 %v1130, 2147483648
        %v1140 = vsel %vm1138, %v1139, %v1131
        %v1141 = vsel %vm1134, %v1137, %v1140
        %v1142 = vsel %vm1132, nan, %v1141
        %v1143 = vand.u32 2147483647, %v421
        %vm1144 = vcmp.le.f32.partialorder %v1143, 0.7853982
        %vm1145 = vcmp.lt.s32.totalorder %v421, 0
        %v1146 = vand.u32 %v421, 2139095040
        %v1147 = vshrl.u32 %v1146, 23
        %v1148 = vsub.s32 %v1147, 127
        %v1149 = vand.u32 2147483647, %v421
        %v1150 = vand.u32 %v1149, 8388607
        %v1151 = vor.u32 %v1150, 8388608
        %v1152 = vsub.s32 0, %v1151
        %v1153 = vadd.s32 %v1148, 1
        %vm1154 = vcmp.gt.s32.totalorder %v1153, 0
        %v1155 = vsel %vm1154, %v1153, 0
        %v1156 = vshrl.u32 %v1155, 5
        %v1157 = vand.u32 %v1155, 31
        %v1158 = vsub.s32 32, %v1157
        %v1159 = vshrl.u32 683565275, %v1158
        %v1160 = vshll.u32 683565275, %v1157
        %v1161 = vshrl.u32 2475754826, %v1158
        %v1162 = vor.u32 %v1160, %v1161
        %v1163 = vshll.u32 2475754826, %v1157
        %v1164 = vshrl.u32 2131351028, %v1158
        %v1165 = vor.u32 %v1163, %v1164
        %v1166 = vshll.u32 2131351028, %v1157
        %v1167 = vshrl.u32 2102212464, %v1158
        %v1168 = vor.u32 %v1166, %v1167
        %v1169 = vshll.u32 2102212464, %v1157
        %v1170 = vshrl.u32 920167782, %v1158
        %v1171 = vor.u32 %v1169, %v1170
        %v1172 = vshll.u32 920167782, %v1157
        %v1173 = vshrl.u32 1326507024, %v1158
        %v1174 = vor.u32 %v1172, %v1173
        %vm1175 = vcmp.lt.s32.totalorder %v1156, 1
        %vm1176 = vcmp.lt.s32.totalorder %v1156, 2
        %vm1177 = vcmp.lt.s32.totalorder %v1156, 3
        %vm1178 = vcmp.lt.s32.totalorder %v1156, 4
        %v1179 = vsel %vm1175, %v1159, %v1162
        %v1180 = vsel %vm1178, %v1168, 2102212464
        %v1181 = vsel %vm1177, %v1165, %v1180
        %v1182 = vsel %vm1176, %v1179, %v1181
        %v1183 = vsel %vm1175, %v1162, %v1165
        %v1184 = vsel %vm1178, %v1171, 920167782
        %v1185 = vsel %vm1177, %v1168, %v1184
        %v1186 = vsel %vm1176, %v1183, %v1185
        %v1187 = vsel %vm1175, %v1165, %v1168
        %v1188 = vsel %vm1178, %v1174, 1326507024
        %v1189 = vsel %vm1177, %v1171, %v1188
        %v1190 = vsel %vm1176, %v1187, %v1189
        %v1191 = vshll.u32 %v1151, 8
        %v1192 = vmul.u32.u64.compose %v1191, %v1190
        %v1193 = vextract.low.u32 %v1192
        %v1194 = vextract.high.u32 %v1192
        %v1195 = vmul.u32.u64.compose %v1191, %v1186
        %v1196 = vextract.low.u32 %v1195
        %v1197 = vextract.high.u32 %v1195
        %v1198 = vmul.u32 %v1191, %v1182
        %v1199 = vadd.s32 %v1194, %v1196
        %vm1200 = vc.u32 %v1194, %v1196
        %v1201 = vadd.s32 %v1197, 1
        %v1202 = vsel %vm1200, %v1201, %v1197
        %v1203 = vadd.s32 %v1198, %v1202
        %v1204 = vadd.s32 %v1203, 536870912
        %v1205 = vshrl.u32 %v1204, 30
        %v1206 = vshll.u32 %v1205, 30
        %v1207 = vsub.s32 %v1203, %v1206
        %vm1208 = vcmp.lt.s32.totalorder %v1207, 0
        %v1209 = vsub.s32 0, %v1207
        %v1210 = vsel %vm1208, %v1209, %v1207
        %v1211 = vclz %v1210
        %v1212 = vsub.s32 %v1211, 2
        %vm1213 = vcmp.gt.s32.totalorder 0, %v1212
        %v1214 = vsel %vm1213, 0, %v1212
        %v1215 = vsub.s32 32, %v1214
        %v1216 = vshll.u32 %v1207, %v1214
        %v1217 = vshrl.u32 %v1199, %v1215
        %v1218 = vor.u32 %v1216, %v1217
        %v1219 = vsub.s32 4294967266, %v1214
        %v1220 = vadd.s32 %v1219, 127
        %v1221 = vshll.u32 %v1220, 23
        %v1222 = vor.u32 4788187, %v1221
        %v1223 = vand.u32 2147483647, %v1222
        %v1225 = vcvt.s32.f32 %v1218
        %v1226 = vmul.f32 %v1225, %v1223
        %v1227 = vxor.u32 %v1226, 2147483648
        %v1228 = vsel %vm1145, %v1227, %v1226
        %v1229 = vsub.s32 4, %v1205
        %v1230 = vsel %vm1145, %v1229, %v1205
        %v1231 = vsel %vm1144, %v421, %v1228
        %v1232 = vsel %vm1144, 0, %v1230
        %v1233 = vcosq.f32.pop %v1231
        %v1234 = vsinq.f32.pop %v1231
        %vm1235 = vweird.f32 %v421
        %v1236 = vand.u32 %v1232, 3
        %vm1237 = vcmp.lt.s32.totalorder %v1236, 2
        %vm1238 = vcmp.eq.s32.totalorder %v1236, 0
        %v1239 = vxor.u32 %v1234, 2147483648
        %v1240 = vsel %vm1238, %v1233, %v1239
        %vm1241 = vcmp.eq.s32.totalorder %v1236, 2
        %v1242 = vxor.u32 %v1233, 2147483648
        %v1243 = vsel %vm1241, %v1242, %v1234
        %v1244 = vsel %vm1237, %v1240, %v1243
        %v1245 = vsel %vm1235, nan, %v1244
        %v1246 = vld [vmem:[%s1] sm:$0xff]
        %v1247 = vld [vmem:[%s1 + $0x8] sm:$0xf]
        %v1248 = vld [vmem:[%s2] sm:$0x1]
        %v1250 = vlaneseq
        %v1251 = vshrl.u32 %v1250, 7
        %v1252 = vsub.s32 0, %v1251
        %v1253 = vrot.slane %v1248, %v1252
        %vm1255 = vcmask 97280
        %v1257 = vsel %vm1255, %v524, 0
        %v1260 = vsel %vm1255, %v627, 0
        %v1263 = vsel %vm1255, %v730, 0
        %v1266 = vsel %vm1255, %v833, 0
        %v1269 = vsel %vm1255, %v936, 0
        %v1272 = vsel %vm1255, %v1039, 0
        %v1275 = vsel %vm1255, %v1142, 0
        %v1278 = vsel %vm1255, %v1245, 0
        %vm1280 = vcmask 1043456
        %v1282 = vsel %vm1280, %v1247, 0
        %1284 = vmatprep.subr.mxu0 0.0
        %1285 = vmatpush1.msra.mxu0 %v1246
        %1286 = vmatprep.subr.mxu0 0.0
        %1287 = vmatpush1.msra.mxu0 %v1282
        %1288 = vmatprep.subr.mxu0 0.0
        %1289 = vmatpush1.msra.mxu0 0.0
        %1290 = vmatprep.subr.mxu0 0.0
        %1291 = vmatpush1.msra.mxu0 0.0
        %1292 = vmatprep.subr.mxu0 0.0
        %1293 = vmatpush1.msra.mxu0 0.0
        %1294 = vmatprep.subr.mxu0 0.0
        %1295 = vmatpush1.msra.mxu0 0.0
        %1296 = vmatprep.subr.mxu0 0.0
        %1297 = vmatpush1.msra.mxu0 0.0
        %1298 = vmatprep.subr.mxu0 0.0
        %1299 = vmatpush1.msra.mxu0 0.0
        %1300 = vmatprep.subr.mxu0 0.0
        %1301 = vmatpush1.msra.mxu0 0.0
        %1302 = vmatprep.subr.mxu0 0.0
        %1303 = vmatpush1.msra.mxu0 0.0
        %1304 = vmatprep.subr.mxu0 0.0
        %1305 = vmatpush1.msra.mxu0 0.0
        %1306 = vmatprep.subr.mxu0 0.0
        %1307 = vmatpush1.msra.mxu0 0.0
        %1308 = vmatprep.subr.mxu0 0.0
        %1309 = vmatpush1.msra.mxu0 0.0
        %1310 = vmatprep.subr.mxu0 0.0
        %1311 = vmatpush1.msra.mxu0 0.0
        %1312 = vmatprep.subr.mxu0 0.0
        %1313 = vmatpush1.msra.mxu0 0.0
        %1314 = vmatprep.subr.mxu0 0.0
        %1315 = vmatpush1.msra.mxu0 0.0
        %1316 = vmatprep.subr.mxu0 0.0
        %1317 = vmatpush1.msra.mxu0 0.0
        %1318 = vmatprep.subr.mxu0 0.0
        %1319 = vmatpush1.msra.mxu0 0.0
        %1320 = vmatprep.subr.mxu0 0.0
        %1321 = vmatpush1.msra.mxu0 0.0
        %1322 = vmatprep.subr.mxu0 0.0
        %1323 = vmatpush1.msra.mxu0 0.0
        %1324 = vmatprep.subr.mxu0 0.0
        %1325 = vmatpush1.msra.mxu0 0.0
        %1326 = vmatprep.subr.mxu0 0.0
        %1327 = vmatpush1.msra.mxu0 0.0
        %1328 = vmatprep.subr.mxu0 0.0
        %1329 = vmatpush1.msra.mxu0 0.0
        %1330 = vmatprep.subr.mxu0 0.0
        %1331 = vmatpush1.msra.mxu0 0.0
        %1332 = vmatprep.subr.mxu0 0.0
        %1333 = vmatpush1.msra.mxu0 0.0
        %1334 = vmatprep.subr.mxu0 0.0
        %1335 = vmatpush1.msra.mxu0 0.0
        %1336 = vmatprep.subr.mxu0 0.0
        %1337 = vmatpush1.msra.mxu0 0.0
        %1338 = vmatprep.subr.mxu0 0.0
        %1339 = vmatpush1.msra.mxu0 0.0
        %1340 = vmatprep.subr.mxu0 0.0
        %1341 = vmatpush1.msra.mxu0 0.0
        %1342 = vmatprep.subr.mxu0 0.0
        %1343 = vmatpush1.msra.mxu0 0.0
        %1344 = vmatprep.subr.mxu0 0.0
        %1345 = vmatpush1.msra.mxu0 0.0
        %1346 = vmatprep.subr.mxu0 0.0
        %1347 = vmatpush1.msra.mxu0 0.0
        %1348 = vmatprep.mubr.f32.mxu0 0.0
        %1349 = vmatmul.mubr.f32.gmra.mrb[0].mxu0 %v1257
        %v1350 = vpop.f32.mrb[0].mxu0
        %v1351 = vadd.f32 %v1253, %v1350
        %v1352 = vpop.f32.mrb[0].mxu0
        %1353 = vmatprep.mubr.f32.mxu0 0.0
        %1354 = vmatmul.mubr.f32.gmra.mrb[0].mxu0 %v1260
        %v1355 = vpop.f32.mrb[0].mxu0
        %v1356 = vadd.f32 %v1253, %v1355
        %v1357 = vpop.f32.mrb[0].mxu0
        %1358 = vmatprep.mubr.f32.mxu0 0.0
        %1359 = vmatmul.mubr.f32.gmra.mrb[0].mxu0 %v1263
        %v1360 = vpop.f32.mrb[0].mxu0
        %v1361 = vadd.f32 %v1253, %v1360
        %v1362 = vpop.f32.mrb[0].mxu0
        %1363 = vmatprep.mubr.f32.mxu0 0.0
        %1364 = vmatmul.mubr.f32.gmra.mrb[0].mxu0 %v1266
        %v1365 = vpop.f32.mrb[0].mxu0
        %v1366 = vadd.f32 %v1253, %v1365
        %v1367 = vpop.f32.mrb[0].mxu0
        %1368 = vmatprep.mubr.f32.mxu0 0.0
        %1369 = vmatmul.mubr.f32.gmra.mrb[0].mxu0 %v1269
        %v1370 = vpop.f32.mrb[0].mxu0
        %v1371 = vadd.f32 %v1253, %v1370
        %v1372 = vpop.f32.mrb[0].mxu0
        %1373 = vmatprep.mubr.f32.mxu0 0.0
        %1374 = vmatmul.mubr.f32.gmra.mrb[0].mxu0 %v1272
        %v1375 = vpop.f32.mrb[0].mxu0
        %v1376 = vadd.f32 %v1253, %v1375
        %v1377 = vpop.f32.mrb[0].mxu0
        %1378 = vmatprep.mubr.f32.mxu0 0.0
        %1379 = vmatmul.mubr.f32.gmra.mrb[0].mxu0 %v1275
        %v1380 = vpop.f32.mrb[0].mxu0
        %v1381 = vadd.f32 %v1253, %v1380
        %v1382 = vpop.f32.mrb[0].mxu0
        %1383 = vmatprep.mubr.f32.mxu0 0.0
        %1384 = vmatmul.mubr.f32.gmra.mrb[0].mxu0 %v1278
        %v1385 = vpop.f32.mrb[0].mxu0
        %v1386 = vadd.f32 %v1253, %v1385
        %v1387 = vpop.f32.mrb[0].mxu0
        %1388 = vdwg.mxu0
        %v1389 = vsub.f32 %v1351, 1.5707964
        %v1390 = vsub.f32 %v1356, 1.5707964
        %v1391 = vsub.f32 %v1361, 1.5707964
        %v1392 = vsub.f32 %v1366, 1.5707964
        %v1393 = vsub.f32 %v1371, 1.5707964
        %v1394 = vsub.f32 %v1376, 1.5707964
        %v1395 = vsub.f32 %v1381, 1.5707964
        %v1396 = vsub.f32 %v1386, 1.5707964
        %1405 = vrot.lane.b32.xlu0 %v1389, 64
        %v1406 = vpop.permute.xlu0 %1405
        %1407 = vrot.lane.b32.xlu0 %v1390, 64
        %v1408 = vpop.permute.xlu0 %1407
        %1409 = vrot.lane.b32.xlu0 %v1391, 64
        %v1410 = vpop.permute.xlu0 %1409
        %1411 = vrot.lane.b32.xlu0 %v1392, 64
        %v1412 = vpop.permute.xlu0 %1411
        %1413 = vrot.lane.b32.xlu0 %v1393, 64
        %v1414 = vpop.permute.xlu0 %1413
        %1415 = vrot.lane.b32.xlu0 %v1394, 64
        %v1416 = vpop.permute.xlu0 %1415
        %1417 = vrot.lane.b32.xlu0 %v1395, 64
        %v1418 = vpop.permute.xlu0 %1417
        %1419 = vrot.lane.b32.xlu0 %v1396, 64
        %v1420 = vpop.permute.xlu0 %1419
        %vm1429 = vcmask 523264
        %v1430 = vsel %vm1429, %v1351, %v1406
        %v1431 = vsel %vm1429, %v1356, %v1408
        %v1432 = vsel %vm1429, %v1361, %v1410
        %v1433 = vsel %vm1429, %v1366, %v1412
        %v1434 = vsel %vm1429, %v1371, %v1414
        %v1435 = vsel %vm1429, %v1376, %v1416
        %v1436 = vsel %vm1429, %v1381, %v1418
        %v1437 = vsel %vm1429, %v1386, %v1420
        %v1438 = vand.u32 2147483647, %v1430
        %vm1439 = vcmp.le.f32.partialorder %v1438, 0.7853982
        %vm1440 = vcmp.lt.s32.totalorder %v1430, 0
        %v1441 = vand.u32 %v1430, 2139095040
        %v1442 = vshrl.u32 %v1441, 23
        %v1443 = vsub.s32 %v1442, 127
        %v1444 = vand.u32 2147483647, %v1430
        %v1445 = vand.u32 %v1444, 8388607
        %v1446 = vor.u32 %v1445, 8388608
        %v1447 = vsub.s32 0, %v1446
        %v1448 = vadd.s32 %v1443, 1
        %vm1449 = vcmp.gt.s32.totalorder %v1448, 0
        %v1450 = vsel %vm1449, %v1448, 0
        %v1451 = vshrl.u32 %v1450, 5
        %v1452 = vand.u32 %v1450, 31
        %v1453 = vsub.s32 32, %v1452
        %v1454 = vshrl.u32 683565275, %v1453
        %v1455 = vshll.u32 683565275, %v1452
        %v1456 = vshrl.u32 2475754826, %v1453
        %v1457 = vor.u32 %v1455, %v1456
        %v1458 = vshll.u32 2475754826, %v1452
        %v1459 = vshrl.u32 2131351028, %v1453
        %v1460 = vor.u32 %v1458, %v1459
        %v1461 = vshll.u32 2131351028, %v1452
        %v1462 = vshrl.u32 2102212464, %v1453
        %v1463 = vor.u32 %v1461, %v1462
        %v1464 = vshll.u32 2102212464, %v1452
        %v1465 = vshrl.u32 920167782, %v1453
        %v1466 = vor.u32 %v1464, %v1465
        %v1467 = vshll.u32 920167782, %v1452
        %v1468 = vshrl.u32 1326507024, %v1453
        %v1469 = vor.u32 %v1467, %v1468
        %vm1470 = vcmp.lt.s32.totalorder %v1451, 1
        %vm1471 = vcmp.lt.s32.totalorder %v1451, 2
        %vm1472 = vcmp.lt.s32.totalorder %v1451, 3
        %vm1473 = vcmp.lt.s32.totalorder %v1451, 4
        %v1474 = vsel %vm1470, %v1454, %v1457
        %v1475 = vsel %vm1473, %v1463, 2102212464
        %v1476 = vsel %vm1472, %v1460, %v1475
        %v1477 = vsel %vm1471, %v1474, %v1476
        %v1478 = vsel %vm1470, %v1457, %v1460
        %v1479 = vsel %vm1473, %v1466, 920167782
        %v1480 = vsel %vm1472, %v1463, %v1479
        %v1481 = vsel %vm1471, %v1478, %v1480
        %v1482 = vsel %vm1470, %v1460, %v1463
        %v1483 = vsel %vm1473, %v1469, 1326507024
        %v1484 = vsel %vm1472, %v1466, %v1483
        %v1485 = vsel %vm1471, %v1482, %v1484
        %v1486 = vshll.u32 %v1446, 8
        %v1487 = vmul.u32.u64.compose %v1486, %v1485
        %v1488 = vextract.low.u32 %v1487
        %v1489 = vextract.high.u32 %v1487
        %v1490 = vmul.u32.u64.compose %v1486, %v1481
        %v1491 = vextract.low.u32 %v1490
        %v1492 = vextract.high.u32 %v1490
        %v1493 = vmul.u32 %v1486, %v1477
        %v1494 = vadd.s32 %v1489, %v1491
        %vm1495 = vc.u32 %v1489, %v1491
        %v1496 = vadd.s32 %v1492, 1
        %v1497 = vsel %vm1495, %v1496, %v1492
        %v1498 = vadd.s32 %v1493, %v1497
        %v1499 = vadd.s32 %v1498, 536870912
        %v1500 = vshrl.u32 %v1499, 30
        %v1501 = vshll.u32 %v1500, 30
        %v1502 = vsub.s32 %v1498, %v1501
        %vm1503 = vcmp.lt.s32.totalorder %v1502, 0
        %v1504 = vsub.s32 0, %v1502
        %v1505 = vsel %vm1503, %v1504, %v1502
        %v1506 = vclz %v1505
        %v1507 = vsub.s32 %v1506, 2
        %vm1508 = vcmp.gt.s32.totalorder 0, %v1507
        %v1509 = vsel %vm1508, 0, %v1507
        %v1510 = vsub.s32 32, %v1509
        %v1511 = vshll.u32 %v1502, %v1509
        %v1512 = vshrl.u32 %v1494, %v1510
        %v1513 = vor.u32 %v1511, %v1512
        %v1514 = vsub.s32 4294967266, %v1509
        %v1515 = vadd.s32 %v1514, 127
        %v1516 = vshll.u32 %v1515, 23
        %v1517 = vor.u32 4788187, %v1516
        %v1518 = vand.u32 2147483647, %v1517
        %v1520 = vcvt.s32.f32 %v1513
        %v1521 = vmul.f32 %v1520, %v1518
        %v1522 = vxor.u32 %v1521, 2147483648
        %v1523 = vsel %vm1440, %v1522, %v1521
        %v1524 = vsub.s32 4, %v1500
        %v1525 = vsel %vm1440, %v1524, %v1500
        %v1526 = vsel %vm1439, %v1430, %v1523
        %v1527 = vsel %vm1439, 0, %v1525
        %v1528 = vcosq.f32.pop %v1526
        %v1529 = vsinq.f32.pop %v1526
        %vm1530 = vweird.f32 %v1430
        %v1531 = vand.u32 %v1527, 3
        %vm1532 = vcmp.lt.s32.totalorder %v1531, 2
        %vm1533 = vcmp.eq.s32.totalorder %v1531, 0
        %v1534 = vxor.u32 %v1529, 2147483648
        %v1535 = vsel %vm1533, %v1528, %v1534
        %vm1536 = vcmp.eq.s32.totalorder %v1531, 2
        %v1537 = vxor.u32 %v1528, 2147483648
        %v1538 = vsel %vm1536, %v1537, %v1529
        %v1539 = vsel %vm1532, %v1535, %v1538
        %v1540 = vsel %vm1530, nan, %v1539
        %v1541 = vand.u32 2147483647, %v1431
        %vm1542 = vcmp.le.f32.partialorder %v1541, 0.7853982
        %vm1543 = vcmp.lt.s32.totalorder %v1431, 0
        %v1544 = vand.u32 %v1431, 2139095040
        %v1545 = vshrl.u32 %v1544, 23
        %v1546 = vsub.s32 %v1545, 127
        %v1547 = vand.u32 2147483647, %v1431
        %v1548 = vand.u32 %v1547, 8388607
        %v1549 = vor.u32 %v1548, 8388608
        %v1550 = vsub.s32 0, %v1549
        %v1551 = vadd.s32 %v1546, 1
        %vm1552 = vcmp.gt.s32.totalorder %v1551, 0
        %v1553 = vsel %vm1552, %v1551, 0
        %v1554 = vshrl.u32 %v1553, 5
        %v1555 = vand.u32 %v1553, 31
        %v1556 = vsub.s32 32, %v1555
        %v1557 = vshrl.u32 683565275, %v1556
        %v1558 = vshll.u32 683565275, %v1555
        %v1559 = vshrl.u32 2475754826, %v1556
        %v1560 = vor.u32 %v1558, %v1559
        %v1561 = vshll.u32 2475754826, %v1555
        %v1562 = vshrl.u32 2131351028, %v1556
        %v1563 = vor.u32 %v1561, %v1562
        %v1564 = vshll.u32 2131351028, %v1555
        %v1565 = vshrl.u32 2102212464, %v1556
        %v1566 = vor.u32 %v1564, %v1565
        %v1567 = vshll.u32 2102212464, %v1555
        %v1568 = vshrl.u32 920167782, %v1556
        %v1569 = vor.u32 %v1567, %v1568
        %v1570 = vshll.u32 920167782, %v1555
        %v1571 = vshrl.u32 1326507024, %v1556
        %v1572 = vor.u32 %v1570, %v1571
        %vm1573 = vcmp.lt.s32.totalorder %v1554, 1
        %vm1574 = vcmp.lt.s32.totalorder %v1554, 2
        %vm1575 = vcmp.lt.s32.totalorder %v1554, 3
        %vm1576 = vcmp.lt.s32.totalorder %v1554, 4
        %v1577 = vsel %vm1573, %v1557, %v1560
        %v1578 = vsel %vm1576, %v1566, 2102212464
        %v1579 = vsel %vm1575, %v1563, %v1578
        %v1580 = vsel %vm1574, %v1577, %v1579
        %v1581 = vsel %vm1573, %v1560, %v1563
        %v1582 = vsel %vm1576, %v1569, 920167782
        %v1583 = vsel %vm1575, %v1566, %v1582
        %v1584 = vsel %vm1574, %v1581, %v1583
        %v1585 = vsel %vm1573, %v1563, %v1566
        %v1586 = vsel %vm1576, %v1572, 1326507024
        %v1587 = vsel %vm1575, %v1569, %v1586
        %v1588 = vsel %vm1574, %v1585, %v1587
        %v1589 = vshll.u32 %v1549, 8
        %v1590 = vmul.u32.u64.compose %v1589, %v1588
        %v1591 = vextract.low.u32 %v1590
        %v1592 = vextract.high.u32 %v1590
        %v1593 = vmul.u32.u64.compose %v1589, %v1584
        %v1594 = vextract.low.u32 %v1593
        %v1595 = vextract.high.u32 %v1593
        %v1596 = vmul.u32 %v1589, %v1580
        %v1597 = vadd.s32 %v1592, %v1594
        %vm1598 = vc.u32 %v1592, %v1594
        %v1599 = vadd.s32 %v1595, 1
        %v1600 = vsel %vm1598, %v1599, %v1595
        %v1601 = vadd.s32 %v1596, %v1600
        %v1602 = vadd.s32 %v1601, 536870912
        %v1603 = vshrl.u32 %v1602, 30
        %v1604 = vshll.u32 %v1603, 30
        %v1605 = vsub.s32 %v1601, %v1604
        %vm1606 = vcmp.lt.s32.totalorder %v1605, 0
        %v1607 = vsub.s32 0, %v1605
        %v1608 = vsel %vm1606, %v1607, %v1605
        %v1609 = vclz %v1608
        %v1610 = vsub.s32 %v1609, 2
        %vm1611 = vcmp.gt.s32.totalorder 0, %v1610
        %v1612 = vsel %vm1611, 0, %v1610
        %v1613 = vsub.s32 32, %v1612
        %v1614 = vshll.u32 %v1605, %v1612
        %v1615 = vshrl.u32 %v1597, %v1613
        %v1616 = vor.u32 %v1614, %v1615
        %v1617 = vsub.s32 4294967266, %v1612
        %v1618 = vadd.s32 %v1617, 127
        %v1619 = vshll.u32 %v1618, 23
        %v1620 = vor.u32 4788187, %v1619
        %v1621 = vand.u32 2147483647, %v1620
        %v1623 = vcvt.s32.f32 %v1616
        %v1624 = vmul.f32 %v1623, %v1621
        %v1625 = vxor.u32 %v1624, 2147483648
        %v1626 = vsel %vm1543, %v1625, %v1624
        %v1627 = vsub.s32 4, %v1603
        %v1628 = vsel %vm1543, %v1627, %v1603
        %v1629 = vsel %vm1542, %v1431, %v1626
        %v1630 = vsel %vm1542, 0, %v1628
        %v1631 = vcosq.f32.pop %v1629
        %v1632 = vsinq.f32.pop %v1629
        %vm1633 = vweird.f32 %v1431
        %v1634 = vand.u32 %v1630, 3
        %vm1635 = vcmp.lt.s32.totalorder %v1634, 2
        %vm1636 = vcmp.eq.s32.totalorder %v1634, 0
        %v1637 = vxor.u32 %v1632, 2147483648
        %v1638 = vsel %vm1636, %v1631, %v1637
        %vm1639 = vcmp.eq.s32.totalorder %v1634, 2
        %v1640 = vxor.u32 %v1631, 2147483648
        %v1641 = vsel %vm1639, %v1640, %v1632
        %v1642 = vsel %vm1635, %v1638, %v1641
        %v1643 = vsel %vm1633, nan, %v1642
        %v1644 = vand.u32 2147483647, %v1432
        %vm1645 = vcmp.le.f32.partialorder %v1644, 0.7853982
        %vm1646 = vcmp.lt.s32.totalorder %v1432, 0
        %v1647 = vand.u32 %v1432, 2139095040
        %v1648 = vshrl.u32 %v1647, 23
        %v1649 = vsub.s32 %v1648, 127
        %v1650 = vand.u32 2147483647, %v1432
        %v1651 = vand.u32 %v1650, 8388607
        %v1652 = vor.u32 %v1651, 8388608
        %v1653 = vsub.s32 0, %v1652
        %v1654 = vadd.s32 %v1649, 1
        %vm1655 = vcmp.gt.s32.totalorder %v1654, 0
        %v1656 = vsel %vm1655, %v1654, 0
        %v1657 = vshrl.u32 %v1656, 5
        %v1658 = vand.u32 %v1656, 31
        %v1659 = vsub.s32 32, %v1658
        %v1660 = vshrl.u32 683565275, %v1659
        %v1661 = vshll.u32 683565275, %v1658
        %v1662 = vshrl.u32 2475754826, %v1659
        %v1663 = vor.u32 %v1661, %v1662
        %v1664 = vshll.u32 2475754826, %v1658
        %v1665 = vshrl.u32 2131351028, %v1659
        %v1666 = vor.u32 %v1664, %v1665
        %v1667 = vshll.u32 2131351028, %v1658
        %v1668 = vshrl.u32 2102212464, %v1659
        %v1669 = vor.u32 %v1667, %v1668
        %v1670 = vshll.u32 2102212464, %v1658
        %v1671 = vshrl.u32 920167782, %v1659
        %v1672 = vor.u32 %v1670, %v1671
        %v1673 = vshll.u32 920167782, %v1658
        %v1674 = vshrl.u32 1326507024, %v1659
        %v1675 = vor.u32 %v1673, %v1674
        %vm1676 = vcmp.lt.s32.totalorder %v1657, 1
        %vm1677 = vcmp.lt.s32.totalorder %v1657, 2
        %vm1678 = vcmp.lt.s32.totalorder %v1657, 3
        %vm1679 = vcmp.lt.s32.totalorder %v1657, 4
        %v1680 = vsel %vm1676, %v1660, %v1663
        %v1681 = vsel %vm1679, %v1669, 2102212464
        %v1682 = vsel %vm1678, %v1666, %v1681
        %v1683 = vsel %vm1677, %v1680, %v1682
        %v1684 = vsel %vm1676, %v1663, %v1666
        %v1685 = vsel %vm1679, %v1672, 920167782
        %v1686 = vsel %vm1678, %v1669, %v1685
        %v1687 = vsel %vm1677, %v1684, %v1686
        %v1688 = vsel %vm1676, %v1666, %v1669
        %v1689 = vsel %vm1679, %v1675, 1326507024
        %v1690 = vsel %vm1678, %v1672, %v1689
        %v1691 = vsel %vm1677, %v1688, %v1690
        %v1692 = vshll.u32 %v1652, 8
        %v1693 = vmul.u32.u64.compose %v1692, %v1691
        %v1694 = vextract.low.u32 %v1693
        %v1695 = vextract.high.u32 %v1693
        %v1696 = vmul.u32.u64.compose %v1692, %v1687
        %v1697 = vextract.low.u32 %v1696
        %v1698 = vextract.high.u32 %v1696
        %v1699 = vmul.u32 %v1692, %v1683
        %v1700 = vadd.s32 %v1695, %v1697
        %vm1701 = vc.u32 %v1695, %v1697
        %v1702 = vadd.s32 %v1698, 1
        %v1703 = vsel %vm1701, %v1702, %v1698
        %v1704 = vadd.s32 %v1699, %v1703
        %v1705 = vadd.s32 %v1704, 536870912
        %v1706 = vshrl.u32 %v1705, 30
        %v1707 = vshll.u32 %v1706, 30
        %v1708 = vsub.s32 %v1704, %v1707
        %vm1709 = vcmp.lt.s32.totalorder %v1708, 0
        %v1710 = vsub.s32 0, %v1708
        %v1711 = vsel %vm1709, %v1710, %v1708
        %v1712 = vclz %v1711
        %v1713 = vsub.s32 %v1712, 2
        %vm1714 = vcmp.gt.s32.totalorder 0, %v1713
        %v1715 = vsel %vm1714, 0, %v1713
        %v1716 = vsub.s32 32, %v1715
        %v1717 = vshll.u32 %v1708, %v1715
        %v1718 = vshrl.u32 %v1700, %v1716
        %v1719 = vor.u32 %v1717, %v1718
        %v1720 = vsub.s32 4294967266, %v1715
        %v1721 = vadd.s32 %v1720, 127
        %v1722 = vshll.u32 %v1721, 23
        %v1723 = vor.u32 4788187, %v1722
        %v1724 = vand.u32 2147483647, %v1723
        %v1726 = vcvt.s32.f32 %v1719
        %v1727 = vmul.f32 %v1726, %v1724
        %v1728 = vxor.u32 %v1727, 2147483648
        %v1729 = vsel %vm1646, %v1728, %v1727
        %v1730 = vsub.s32 4, %v1706
        %v1731 = vsel %vm1646, %v1730, %v1706
        %v1732 = vsel %vm1645, %v1432, %v1729
        %v1733 = vsel %vm1645, 0, %v1731
        %v1734 = vcosq.f32.pop %v1732
        %v1735 = vsinq.f32.pop %v1732
        %vm1736 = vweird.f32 %v1432
        %v1737 = vand.u32 %v1733, 3
        %vm1738 = vcmp.lt.s32.totalorder %v1737, 2
        %vm1739 = vcmp.eq.s32.totalorder %v1737, 0
        %v1740 = vxor.u32 %v1735, 2147483648
        %v1741 = vsel %vm1739, %v1734, %v1740
        %vm1742 = vcmp.eq.s32.totalorder %v1737, 2
        %v1743 = vxor.u32 %v1734, 2147483648
        %v1744 = vsel %vm1742, %v1743, %v1735
        %v1745 = vsel %vm1738, %v1741, %v1744
        %v1746 = vsel %vm1736, nan, %v1745
        %v1747 = vand.u32 2147483647, %v1433
        %vm1748 = vcmp.le.f32.partialorder %v1747, 0.7853982
        %vm1749 = vcmp.lt.s32.totalorder %v1433, 0
        %v1750 = vand.u32 %v1433, 2139095040
        %v1751 = vshrl.u32 %v1750, 23
        %v1752 = vsub.s32 %v1751, 127
        %v1753 = vand.u32 2147483647, %v1433
        %v1754 = vand.u32 %v1753, 8388607
        %v1755 = vor.u32 %v1754, 8388608
        %v1756 = vsub.s32 0, %v1755
        %v1757 = vadd.s32 %v1752, 1
        %vm1758 = vcmp.gt.s32.totalorder %v1757, 0
        %v1759 = vsel %vm1758, %v1757, 0
        %v1760 = vshrl.u32 %v1759, 5
        %v1761 = vand.u32 %v1759, 31
        %v1762 = vsub.s32 32, %v1761
        %v1763 = vshrl.u32 683565275, %v1762
        %v1764 = vshll.u32 683565275, %v1761
        %v1765 = vshrl.u32 2475754826, %v1762
        %v1766 = vor.u32 %v1764, %v1765
        %v1767 = vshll.u32 2475754826, %v1761
        %v1768 = vshrl.u32 2131351028, %v1762
        %v1769 = vor.u32 %v1767, %v1768
        %v1770 = vshll.u32 2131351028, %v1761
        %v1771 = vshrl.u32 2102212464, %v1762
        %v1772 = vor.u32 %v1770, %v1771
        %v1773 = vshll.u32 2102212464, %v1761
        %v1774 = vshrl.u32 920167782, %v1762
        %v1775 = vor.u32 %v1773, %v1774
        %v1776 = vshll.u32 920167782, %v1761
        %v1777 = vshrl.u32 1326507024, %v1762
        %v1778 = vor.u32 %v1776, %v1777
        %vm1779 = vcmp.lt.s32.totalorder %v1760, 1
        %vm1780 = vcmp.lt.s32.totalorder %v1760, 2
        %vm1781 = vcmp.lt.s32.totalorder %v1760, 3
        %vm1782 = vcmp.lt.s32.totalorder %v1760, 4
        %v1783 = vsel %vm1779, %v1763, %v1766
        %v1784 = vsel %vm1782, %v1772, 2102212464
        %v1785 = vsel %vm1781, %v1769, %v1784
        %v1786 = vsel %vm1780, %v1783, %v1785
        %v1787 = vsel %vm1779, %v1766, %v1769
        %v1788 = vsel %vm1782, %v1775, 920167782
        %v1789 = vsel %vm1781, %v1772, %v1788
        %v1790 = vsel %vm1780, %v1787, %v1789
        %v1791 = vsel %vm1779, %v1769, %v1772
        %v1792 = vsel %vm1782, %v1778, 1326507024
        %v1793 = vsel %vm1781, %v1775, %v1792
        %v1794 = vsel %vm1780, %v1791, %v1793
        %v1795 = vshll.u32 %v1755, 8
        %v1796 = vmul.u32.u64.compose %v1795, %v1794
        %v1797 = vextract.low.u32 %v1796
        %v1798 = vextract.high.u32 %v1796
        %v1799 = vmul.u32.u64.compose %v1795, %v1790
        %v1800 = vextract.low.u32 %v1799
        %v1801 = vextract.high.u32 %v1799
        %v1802 = vmul.u32 %v1795, %v1786
        %v1803 = vadd.s32 %v1798, %v1800
        %vm1804 = vc.u32 %v1798, %v1800
        %v1805 = vadd.s32 %v1801, 1
        %v1806 = vsel %vm1804, %v1805, %v1801
        %v1807 = vadd.s32 %v1802, %v1806
        %v1808 = vadd.s32 %v1807, 536870912
        %v1809 = vshrl.u32 %v1808, 30
        %v1810 = vshll.u32 %v1809, 30
        %v1811 = vsub.s32 %v1807, %v1810
        %vm1812 = vcmp.lt.s32.totalorder %v1811, 0
        %v1813 = vsub.s32 0, %v1811
        %v1814 = vsel %vm1812, %v1813, %v1811
        %v1815 = vclz %v1814
        %v1816 = vsub.s32 %v1815, 2
        %vm1817 = vcmp.gt.s32.totalorder 0, %v1816
        %v1818 = vsel %vm1817, 0, %v1816
        %v1819 = vsub.s32 32, %v1818
        %v1820 = vshll.u32 %v1811, %v1818
        %v1821 = vshrl.u32 %v1803, %v1819
        %v1822 = vor.u32 %v1820, %v1821
        %v1823 = vsub.s32 4294967266, %v1818
        %v1824 = vadd.s32 %v1823, 127
        %v1825 = vshll.u32 %v1824, 23
        %v1826 = vor.u32 4788187, %v1825
        %v1827 = vand.u32 2147483647, %v1826
        %v1829 = vcvt.s32.f32 %v1822
        %v1830 = vmul.f32 %v1829, %v1827
        %v1831 = vxor.u32 %v1830, 2147483648
        %v1832 = vsel %vm1749, %v1831, %v1830
        %v1833 = vsub.s32 4, %v1809
        %v1834 = vsel %vm1749, %v1833, %v1809
        %v1835 = vsel %vm1748, %v1433, %v1832
        %v1836 = vsel %vm1748, 0, %v1834
        %v1837 = vcosq.f32.pop %v1835
        %v1838 = vsinq.f32.pop %v1835
        %vm1839 = vweird.f32 %v1433
        %v1840 = vand.u32 %v1836, 3
        %vm1841 = vcmp.lt.s32.totalorder %v1840, 2
        %vm1842 = vcmp.eq.s32.totalorder %v1840, 0
        %v1843 = vxor.u32 %v1838, 2147483648
        %v1844 = vsel %vm1842, %v1837, %v1843
        %vm1845 = vcmp.eq.s32.totalorder %v1840, 2
        %v1846 = vxor.u32 %v1837, 2147483648
        %v1847 = vsel %vm1845, %v1846, %v1838
        %v1848 = vsel %vm1841, %v1844, %v1847
        %v1849 = vsel %vm1839, nan, %v1848
        %v1850 = vand.u32 2147483647, %v1434
        %vm1851 = vcmp.le.f32.partialorder %v1850, 0.7853982
        %vm1852 = vcmp.lt.s32.totalorder %v1434, 0
        %v1853 = vand.u32 %v1434, 2139095040
        %v1854 = vshrl.u32 %v1853, 23
        %v1855 = vsub.s32 %v1854, 127
        %v1856 = vand.u32 2147483647, %v1434
        %v1857 = vand.u32 %v1856, 8388607
        %v1858 = vor.u32 %v1857, 8388608
        %v1859 = vsub.s32 0, %v1858
        %v1860 = vadd.s32 %v1855, 1
        %vm1861 = vcmp.gt.s32.totalorder %v1860, 0
        %v1862 = vsel %vm1861, %v1860, 0
        %v1863 = vshrl.u32 %v1862, 5
        %v1864 = vand.u32 %v1862, 31
        %v1865 = vsub.s32 32, %v1864
        %v1866 = vshrl.u32 683565275, %v1865
        %v1867 = vshll.u32 683565275, %v1864
        %v1868 = vshrl.u32 2475754826, %v1865
        %v1869 = vor.u32 %v1867, %v1868
        %v1870 = vshll.u32 2475754826, %v1864
        %v1871 = vshrl.u32 2131351028, %v1865
        %v1872 = vor.u32 %v1870, %v1871
        %v1873 = vshll.u32 2131351028, %v1864
        %v1874 = vshrl.u32 2102212464, %v1865
        %v1875 = vor.u32 %v1873, %v1874
        %v1876 = vshll.u32 2102212464, %v1864
        %v1877 = vshrl.u32 920167782, %v1865
        %v1878 = vor.u32 %v1876, %v1877
        %v1879 = vshll.u32 920167782, %v1864
        %v1880 = vshrl.u32 1326507024, %v1865
        %v1881 = vor.u32 %v1879, %v1880
        %vm1882 = vcmp.lt.s32.totalorder %v1863, 1
        %vm1883 = vcmp.lt.s32.totalorder %v1863, 2
        %vm1884 = vcmp.lt.s32.totalorder %v1863, 3
        %vm1885 = vcmp.lt.s32.totalorder %v1863, 4
        %v1886 = vsel %vm1882, %v1866, %v1869
        %v1887 = vsel %vm1885, %v1875, 2102212464
        %v1888 = vsel %vm1884, %v1872, %v1887
        %v1889 = vsel %vm1883, %v1886, %v1888
        %v1890 = vsel %vm1882, %v1869, %v1872
        %v1891 = vsel %vm1885, %v1878, 920167782
        %v1892 = vsel %vm1884, %v1875, %v1891
        %v1893 = vsel %vm1883, %v1890, %v1892
        %v1894 = vsel %vm1882, %v1872, %v1875
        %v1895 = vsel %vm1885, %v1881, 1326507024
        %v1896 = vsel %vm1884, %v1878, %v1895
        %v1897 = vsel %vm1883, %v1894, %v1896
        %v1898 = vshll.u32 %v1858, 8
        %v1899 = vmul.u32.u64.compose %v1898, %v1897
        %v1900 = vextract.low.u32 %v1899
        %v1901 = vextract.high.u32 %v1899
        %v1902 = vmul.u32.u64.compose %v1898, %v1893
        %v1903 = vextract.low.u32 %v1902
        %v1904 = vextract.high.u32 %v1902
        %v1905 = vmul.u32 %v1898, %v1889
        %v1906 = vadd.s32 %v1901, %v1903
        %vm1907 = vc.u32 %v1901, %v1903
        %v1908 = vadd.s32 %v1904, 1
        %v1909 = vsel %vm1907, %v1908, %v1904
        %v1910 = vadd.s32 %v1905, %v1909
        %v1911 = vadd.s32 %v1910, 536870912
        %v1912 = vshrl.u32 %v1911, 30
        %v1913 = vshll.u32 %v1912, 30
        %v1914 = vsub.s32 %v1910, %v1913
        %vm1915 = vcmp.lt.s32.totalorder %v1914, 0
        %v1916 = vsub.s32 0, %v1914
        %v1917 = vsel %vm1915, %v1916, %v1914
        %v1918 = vclz %v1917
        %v1919 = vsub.s32 %v1918, 2
        %vm1920 = vcmp.gt.s32.totalorder 0, %v1919
        %v1921 = vsel %vm1920, 0, %v1919
        %v1922 = vsub.s32 32, %v1921
        %v1923 = vshll.u32 %v1914, %v1921
        %v1924 = vshrl.u32 %v1906, %v1922
        %v1925 = vor.u32 %v1923, %v1924
        %v1926 = vsub.s32 4294967266, %v1921
        %v1927 = vadd.s32 %v1926, 127
        %v1928 = vshll.u32 %v1927, 23
        %v1929 = vor.u32 4788187, %v1928
        %v1930 = vand.u32 2147483647, %v1929
        %v1932 = vcvt.s32.f32 %v1925
        %v1933 = vmul.f32 %v1932, %v1930
        %v1934 = vxor.u32 %v1933, 2147483648
        %v1935 = vsel %vm1852, %v1934, %v1933
        %v1936 = vsub.s32 4, %v1912
        %v1937 = vsel %vm1852, %v1936, %v1912
        %v1938 = vsel %vm1851, %v1434, %v1935
        %v1939 = vsel %vm1851, 0, %v1937
        %v1940 = vcosq.f32.pop %v1938
        %v1941 = vsinq.f32.pop %v1938
        %vm1942 = vweird.f32 %v1434
        %v1943 = vand.u32 %v1939, 3
        %vm1944 = vcmp.lt.s32.totalorder %v1943, 2
        %vm1945 = vcmp.eq.s32.totalorder %v1943, 0
        %v1946 = vxor.u32 %v1941, 2147483648
        %v1947 = vsel %vm1945, %v1940, %v1946
        %vm1948 = vcmp.eq.s32.totalorder %v1943, 2
        %v1949 = vxor.u32 %v1940, 2147483648
        %v1950 = vsel %vm1948, %v1949, %v1941
        %v1951 = vsel %vm1944, %v1947, %v1950
        %v1952 = vsel %vm1942, nan, %v1951
        %v1953 = vand.u32 2147483647, %v1435
        %vm1954 = vcmp.le.f32.partialorder %v1953, 0.7853982
        %vm1955 = vcmp.lt.s32.totalorder %v1435, 0
        %v1956 = vand.u32 %v1435, 2139095040
        %v1957 = vshrl.u32 %v1956, 23
        %v1958 = vsub.s32 %v1957, 127
        %v1959 = vand.u32 2147483647, %v1435
        %v1960 = vand.u32 %v1959, 8388607
        %v1961 = vor.u32 %v1960, 8388608
        %v1962 = vsub.s32 0, %v1961
        %v1963 = vadd.s32 %v1958, 1
        %vm1964 = vcmp.gt.s32.totalorder %v1963, 0
        %v1965 = vsel %vm1964, %v1963, 0
        %v1966 = vshrl.u32 %v1965, 5
        %v1967 = vand.u32 %v1965, 31
        %v1968 = vsub.s32 32, %v1967
        %v1969 = vshrl.u32 683565275, %v1968
        %v1970 = vshll.u32 683565275, %v1967
        %v1971 = vshrl.u32 2475754826, %v1968
        %v1972 = vor.u32 %v1970, %v1971
        %v1973 = vshll.u32 2475754826, %v1967
        %v1974 = vshrl.u32 2131351028, %v1968
        %v1975 = vor.u32 %v1973, %v1974
        %v1976 = vshll.u32 2131351028, %v1967
        %v1977 = vshrl.u32 2102212464, %v1968
        %v1978 = vor.u32 %v1976, %v1977
        %v1979 = vshll.u32 2102212464, %v1967
        %v1980 = vshrl.u32 920167782, %v1968
        %v1981 = vor.u32 %v1979, %v1980
        %v1982 = vshll.u32 920167782, %v1967
        %v1983 = vshrl.u32 1326507024, %v1968
        %v1984 = vor.u32 %v1982, %v1983
        %vm1985 = vcmp.lt.s32.totalorder %v1966, 1
        %vm1986 = vcmp.lt.s32.totalorder %v1966, 2
        %vm1987 = vcmp.lt.s32.totalorder %v1966, 3
        %vm1988 = vcmp.lt.s32.totalorder %v1966, 4
        %v1989 = vsel %vm1985, %v1969, %v1972
        %v1990 = vsel %vm1988, %v1978, 2102212464
        %v1991 = vsel %vm1987, %v1975, %v1990
        %v1992 = vsel %vm1986, %v1989, %v1991
        %v1993 = vsel %vm1985, %v1972, %v1975
        %v1994 = vsel %vm1988, %v1981, 920167782
        %v1995 = vsel %vm1987, %v1978, %v1994
        %v1996 = vsel %vm1986, %v1993, %v1995
        %v1997 = vsel %vm1985, %v1975, %v1978
        %v1998 = vsel %vm1988, %v1984, 1326507024
        %v1999 = vsel %vm1987, %v1981, %v1998
        %v2000 = vsel %vm1986, %v1997, %v1999
        %v2001 = vshll.u32 %v1961, 8
        %v2002 = vmul.u32.u64.compose %v2001, %v2000
        %v2003 = vextract.low.u32 %v2002
        %v2004 = vextract.high.u32 %v2002
        %v2005 = vmul.u32.u64.compose %v2001, %v1996
        %v2006 = vextract.low.u32 %v2005
        %v2007 = vextract.high.u32 %v2005
        %v2008 = vmul.u32 %v2001, %v1992
        %v2009 = vadd.s32 %v2004, %v2006
        %vm2010 = vc.u32 %v2004, %v2006
        %v2011 = vadd.s32 %v2007, 1
        %v2012 = vsel %vm2010, %v2011, %v2007
        %v2013 = vadd.s32 %v2008, %v2012
        %v2014 = vadd.s32 %v2013, 536870912
        %v2015 = vshrl.u32 %v2014, 30
        %v2016 = vshll.u32 %v2015, 30
        %v2017 = vsub.s32 %v2013, %v2016
        %vm2018 = vcmp.lt.s32.totalorder %v2017, 0
        %v2019 = vsub.s32 0, %v2017
        %v2020 = vsel %vm2018, %v2019, %v2017
        %v2021 = vclz %v2020
        %v2022 = vsub.s32 %v2021, 2
        %vm2023 = vcmp.gt.s32.totalorder 0, %v2022
        %v2024 = vsel %vm2023, 0, %v2022
        %v2025 = vsub.s32 32, %v2024
        %v2026 = vshll.u32 %v2017, %v2024
        %v2027 = vshrl.u32 %v2009, %v2025
        %v2028 = vor.u32 %v2026, %v2027
        %v2029 = vsub.s32 4294967266, %v2024
        %v2030 = vadd.s32 %v2029, 127
        %v2031 = vshll.u32 %v2030, 23
        %v2032 = vor.u32 4788187, %v2031
        %v2033 = vand.u32 2147483647, %v2032
        %v2035 = vcvt.s32.f32 %v2028
        %v2036 = vmul.f32 %v2035, %v2033
        %v2037 = vxor.u32 %v2036, 2147483648
        %v2038 = vsel %vm1955, %v2037, %v2036
        %v2039 = vsub.s32 4, %v2015
        %v2040 = vsel %vm1955, %v2039, %v2015
        %v2041 = vsel %vm1954, %v1435, %v2038
        %v2042 = vsel %vm1954, 0, %v2040
        %v2043 = vcosq.f32.pop %v2041
        %v2044 = vsinq.f32.pop %v2041
        %vm2045 = vweird.f32 %v1435
        %v2046 = vand.u32 %v2042, 3
        %vm2047 = vcmp.lt.s32.totalorder %v2046, 2
        %vm2048 = vcmp.eq.s32.totalorder %v2046, 0
        %v2049 = vxor.u32 %v2044, 2147483648
        %v2050 = vsel %vm2048, %v2043, %v2049
        %vm2051 = vcmp.eq.s32.totalorder %v2046, 2
        %v2052 = vxor.u32 %v2043, 2147483648
        %v2053 = vsel %vm2051, %v2052, %v2044
        %v2054 = vsel %vm2047, %v2050, %v2053
        %v2055 = vsel %vm2045, nan, %v2054
        %v2056 = vand.u32 2147483647, %v1436
        %vm2057 = vcmp.le.f32.partialorder %v2056, 0.7853982
        %vm2058 = vcmp.lt.s32.totalorder %v1436, 0
        %v2059 = vand.u32 %v1436, 2139095040
        %v2060 = vshrl.u32 %v2059, 23
        %v2061 = vsub.s32 %v2060, 127
        %v2062 = vand.u32 2147483647, %v1436
        %v2063 = vand.u32 %v2062, 8388607
        %v2064 = vor.u32 %v2063, 8388608
        %v2065 = vsub.s32 0, %v2064
        %v2066 = vadd.s32 %v2061, 1
        %vm2067 = vcmp.gt.s32.totalorder %v2066, 0
        %v2068 = vsel %vm2067, %v2066, 0
        %v2069 = vshrl.u32 %v2068, 5
        %v2070 = vand.u32 %v2068, 31
        %v2071 = vsub.s32 32, %v2070
        %v2072 = vshrl.u32 683565275, %v2071
        %v2073 = vshll.u32 683565275, %v2070
        %v2074 = vshrl.u32 2475754826, %v2071
        %v2075 = vor.u32 %v2073, %v2074
        %v2076 = vshll.u32 2475754826, %v2070
        %v2077 = vshrl.u32 2131351028, %v2071
        %v2078 = vor.u32 %v2076, %v2077
        %v2079 = vshll.u32 2131351028, %v2070
        %v2080 = vshrl.u32 2102212464, %v2071
        %v2081 = vor.u32 %v2079, %v2080
        %v2082 = vshll.u32 2102212464, %v2070
        %v2083 = vshrl.u32 920167782, %v2071
        %v2084 = vor.u32 %v2082, %v2083
        %v2085 = vshll.u32 920167782, %v2070
        %v2086 = vshrl.u32 1326507024, %v2071
        %v2087 = vor.u32 %v2085, %v2086
        %vm2088 = vcmp.lt.s32.totalorder %v2069, 1
        %vm2089 = vcmp.lt.s32.totalorder %v2069, 2
        %vm2090 = vcmp.lt.s32.totalorder %v2069, 3
        %vm2091 = vcmp.lt.s32.totalorder %v2069, 4
        %v2092 = vsel %vm2088, %v2072, %v2075
        %v2093 = vsel %vm2091, %v2081, 2102212464
        %v2094 = vsel %vm2090, %v2078, %v2093
        %v2095 = vsel %vm2089, %v2092, %v2094
        %v2096 = vsel %vm2088, %v2075, %v2078
        %v2097 = vsel %vm2091, %v2084, 920167782
        %v2098 = vsel %vm2090, %v2081, %v2097
        %v2099 = vsel %vm2089, %v2096, %v2098
        %v2100 = vsel %vm2088, %v2078, %v2081
        %v2101 = vsel %vm2091, %v2087, 1326507024
        %v2102 = vsel %vm2090, %v2084, %v2101
        %v2103 = vsel %vm2089, %v2100, %v2102
        %v2104 = vshll.u32 %v2064, 8
        %v2105 = vmul.u32.u64.compose %v2104, %v2103
        %v2106 = vextract.low.u32 %v2105
        %v2107 = vextract.high.u32 %v2105
        %v2108 = vmul.u32.u64.compose %v2104, %v2099
        %v2109 = vextract.low.u32 %v2108
        %v2110 = vextract.high.u32 %v2108
        %v2111 = vmul.u32 %v2104, %v2095
        %v2112 = vadd.s32 %v2107, %v2109
        %vm2113 = vc.u32 %v2107, %v2109
        %v2114 = vadd.s32 %v2110, 1
        %v2115 = vsel %vm2113, %v2114, %v2110
        %v2116 = vadd.s32 %v2111, %v2115
        %v2117 = vadd.s32 %v2116, 536870912
        %v2118 = vshrl.u32 %v2117, 30
        %v2119 = vshll.u32 %v2118, 30
        %v2120 = vsub.s32 %v2116, %v2119
        %vm2121 = vcmp.lt.s32.totalorder %v2120, 0
        %v2122 = vsub.s32 0, %v2120
        %v2123 = vsel %vm2121, %v2122, %v2120
        %v2124 = vclz %v2123
        %v2125 = vsub.s32 %v2124, 2
        %vm2126 = vcmp.gt.s32.totalorder 0, %v2125
        %v2127 = vsel %vm2126, 0, %v2125
        %v2128 = vsub.s32 32, %v2127
        %v2129 = vshll.u32 %v2120, %v2127
        %v2130 = vshrl.u32 %v2112, %v2128
        %v2131 = vor.u32 %v2129, %v2130
        %v2132 = vsub.s32 4294967266, %v2127
        %v2133 = vadd.s32 %v2132, 127
        %v2134 = vshll.u32 %v2133, 23
        %v2135 = vor.u32 4788187, %v2134
        %v2136 = vand.u32 2147483647, %v2135
        %v2138 = vcvt.s32.f32 %v2131
        %v2139 = vmul.f32 %v2138, %v2136
        %v2140 = vxor.u32 %v2139, 2147483648
        %v2141 = vsel %vm2058, %v2140, %v2139
        %v2142 = vsub.s32 4, %v2118
        %v2143 = vsel %vm2058, %v2142, %v2118
        %v2144 = vsel %vm2057, %v1436, %v2141
        %v2145 = vsel %vm2057, 0, %v2143
        %v2146 = vcosq.f32.pop %v2144
        %v2147 = vsinq.f32.pop %v2144
        %vm2148 = vweird.f32 %v1436
        %v2149 = vand.u32 %v2145, 3
        %vm2150 = vcmp.lt.s32.totalorder %v2149, 2
        %vm2151 = vcmp.eq.s32.totalorder %v2149, 0
        %v2152 = vxor.u32 %v2147, 2147483648
        %v2153 = vsel %vm2151, %v2146, %v2152
        %vm2154 = vcmp.eq.s32.totalorder %v2149, 2
        %v2155 = vxor.u32 %v2146, 2147483648
        %v2156 = vsel %vm2154, %v2155, %v2147
        %v2157 = vsel %vm2150, %v2153, %v2156
        %v2158 = vsel %vm2148, nan, %v2157
        %v2159 = vand.u32 2147483647, %v1437
        %vm2160 = vcmp.le.f32.partialorder %v2159, 0.7853982
        %vm2161 = vcmp.lt.s32.totalorder %v1437, 0
        %v2162 = vand.u32 %v1437, 2139095040
        %v2163 = vshrl.u32 %v2162, 23
        %v2164 = vsub.s32 %v2163, 127
        %v2165 = vand.u32 2147483647, %v1437
        %v2166 = vand.u32 %v2165, 8388607
        %v2167 = vor.u32 %v2166, 8388608
        %v2168 = vsub.s32 0, %v2167
        %v2169 = vadd.s32 %v2164, 1
        %vm2170 = vcmp.gt.s32.totalorder %v2169, 0
        %v2171 = vsel %vm2170, %v2169, 0
        %v2172 = vshrl.u32 %v2171, 5
        %v2173 = vand.u32 %v2171, 31
        %v2174 = vsub.s32 32, %v2173
        %v2175 = vshrl.u32 683565275, %v2174
        %v2176 = vshll.u32 683565275, %v2173
        %v2177 = vshrl.u32 2475754826, %v2174
        %v2178 = vor.u32 %v2176, %v2177
        %v2179 = vshll.u32 2475754826, %v2173
        %v2180 = vshrl.u32 2131351028, %v2174
        %v2181 = vor.u32 %v2179, %v2180
        %v2182 = vshll.u32 2131351028, %v2173
        %v2183 = vshrl.u32 2102212464, %v2174
        %v2184 = vor.u32 %v2182, %v2183
        %v2185 = vshll.u32 2102212464, %v2173
        %v2186 = vshrl.u32 920167782, %v2174
        %v2187 = vor.u32 %v2185, %v2186
        %v2188 = vshll.u32 920167782, %v2173
        %v2189 = vshrl.u32 1326507024, %v2174
        %v2190 = vor.u32 %v2188, %v2189
        %vm2191 = vcmp.lt.s32.totalorder %v2172, 1
        %vm2192 = vcmp.lt.s32.totalorder %v2172, 2
        %vm2193 = vcmp.lt.s32.totalorder %v2172, 3
        %vm2194 = vcmp.lt.s32.totalorder %v2172, 4
        %v2195 = vsel %vm2191, %v2175, %v2178
        %v2196 = vsel %vm2194, %v2184, 2102212464
        %v2197 = vsel %vm2193, %v2181, %v2196
        %v2198 = vsel %vm2192, %v2195, %v2197
        %v2199 = vsel %vm2191, %v2178, %v2181
        %v2200 = vsel %vm2194, %v2187, 920167782
        %v2201 = vsel %vm2193, %v2184, %v2200
        %v2202 = vsel %vm2192, %v2199, %v2201
        %v2203 = vsel %vm2191, %v2181, %v2184
        %v2204 = vsel %vm2194, %v2190, 1326507024
        %v2205 = vsel %vm2193, %v2187, %v2204
        %v2206 = vsel %vm2192, %v2203, %v2205
        %v2207 = vshll.u32 %v2167, 8
        %v2208 = vmul.u32.u64.compose %v2207, %v2206
        %v2209 = vextract.low.u32 %v2208
        %v2210 = vextract.high.u32 %v2208
        %v2211 = vmul.u32.u64.compose %v2207, %v2202
        %v2212 = vextract.low.u32 %v2211
        %v2213 = vextract.high.u32 %v2211
        %v2214 = vmul.u32 %v2207, %v2198
        %v2215 = vadd.s32 %v2210, %v2212
        %vm2216 = vc.u32 %v2210, %v2212
        %v2217 = vadd.s32 %v2213, 1
        %v2218 = vsel %vm2216, %v2217, %v2213
        %v2219 = vadd.s32 %v2214, %v2218
        %v2220 = vadd.s32 %v2219, 536870912
        %v2221 = vshrl.u32 %v2220, 30
        %v2222 = vshll.u32 %v2221, 30
        %v2223 = vsub.s32 %v2219, %v2222
        %vm2224 = vcmp.lt.s32.totalorder %v2223, 0
        %v2225 = vsub.s32 0, %v2223
        %v2226 = vsel %vm2224, %v2225, %v2223
        %v2227 = vclz %v2226
        %v2228 = vsub.s32 %v2227, 2
        %vm2229 = vcmp.gt.s32.totalorder 0, %v2228
        %v2230 = vsel %vm2229, 0, %v2228
        %v2231 = vsub.s32 32, %v2230
        %v2232 = vshll.u32 %v2223, %v2230
        %v2233 = vshrl.u32 %v2215, %v2231
        %v2234 = vor.u32 %v2232, %v2233
        %v2235 = vsub.s32 4294967266, %v2230
        %v2236 = vadd.s32 %v2235, 127
        %v2237 = vshll.u32 %v2236, 23
        %v2238 = vor.u32 4788187, %v2237
        %v2239 = vand.u32 2147483647, %v2238
        %v2241 = vcvt.s32.f32 %v2234
        %v2242 = vmul.f32 %v2241, %v2239
        %v2243 = vxor.u32 %v2242, 2147483648
        %v2244 = vsel %vm2161, %v2243, %v2242
        %v2245 = vsub.s32 4, %v2221
        %v2246 = vsel %vm2161, %v2245, %v2221
        %v2247 = vsel %vm2160, %v1437, %v2244
        %v2248 = vsel %vm2160, 0, %v2246
        %v2249 = vcosq.f32.pop %v2247
        %v2250 = vsinq.f32.pop %v2247
        %vm2251 = vweird.f32 %v1437
        %v2252 = vand.u32 %v2248, 3
        %vm2253 = vcmp.lt.s32.totalorder %v2252, 2
        %vm2254 = vcmp.eq.s32.totalorder %v2252, 0
        %v2255 = vxor.u32 %v2250, 2147483648
        %v2256 = vsel %vm2254, %v2249, %v2255
        %vm2257 = vcmp.eq.s32.totalorder %v2252, 2
        %v2258 = vxor.u32 %v2249, 2147483648
        %v2259 = vsel %vm2257, %v2258, %v2250
        %v2260 = vsel %vm2253, %v2256, %v2259
        %v2261 = vsel %vm2251, nan, %v2260
        %v2262 = vld [vmem:[%s3] sm:$0xff]
        %v2263 = vld [vmem:[%s3 + $0x8] sm:$0xff]
        %v2264 = vld [vmem:[%s3 + $0x10] sm:$0xff]
        %v2265 = vld [vmem:[%s3 + $0x18] sm:$0xff]
        %v2266 = vld [vmem:[%s3 + $0x20] sm:$0xff]
        %v2267 = vld [vmem:[%s3 + $0x28] sm:$0xff]
        %v2268 = vld [vmem:[%s3 + $0x30] sm:$0xff]
        %v2269 = vld [vmem:[%s3 + $0x38] sm:$0xff]
        %v2270 = vld [vmem:[%s3 + $0x40] sm:$0xff]
        %v2271 = vld [vmem:[%s3 + $0x48] sm:$0xff]
        %v2272 = vld [vmem:[%s3 + $0x50] sm:$0xff]
        %v2273 = vld [vmem:[%s3 + $0x58] sm:$0xff]
        %v2274 = vld [vmem:[%s3 + $0x60] sm:$0xff]
        %v2275 = vld [vmem:[%s3 + $0x68] sm:$0xff]
        %v2276 = vld [vmem:[%s3 + $0x70] sm:$0xff]
        %v2277 = vld [vmem:[%s3 + $0x78] sm:$0xff]
        %v2278 = vld [vmem:[%s4] sm:$0x1]
        %v2280 = vlaneseq
        %v2281 = vshrl.u32 %v2280, 7
        %v2282 = vsub.s32 0, %v2281
        %v2283 = vrot.slane %v2278, %v2282
        %2285 = vmatprep.subr.mxu0 0.0
        %2286 = vmatpush1.msra.mxu0 %v2262
        %2287 = vmatprep.subr.mxu0 0.0
        %2288 = vmatpush1.msra.mxu0 %v2263
        %2289 = vmatprep.subr.mxu0 0.0
        %2290 = vmatpush1.msra.mxu0 %v2264
        %2291 = vmatprep.subr.mxu0 0.0
        %2292 = vmatpush1.msra.mxu0 %v2265
        %2293 = vmatprep.subr.mxu0 0.0
        %2294 = vmatpush1.msra.mxu0 %v2266
        %2295 = vmatprep.subr.mxu0 0.0
        %2296 = vmatpush1.msra.mxu0 %v2267
        %2297 = vmatprep.subr.mxu0 0.0
        %2298 = vmatpush1.msra.mxu0 %v2268
        %2299 = vmatprep.subr.mxu0 0.0
        %2300 = vmatpush1.msra.mxu0 %v2269
        %2301 = vmatprep.subr.mxu0 0.0
        %2302 = vmatpush1.msra.mxu0 %v2270
        %2303 = vmatprep.subr.mxu0 0.0
        %2304 = vmatpush1.msra.mxu0 %v2271
        %2305 = vmatprep.subr.mxu0 0.0
        %2306 = vmatpush1.msra.mxu0 %v2272
        %2307 = vmatprep.subr.mxu0 0.0
        %2308 = vmatpush1.msra.mxu0 %v2273
        %2309 = vmatprep.subr.mxu0 0.0
        %2310 = vmatpush1.msra.mxu0 %v2274
        %2311 = vmatprep.subr.mxu0 0.0
        %2312 = vmatpush1.msra.mxu0 %v2275
        %2313 = vmatprep.subr.mxu0 0.0
        %2314 = vmatpush1.msra.mxu0 %v2276
        %2315 = vmatprep.subr.mxu0 0.0
        %2316 = vmatpush1.msra.mxu0 %v2277
        %2317 = vmatprep.subr.mxu0 0.0
        %2318 = vmatpush1.msra.mxu0 0.0
        %2319 = vmatprep.subr.mxu0 0.0
        %2320 = vmatpush1.msra.mxu0 0.0
        %2321 = vmatprep.subr.mxu0 0.0
        %2322 = vmatpush1.msra.mxu0 0.0
        %2323 = vmatprep.subr.mxu0 0.0
        %2324 = vmatpush1.msra.mxu0 0.0
        %2325 = vmatprep.subr.mxu0 0.0
        %2326 = vmatpush1.msra.mxu0 0.0
        %2327 = vmatprep.subr.mxu0 0.0
        %2328 = vmatpush1.msra.mxu0 0.0
        %2329 = vmatprep.subr.mxu0 0.0
        %2330 = vmatpush1.msra.mxu0 0.0
        %2331 = vmatprep.subr.mxu0 0.0
        %2332 = vmatpush1.msra.mxu0 0.0
        %2333 = vmatprep.subr.mxu0 0.0
        %2334 = vmatpush1.msra.mxu0 0.0
        %2335 = vmatprep.subr.mxu0 0.0
        %2336 = vmatpush1.msra.mxu0 0.0
        %2337 = vmatprep.subr.mxu0 0.0
        %2338 = vmatpush1.msra.mxu0 0.0
        %2339 = vmatprep.subr.mxu0 0.0
        %2340 = vmatpush1.msra.mxu0 0.0
        %2341 = vmatprep.subr.mxu0 0.0
        %2342 = vmatpush1.msra.mxu0 0.0
        %2343 = vmatprep.subr.mxu0 0.0
        %2344 = vmatpush1.msra.mxu0 0.0
        %2345 = vmatprep.subr.mxu0 0.0
        %2346 = vmatpush1.msra.mxu0 0.0
        %2347 = vmatprep.subr.mxu0 0.0
        %2348 = vmatpush1.msra.mxu0 0.0
        %2349 = vmatprep.mubr.f32.mxu0 0.0
        %2350 = vmatmul.mubr.f32.gmra.mrb[0].mxu0 %v1540
        %v2351 = vpop.f32.mrb[0].mxu0
        %v2352 = vadd.f32 %v2283, %v2351
        %v2353 = vpop.f32.mrb[0].mxu0
        %2354 = vmatprep.mubr.f32.mxu0 0.0
        %2355 = vmatmul.mubr.f32.gmra.mrb[0].mxu0 %v1643
        %v2356 = vpop.f32.mrb[0].mxu0
        %v2357 = vadd.f32 %v2283, %v2356
        %v2358 = vpop.f32.mrb[0].mxu0
        %2359 = vmatprep.mubr.f32.mxu0 0.0
        %2360 = vmatmul.mubr.f32.gmra.mrb[0].mxu0 %v1746
        %v2361 = vpop.f32.mrb[0].mxu0
        %v2362 = vadd.f32 %v2283, %v2361
        %v2363 = vpop.f32.mrb[0].mxu0
        %2364 = vmatprep.mubr.f32.mxu0 0.0
        %2365 = vmatmul.mubr.f32.gmra.mrb[0].mxu0 %v1849
        %v2366 = vpop.f32.mrb[0].mxu0
        %v2367 = vadd.f32 %v2283, %v2366
        %v2368 = vpop.f32.mrb[0].mxu0
        %2369 = vmatprep.mubr.f32.mxu0 0.0
        %2370 = vmatmul.mubr.f32.gmra.mrb[0].mxu0 %v1952
        %v2371 = vpop.f32.mrb[0].mxu0
        %v2372 = vadd.f32 %v2283, %v2371
        %v2373 = vpop.f32.mrb[0].mxu0
        %2374 = vmatprep.mubr.f32.mxu0 0.0
        %2375 = vmatmul.mubr.f32.gmra.mrb[0].mxu0 %v2055
        %v2376 = vpop.f32.mrb[0].mxu0
        %v2377 = vadd.f32 %v2283, %v2376
        %v2378 = vpop.f32.mrb[0].mxu0
        %2379 = vmatprep.mubr.f32.mxu0 0.0
        %2380 = vmatmul.mubr.f32.gmra.mrb[0].mxu0 %v2158
        %v2381 = vpop.f32.mrb[0].mxu0
        %v2382 = vadd.f32 %v2283, %v2381
        %v2383 = vpop.f32.mrb[0].mxu0
        %2384 = vmatprep.mubr.f32.mxu0 0.0
        %2385 = vmatmul.mubr.f32.gmra.mrb[0].mxu0 %v2261
        %v2386 = vpop.f32.mrb[0].mxu0
        %v2387 = vadd.f32 %v2283, %v2386
        %v2388 = vpop.f32.mrb[0].mxu0
        %2389 = vdwg.mxu0
        %v2398 = vcombine.high %v2352, %v2352
        %v2399 = vcombine.high %v2357, %v2357
        %v2400 = vcombine.high %v2362, %v2362
        %v2401 = vcombine.high %v2367, %v2367
        %v2402 = vcombine.high %v2372, %v2372
        %v2403 = vcombine.high %v2377, %v2377
        %v2404 = vcombine.high %v2382, %v2382
        %v2405 = vcombine.high %v2387, %v2387
        %v2414 = vsel %vm1280, %v2352, -inf
        %v2415 = vrot.slane %v2414, 4
        %v2416 = vmax.f32 %v2414, %v2415
        %v2417 = vrot.slane %v2416, 2
        %v2418 = vmax.f32 %v2416, %v2417
        %v2419 = vrot.slane %v2418, 1
        %v2420 = vmax.f32 %v2418, %v2419
        %v2421 = vsel %vm1280, %v2398, -inf
        %v2422 = vrot.slane %v2421, 4
        %v2423 = vmax.f32 %v2421, %v2422
        %v2424 = vrot.slane %v2423, 2
        %v2425 = vmax.f32 %v2423, %v2424
        %v2426 = vrot.slane %v2425, 1
        %v2427 = vmax.f32 %v2425, %v2426
        %v2428 = vsel %vm1280, %v2357, -inf
        %v2429 = vrot.slane %v2428, 4
        %v2430 = vmax.f32 %v2428, %v2429
        %v2431 = vrot.slane %v2430, 2
        %v2432 = vmax.f32 %v2430, %v2431
        %v2433 = vrot.slane %v2432, 1
        %v2434 = vmax.f32 %v2432, %v2433
        %v2435 = vsel %vm1280, %v2399, -inf
        %v2436 = vrot.slane %v2435, 4
        %v2437 = vmax.f32 %v2435, %v2436
        %v2438 = vrot.slane %v2437, 2
        %v2439 = vmax.f32 %v2437, %v2438
        %v2440 = vrot.slane %v2439, 1
        %v2441 = vmax.f32 %v2439, %v2440
        %v2442 = vsel %vm1280, %v2362, -inf
        %v2443 = vrot.slane %v2442, 4
        %v2444 = vmax.f32 %v2442, %v2443
        %v2445 = vrot.slane %v2444, 2
        %v2446 = vmax.f32 %v2444, %v2445
        %v2447 = vrot.slane %v2446, 1
        %v2448 = vmax.f32 %v2446, %v2447
        %v2449 = vsel %vm1280, %v2400, -inf
        %v2450 = vrot.slane %v2449, 4
        %v2451 = vmax.f32 %v2449, %v2450
        %v2452 = vrot.slane %v2451, 2
        %v2453 = vmax.f32 %v2451, %v2452
        %v2454 = vrot.slane %v2453, 1
        %v2455 = vmax.f32 %v2453, %v2454
        %v2456 = vsel %vm1280, %v2367, -inf
        %v2457 = vrot.slane %v2456, 4
        %v2458 = vmax.f32 %v2456, %v2457
        %v2459 = vrot.slane %v2458, 2
        %v2460 = vmax.f32 %v2458, %v2459
        %v2461 = vrot.slane %v2460, 1
        %v2462 = vmax.f32 %v2460, %v2461
        %v2463 = vsel %vm1280, %v2401, -inf
        %v2464 = vrot.slane %v2463, 4
        %v2465 = vmax.f32 %v2463, %v2464
        %v2466 = vrot.slane %v2465, 2
        %v2467 = vmax.f32 %v2465, %v2466
        %v2468 = vrot.slane %v2467, 1
        %v2469 = vmax.f32 %v2467, %v2468
        %v2470 = vsel %vm1280, %v2372, -inf
        %v2471 = vrot.slane %v2470, 4
        %v2472 = vmax.f32 %v2470, %v2471
        %v2473 = vrot.slane %v2472, 2
        %v2474 = vmax.f32 %v2472, %v2473
        %v2475 = vrot.slane %v2474, 1
        %v2476 = vmax.f32 %v2474, %v2475
        %v2477 = vsel %vm1280, %v2402, -inf
        %v2478 = vrot.slane %v2477, 4
        %v2479 = vmax.f32 %v2477, %v2478
        %v2480 = vrot.slane %v2479, 2
        %v2481 = vmax.f32 %v2479, %v2480
        %v2482 = vrot.slane %v2481, 1
        %v2483 = vmax.f32 %v2481, %v2482
        %v2484 = vsel %vm1280, %v2377, -inf
        %v2485 = vrot.slane %v2484, 4
        %v2486 = vmax.f32 %v2484, %v2485
        %v2487 = vrot.slane %v2486, 2
        %v2488 = vmax.f32 %v2486, %v2487
        %v2489 = vrot.slane %v2488, 1
        %v2490 = vmax.f32 %v2488, %v2489
        %v2491 = vsel %vm1280, %v2403, -inf
        %v2492 = vrot.slane %v2491, 4
        %v2493 = vmax.f32 %v2491, %v2492
        %v2494 = vrot.slane %v2493, 2
        %v2495 = vmax.f32 %v2493, %v2494
        %v2496 = vrot.slane %v2495, 1
        %v2497 = vmax.f32 %v2495, %v2496
        %v2498 = vsel %vm1280, %v2382, -inf
        %v2499 = vrot.slane %v2498, 4
        %v2500 = vmax.f32 %v2498, %v2499
        %v2501 = vrot.slane %v2500, 2
        %v2502 = vmax.f32 %v2500, %v2501
        %v2503 = vrot.slane %v2502, 1
        %v2504 = vmax.f32 %v2502, %v2503
        %v2505 = vsel %vm1280, %v2404, -inf
        %v2506 = vrot.slane %v2505, 4
        %v2507 = vmax.f32 %v2505, %v2506
        %v2508 = vrot.slane %v2507, 2
        %v2509 = vmax.f32 %v2507, %v2508
        %v2510 = vrot.slane %v2509, 1
        %v2511 = vmax.f32 %v2509, %v2510
        %v2512 = vsel %vm1280, %v2387, -inf
        %v2513 = vrot.slane %v2512, 4
        %v2514 = vmax.f32 %v2512, %v2513
        %v2515 = vrot.slane %v2514, 2
        %v2516 = vmax.f32 %v2514, %v2515
        %v2517 = vrot.slane %v2516, 1
        %v2518 = vmax.f32 %v2516, %v2517
        %v2519 = vsel %vm1280, %v2405, -inf
        %v2520 = vrot.slane %v2519, 4
        %v2521 = vmax.f32 %v2519, %v2520
        %v2522 = vrot.slane %v2521, 2
        %v2523 = vmax.f32 %v2521, %v2522
        %v2524 = vrot.slane %v2523, 1
        %v2525 = vmax.f32 %v2523, %v2524
        %v2526 = vsub.f32 %v2420, 1.5707964
        %v2527 = vsub.f32 %v2427, 1.5707964
        %v2528 = vsub.f32 %v2434, 1.5707964
        %v2529 = vsub.f32 %v2441, 1.5707964
        %v2530 = vsub.f32 %v2448, 1.5707964
        %v2531 = vsub.f32 %v2455, 1.5707964
        %v2532 = vsub.f32 %v2462, 1.5707964
        %v2533 = vsub.f32 %v2469, 1.5707964
        %v2534 = vsub.f32 %v2476, 1.5707964
        %v2535 = vsub.f32 %v2483, 1.5707964
        %v2536 = vsub.f32 %v2490, 1.5707964
        %v2537 = vsub.f32 %v2497, 1.5707964
        %v2538 = vsub.f32 %v2504, 1.5707964
        %v2539 = vsub.f32 %v2511, 1.5707964
        %v2540 = vsub.f32 %v2518, 1.5707964
        %v2541 = vsub.f32 %v2525, 1.5707964
        %vm2558 = vcmask 1041409
        %v2559 = vsel %vm2558, %v2427, %v2420
        %vm2560 = vcmask 1042434
        %v2561 = vsel %vm2560, %v2434, %v2559
        %vm2562 = vcmask 1043459
        %v2563 = vsel %vm2562, %v2441, %v2561
        %vm2564 = vcmask 1044484
        %v2565 = vsel %vm2564, %v2448, %v2563
        %vm2566 = vcmask 1045509
        %v2567 = vsel %vm2566, %v2455, %v2565
        %vm2568 = vcmask 1046534
        %v2569 = vsel %vm2568, %v2462, %v2567
        %vm2570 = vcmask 1047559
        %v2571 = vsel %vm2570, %v2469, %v2569
        %v2572 = vsel %vm2558, %v2483, %v2476
        %v2573 = vsel %vm2560, %v2490, %v2572
        %v2574 = vsel %vm2562, %v2497, %v2573
        %v2575 = vsel %vm2564, %v2504, %v2574
        %v2576 = vsel %vm2566, %v2511, %v2575
        %v2577 = vsel %vm2568, %v2518, %v2576
        %v2578 = vsel %vm2570, %v2525, %v2577
        %v2597 = vsel %vm2558, %v2527, %v2526
        %v2598 = vsel %vm2560, %v2528, %v2597
        %v2599 = vsel %vm2562, %v2529, %v2598
        %v2600 = vsel %vm2564, %v2530, %v2599
        %v2601 = vsel %vm2566, %v2531, %v2600
        %v2602 = vsel %vm2568, %v2532, %v2601
        %v2603 = vsel %vm2570, %v2533, %v2602
        %v2604 = vsel %vm2558, %v2535, %v2534
        %v2605 = vsel %vm2560, %v2536, %v2604
        %v2606 = vsel %vm2562, %v2537, %v2605
        %v2607 = vsel %vm2564, %v2538, %v2606
        %v2608 = vsel %vm2566, %v2539, %v2607
        %v2609 = vsel %vm2568, %v2540, %v2608
        %v2610 = vsel %vm2570, %v2541, %v2609
        %v2613 = vand.u32 2147483647, %v2571
        %vm2614 = vcmp.le.f32.partialorder %v2613, 0.7853982
        %vm2615 = vcmp.lt.s32.totalorder %v2571, 0
        %v2616 = vand.u32 %v2571, 2139095040
        %v2617 = vshrl.u32 %v2616, 23
        %v2618 = vsub.s32 %v2617, 127
        %v2619 = vand.u32 2147483647, %v2571
        %v2620 = vand.u32 %v2619, 8388607
        %v2621 = vor.u32 %v2620, 8388608
        %v2622 = vsub.s32 0, %v2621
        %v2623 = vadd.s32 %v2618, 1
        %vm2624 = vcmp.gt.s32.totalorder %v2623, 0
        %v2625 = vsel %vm2624, %v2623, 0
        %v2626 = vshrl.u32 %v2625, 5
        %v2627 = vand.u32 %v2625, 31
        %v2628 = vsub.s32 32, %v2627
        %v2629 = vshrl.u32 683565275, %v2628
        %v2630 = vshll.u32 683565275, %v2627
        %v2631 = vshrl.u32 2475754826, %v2628
        %v2632 = vor.u32 %v2630, %v2631
        %v2633 = vshll.u32 2475754826, %v2627
        %v2634 = vshrl.u32 2131351028, %v2628
        %v2635 = vor.u32 %v2633, %v2634
        %v2636 = vshll.u32 2131351028, %v2627
        %v2637 = vshrl.u32 2102212464, %v2628
        %v2638 = vor.u32 %v2636, %v2637
        %v2639 = vshll.u32 2102212464, %v2627
        %v2640 = vshrl.u32 920167782, %v2628
        %v2641 = vor.u32 %v2639, %v2640
        %v2642 = vshll.u32 920167782, %v2627
        %v2643 = vshrl.u32 1326507024, %v2628
        %v2644 = vor.u32 %v2642, %v2643
        %vm2645 = vcmp.lt.s32.totalorder %v2626, 1
        %vm2646 = vcmp.lt.s32.totalorder %v2626, 2
        %vm2647 = vcmp.lt.s32.totalorder %v2626, 3
        %vm2648 = vcmp.lt.s32.totalorder %v2626, 4
        %v2649 = vsel %vm2645, %v2629, %v2632
        %v2650 = vsel %vm2648, %v2638, 2102212464
        %v2651 = vsel %vm2647, %v2635, %v2650
        %v2652 = vsel %vm2646, %v2649, %v2651
        %v2653 = vsel %vm2645, %v2632, %v2635
        %v2654 = vsel %vm2648, %v2641, 920167782
        %v2655 = vsel %vm2647, %v2638, %v2654
        %v2656 = vsel %vm2646, %v2653, %v2655
        %v2657 = vsel %vm2645, %v2635, %v2638
        %v2658 = vsel %vm2648, %v2644, 1326507024
        %v2659 = vsel %vm2647, %v2641, %v2658
        %v2660 = vsel %vm2646, %v2657, %v2659
        %v2661 = vshll.u32 %v2621, 8
        %v2662 = vmul.u32.u64.compose %v2661, %v2660
        %v2663 = vextract.low.u32 %v2662
        %v2664 = vextract.high.u32 %v2662
        %v2665 = vmul.u32.u64.compose %v2661, %v2656
        %v2666 = vextract.low.u32 %v2665
        %v2667 = vextract.high.u32 %v2665
        %v2668 = vmul.u32 %v2661, %v2652
        %v2669 = vadd.s32 %v2664, %v2666
        %vm2670 = vc.u32 %v2664, %v2666
        %v2671 = vadd.s32 %v2667, 1
        %v2672 = vsel %vm2670, %v2671, %v2667
        %v2673 = vadd.s32 %v2668, %v2672
        %v2674 = vadd.s32 %v2673, 536870912
        %v2675 = vshrl.u32 %v2674, 30
        %v2676 = vshll.u32 %v2675, 30
        %v2677 = vsub.s32 %v2673, %v2676
        %vm2678 = vcmp.lt.s32.totalorder %v2677, 0
        %v2679 = vsub.s32 0, %v2677
        %v2680 = vsel %vm2678, %v2679, %v2677
        %v2681 = vclz %v2680
        %v2682 = vsub.s32 %v2681, 2
        %vm2683 = vcmp.gt.s32.totalorder 0, %v2682
        %v2684 = vsel %vm2683, 0, %v2682
        %v2685 = vsub.s32 32, %v2684
        %v2686 = vshll.u32 %v2677, %v2684
        %v2687 = vshrl.u32 %v2669, %v2685
        %v2688 = vor.u32 %v2686, %v2687
        %v2689 = vsub.s32 4294967266, %v2684
        %v2690 = vadd.s32 %v2689, 127
        %v2691 = vshll.u32 %v2690, 23
        %v2692 = vor.u32 4788187, %v2691
        %v2693 = vand.u32 2147483647, %v2692
        %v2695 = vcvt.s32.f32 %v2688
        %v2696 = vmul.f32 %v2695, %v2693
        %v2697 = vxor.u32 %v2696, 2147483648
        %v2698 = vsel %vm2615, %v2697, %v2696
        %v2699 = vsub.s32 4, %v2675
        %v2700 = vsel %vm2615, %v2699, %v2675
        %v2701 = vsel %vm2614, %v2571, %v2698
        %v2702 = vsel %vm2614, 0, %v2700
        %v2703 = vcosq.f32.pop %v2701
        %v2704 = vsinq.f32.pop %v2701
        %vm2705 = vweird.f32 %v2571
        %v2706 = vand.u32 %v2702, 3
        %vm2707 = vcmp.lt.s32.totalorder %v2706, 2
        %vm2708 = vcmp.eq.s32.totalorder %v2706, 0
        %v2709 = vxor.u32 %v2704, 2147483648
        %v2710 = vsel %vm2708, %v2703, %v2709
        %vm2711 = vcmp.eq.s32.totalorder %v2706, 2
        %v2712 = vxor.u32 %v2703, 2147483648
        %v2713 = vsel %vm2711, %v2712, %v2704
        %v2714 = vsel %vm2707, %v2710, %v2713
        %v2715 = vsel %vm2705, nan, %v2714
        %v2716 = vand.u32 2147483647, %v2603
        %vm2717 = vcmp.le.f32.partialorder %v2716, 0.7853982
        %vm2718 = vcmp.lt.s32.totalorder %v2603, 0
        %v2719 = vand.u32 %v2603, 2139095040
        %v2720 = vshrl.u32 %v2719, 23
        %v2721 = vsub.s32 %v2720, 127
        %v2722 = vand.u32 2147483647, %v2603
        %v2723 = vand.u32 %v2722, 8388607
        %v2724 = vor.u32 %v2723, 8388608
        %v2725 = vsub.s32 0, %v2724
        %v2726 = vadd.s32 %v2721, 1
        %vm2727 = vcmp.gt.s32.totalorder %v2726, 0
        %v2728 = vsel %vm2727, %v2726, 0
        %v2729 = vshrl.u32 %v2728, 5
        %v2730 = vand.u32 %v2728, 31
        %v2731 = vsub.s32 32, %v2730
        %v2732 = vshrl.u32 683565275, %v2731
        %v2733 = vshll.u32 683565275, %v2730
        %v2734 = vshrl.u32 2475754826, %v2731
        %v2735 = vor.u32 %v2733, %v2734
        %v2736 = vshll.u32 2475754826, %v2730
        %v2737 = vshrl.u32 2131351028, %v2731
        %v2738 = vor.u32 %v2736, %v2737
        %v2739 = vshll.u32 2131351028, %v2730
        %v2740 = vshrl.u32 2102212464, %v2731
        %v2741 = vor.u32 %v2739, %v2740
        %v2742 = vshll.u32 2102212464, %v2730
        %v2743 = vshrl.u32 920167782, %v2731
        %v2744 = vor.u32 %v2742, %v2743
        %v2745 = vshll.u32 920167782, %v2730
        %v2746 = vshrl.u32 1326507024, %v2731
        %v2747 = vor.u32 %v2745, %v2746
        %vm2748 = vcmp.lt.s32.totalorder %v2729, 1
        %vm2749 = vcmp.lt.s32.totalorder %v2729, 2
        %vm2750 = vcmp.lt.s32.totalorder %v2729, 3
        %vm2751 = vcmp.lt.s32.totalorder %v2729, 4
        %v2752 = vsel %vm2748, %v2732, %v2735
        %v2753 = vsel %vm2751, %v2741, 2102212464
        %v2754 = vsel %vm2750, %v2738, %v2753
        %v2755 = vsel %vm2749, %v2752, %v2754
        %v2756 = vsel %vm2748, %v2735, %v2738
        %v2757 = vsel %vm2751, %v2744, 920167782
        %v2758 = vsel %vm2750, %v2741, %v2757
        %v2759 = vsel %vm2749, %v2756, %v2758
        %v2760 = vsel %vm2748, %v2738, %v2741
        %v2761 = vsel %vm2751, %v2747, 1326507024
        %v2762 = vsel %vm2750, %v2744, %v2761
        %v2763 = vsel %vm2749, %v2760, %v2762
        %v2764 = vshll.u32 %v2724, 8
        %v2765 = vmul.u32.u64.compose %v2764, %v2763
        %v2766 = vextract.low.u32 %v2765
        %v2767 = vextract.high.u32 %v2765
        %v2768 = vmul.u32.u64.compose %v2764, %v2759
        %v2769 = vextract.low.u32 %v2768
        %v2770 = vextract.high.u32 %v2768
        %v2771 = vmul.u32 %v2764, %v2755
        %v2772 = vadd.s32 %v2767, %v2769
        %vm2773 = vc.u32 %v2767, %v2769
        %v2774 = vadd.s32 %v2770, 1
        %v2775 = vsel %vm2773, %v2774, %v2770
        %v2776 = vadd.s32 %v2771, %v2775
        %v2777 = vadd.s32 %v2776, 536870912
        %v2778 = vshrl.u32 %v2777, 30
        %v2779 = vshll.u32 %v2778, 30
        %v2780 = vsub.s32 %v2776, %v2779
        %vm2781 = vcmp.lt.s32.totalorder %v2780, 0
        %v2782 = vsub.s32 0, %v2780
        %v2783 = vsel %vm2781, %v2782, %v2780
        %v2784 = vclz %v2783
        %v2785 = vsub.s32 %v2784, 2
        %vm2786 = vcmp.gt.s32.totalorder 0, %v2785
        %v2787 = vsel %vm2786, 0, %v2785
        %v2788 = vsub.s32 32, %v2787
        %v2789 = vshll.u32 %v2780, %v2787
        %v2790 = vshrl.u32 %v2772, %v2788
        %v2791 = vor.u32 %v2789, %v2790
        %v2792 = vsub.s32 4294967266, %v2787
        %v2793 = vadd.s32 %v2792, 127
        %v2794 = vshll.u32 %v2793, 23
        %v2795 = vor.u32 4788187, %v2794
        %v2796 = vand.u32 2147483647, %v2795
        %v2798 = vcvt.s32.f32 %v2791
        %v2799 = vmul.f32 %v2798, %v2796
        %v2800 = vxor.u32 %v2799, 2147483648
        %v2801 = vsel %vm2718, %v2800, %v2799
        %v2802 = vsub.s32 4, %v2778
        %v2803 = vsel %vm2718, %v2802, %v2778
        %v2804 = vsel %vm2717, %v2603, %v2801
        %v2805 = vsel %vm2717, 0, %v2803
        %v2806 = vcosq.f32.pop %v2804
        %v2807 = vsinq.f32.pop %v2804
        %vm2808 = vweird.f32 %v2603
        %v2809 = vand.u32 %v2805, 3
        %vm2810 = vcmp.lt.s32.totalorder %v2809, 2
        %vm2811 = vcmp.eq.s32.totalorder %v2809, 0
        %v2812 = vxor.u32 %v2807, 2147483648
        %v2813 = vsel %vm2811, %v2806, %v2812
        %vm2814 = vcmp.eq.s32.totalorder %v2809, 2
        %v2815 = vxor.u32 %v2806, 2147483648
        %v2816 = vsel %vm2814, %v2815, %v2807
        %v2817 = vsel %vm2810, %v2813, %v2816
        %v2818 = vsel %vm2808, nan, %v2817
        %v2819 = vand.u32 2147483647, %v2578
        %vm2820 = vcmp.le.f32.partialorder %v2819, 0.7853982
        %vm2821 = vcmp.lt.s32.totalorder %v2578, 0
        %v2822 = vand.u32 %v2578, 2139095040
        %v2823 = vshrl.u32 %v2822, 23
        %v2824 = vsub.s32 %v2823, 127
        %v2825 = vand.u32 2147483647, %v2578
        %v2826 = vand.u32 %v2825, 8388607
        %v2827 = vor.u32 %v2826, 8388608
        %v2828 = vsub.s32 0, %v2827
        %v2829 = vadd.s32 %v2824, 1
        %vm2830 = vcmp.gt.s32.totalorder %v2829, 0
        %v2831 = vsel %vm2830, %v2829, 0
        %v2832 = vshrl.u32 %v2831, 5
        %v2833 = vand.u32 %v2831, 31
        %v2834 = vsub.s32 32, %v2833
        %v2835 = vshrl.u32 683565275, %v2834
        %v2836 = vshll.u32 683565275, %v2833
        %v2837 = vshrl.u32 2475754826, %v2834
        %v2838 = vor.u32 %v2836, %v2837
        %v2839 = vshll.u32 2475754826, %v2833
        %v2840 = vshrl.u32 2131351028, %v2834
        %v2841 = vor.u32 %v2839, %v2840
        %v2842 = vshll.u32 2131351028, %v2833
        %v2843 = vshrl.u32 2102212464, %v2834
        %v2844 = vor.u32 %v2842, %v2843
        %v2845 = vshll.u32 2102212464, %v2833
        %v2846 = vshrl.u32 920167782, %v2834
        %v2847 = vor.u32 %v2845, %v2846
        %v2848 = vshll.u32 920167782, %v2833
        %v2849 = vshrl.u32 1326507024, %v2834
        %v2850 = vor.u32 %v2848, %v2849
        %vm2851 = vcmp.lt.s32.totalorder %v2832, 1
        %vm2852 = vcmp.lt.s32.totalorder %v2832, 2
        %vm2853 = vcmp.lt.s32.totalorder %v2832, 3
        %vm2854 = vcmp.lt.s32.totalorder %v2832, 4
        %v2855 = vsel %vm2851, %v2835, %v2838
        %v2856 = vsel %vm2854, %v2844, 2102212464
        %v2857 = vsel %vm2853, %v2841, %v2856
        %v2858 = vsel %vm2852, %v2855, %v2857
        %v2859 = vsel %vm2851, %v2838, %v2841
        %v2860 = vsel %vm2854, %v2847, 920167782
        %v2861 = vsel %vm2853, %v2844, %v2860
        %v2862 = vsel %vm2852, %v2859, %v2861
        %v2863 = vsel %vm2851, %v2841, %v2844
        %v2864 = vsel %vm2854, %v2850, 1326507024
        %v2865 = vsel %vm2853, %v2847, %v2864
        %v2866 = vsel %vm2852, %v2863, %v2865
        %v2867 = vshll.u32 %v2827, 8
        %v2868 = vmul.u32.u64.compose %v2867, %v2866
        %v2869 = vextract.low.u32 %v2868
        %v2870 = vextract.high.u32 %v2868
        %v2871 = vmul.u32.u64.compose %v2867, %v2862
        %v2872 = vextract.low.u32 %v2871
        %v2873 = vextract.high.u32 %v2871
        %v2874 = vmul.u32 %v2867, %v2858
        %v2875 = vadd.s32 %v2870, %v2872
        %vm2876 = vc.u32 %v2870, %v2872
        %v2877 = vadd.s32 %v2873, 1
        %v2878 = vsel %vm2876, %v2877, %v2873
        %v2879 = vadd.s32 %v2874, %v2878
        %v2880 = vadd.s32 %v2879, 536870912
        %v2881 = vshrl.u32 %v2880, 30
        %v2882 = vshll.u32 %v2881, 30
        %v2883 = vsub.s32 %v2879, %v2882
        %vm2884 = vcmp.lt.s32.totalorder %v2883, 0
        %v2885 = vsub.s32 0, %v2883
        %v2886 = vsel %vm2884, %v2885, %v2883
        %v2887 = vclz %v2886
        %v2888 = vsub.s32 %v2887, 2
        %vm2889 = vcmp.gt.s32.totalorder 0, %v2888
        %v2890 = vsel %vm2889, 0, %v2888
        %v2891 = vsub.s32 32, %v2890
        %v2892 = vshll.u32 %v2883, %v2890
        %v2893 = vshrl.u32 %v2875, %v2891
        %v2894 = vor.u32 %v2892, %v2893
        %v2895 = vsub.s32 4294967266, %v2890
        %v2896 = vadd.s32 %v2895, 127
        %v2897 = vshll.u32 %v2896, 23
        %v2898 = vor.u32 4788187, %v2897
        %v2899 = vand.u32 2147483647, %v2898
        %v2901 = vcvt.s32.f32 %v2894
        %v2902 = vmul.f32 %v2901, %v2899
        %v2903 = vxor.u32 %v2902, 2147483648
        %v2904 = vsel %vm2821, %v2903, %v2902
        %v2905 = vsub.s32 4, %v2881
        %v2906 = vsel %vm2821, %v2905, %v2881
        %v2907 = vsel %vm2820, %v2578, %v2904
        %v2908 = vsel %vm2820, 0, %v2906
        %v2909 = vcosq.f32.pop %v2907
        %v2910 = vsinq.f32.pop %v2907
        %vm2911 = vweird.f32 %v2578
        %v2912 = vand.u32 %v2908, 3
        %vm2913 = vcmp.lt.s32.totalorder %v2912, 2
        %vm2914 = vcmp.eq.s32.totalorder %v2912, 0
        %v2915 = vxor.u32 %v2910, 2147483648
        %v2916 = vsel %vm2914, %v2909, %v2915
        %vm2917 = vcmp.eq.s32.totalorder %v2912, 2
        %v2918 = vxor.u32 %v2909, 2147483648
        %v2919 = vsel %vm2917, %v2918, %v2910
        %v2920 = vsel %vm2913, %v2916, %v2919
        %v2921 = vsel %vm2911, nan, %v2920
        %v2922 = vand.u32 2147483647, %v2610
        %vm2923 = vcmp.le.f32.partialorder %v2922, 0.7853982
        %vm2924 = vcmp.lt.s32.totalorder %v2610, 0
        %v2925 = vand.u32 %v2610, 2139095040
        %v2926 = vshrl.u32 %v2925, 23
        %v2927 = vsub.s32 %v2926, 127
        %v2928 = vand.u32 2147483647, %v2610
        %v2929 = vand.u32 %v2928, 8388607
        %v2930 = vor.u32 %v2929, 8388608
        %v2931 = vsub.s32 0, %v2930
        %v2932 = vadd.s32 %v2927, 1
        %vm2933 = vcmp.gt.s32.totalorder %v2932, 0
        %v2934 = vsel %vm2933, %v2932, 0
        %v2935 = vshrl.u32 %v2934, 5
        %v2936 = vand.u32 %v2934, 31
        %v2937 = vsub.s32 32, %v2936
        %v2938 = vshrl.u32 683565275, %v2937
        %v2939 = vshll.u32 683565275, %v2936
        %v2940 = vshrl.u32 2475754826, %v2937
        %v2941 = vor.u32 %v2939, %v2940
        %v2942 = vshll.u32 2475754826, %v2936
        %v2943 = vshrl.u32 2131351028, %v2937
        %v2944 = vor.u32 %v2942, %v2943
        %v2945 = vshll.u32 2131351028, %v2936
        %v2946 = vshrl.u32 2102212464, %v2937
        %v2947 = vor.u32 %v2945, %v2946
        %v2948 = vshll.u32 2102212464, %v2936
        %v2949 = vshrl.u32 920167782, %v2937
        %v2950 = vor.u32 %v2948, %v2949
        %v2951 = vshll.u32 920167782, %v2936
        %v2952 = vshrl.u32 1326507024, %v2937
        %v2953 = vor.u32 %v2951, %v2952
        %vm2954 = vcmp.lt.s32.totalorder %v2935, 1
        %vm2955 = vcmp.lt.s32.totalorder %v2935, 2
        %vm2956 = vcmp.lt.s32.totalorder %v2935, 3
        %vm2957 = vcmp.lt.s32.totalorder %v2935, 4
        %v2958 = vsel %vm2954, %v2938, %v2941
        %v2959 = vsel %vm2957, %v2947, 2102212464
        %v2960 = vsel %vm2956, %v2944, %v2959
        %v2961 = vsel %vm2955, %v2958, %v2960
        %v2962 = vsel %vm2954, %v2941, %v2944
        %v2963 = vsel %vm2957, %v2950, 920167782
        %v2964 = vsel %vm2956, %v2947, %v2963
        %v2965 = vsel %vm2955, %v2962, %v2964
        %v2966 = vsel %vm2954, %v2944, %v2947
        %v2967 = vsel %vm2957, %v2953, 1326507024
        %v2968 = vsel %vm2956, %v2950, %v2967
        %v2969 = vsel %vm2955, %v2966, %v2968
        %v2970 = vshll.u32 %v2930, 8
        %v2971 = vmul.u32.u64.compose %v2970, %v2969
        %v2972 = vextract.low.u32 %v2971
        %v2973 = vextract.high.u32 %v2971
        %v2974 = vmul.u32.u64.compose %v2970, %v2965
        %v2975 = vextract.low.u32 %v2974
        %v2976 = vextract.high.u32 %v2974
        %v2977 = vmul.u32 %v2970, %v2961
        %v2978 = vadd.s32 %v2973, %v2975
        %vm2979 = vc.u32 %v2973, %v2975
        %v2980 = vadd.s32 %v2976, 1
        %v2981 = vsel %vm2979, %v2980, %v2976
        %v2982 = vadd.s32 %v2977, %v2981
        %v2983 = vadd.s32 %v2982, 536870912
        %v2984 = vshrl.u32 %v2983, 30
        %v2985 = vshll.u32 %v2984, 30
        %v2986 = vsub.s32 %v2982, %v2985
        %vm2987 = vcmp.lt.s32.totalorder %v2986, 0
        %v2988 = vsub.s32 0, %v2986
        %v2989 = vsel %vm2987, %v2988, %v2986
        %v2990 = vclz %v2989
        %v2991 = vsub.s32 %v2990, 2
        %vm2992 = vcmp.gt.s32.totalorder 0, %v2991
        %v2993 = vsel %vm2992, 0, %v2991
        %v2994 = vsub.s32 32, %v2993
        %v2995 = vshll.u32 %v2986, %v2993
        %v2996 = vshrl.u32 %v2978, %v2994
        %v2997 = vor.u32 %v2995, %v2996
        %v2998 = vsub.s32 4294967266, %v2993
        %v2999 = vadd.s32 %v2998, 127
        %v3000 = vshll.u32 %v2999, 23
        %v3001 = vor.u32 4788187, %v3000
        %v3002 = vand.u32 2147483647, %v3001
        %v3004 = vcvt.s32.f32 %v2997
        %v3005 = vmul.f32 %v3004, %v3002
        %v3006 = vxor.u32 %v3005, 2147483648
        %v3007 = vsel %vm2924, %v3006, %v3005
        %v3008 = vsub.s32 4, %v2984
        %v3009 = vsel %vm2924, %v3008, %v2984
        %v3010 = vsel %vm2923, %v2610, %v3007
        %v3011 = vsel %vm2923, 0, %v3009
        %v3012 = vcosq.f32.pop %v3010
        %v3013 = vsinq.f32.pop %v3010
        %vm3014 = vweird.f32 %v2610
        %v3015 = vand.u32 %v3011, 3
        %vm3016 = vcmp.lt.s32.totalorder %v3015, 2
        %vm3017 = vcmp.eq.s32.totalorder %v3015, 0
        %v3018 = vxor.u32 %v3013, 2147483648
        %v3019 = vsel %vm3017, %v3012, %v3018
        %vm3020 = vcmp.eq.s32.totalorder %v3015, 2
        %v3021 = vxor.u32 %v3012, 2147483648
        %v3022 = vsel %vm3020, %v3021, %v3013
        %v3023 = vsel %vm3016, %v3019, %v3022
        %v3024 = vsel %vm3014, nan, %v3023
        %v3025 = vld [vmem:[%s5] sm:$0xff]
        %v3026 = vld [vmem:[%s5 + $0x8] sm:$0xff]
        %v3027 = vld [vmem:[%s5 + $0x10] sm:$0xff]
        %v3028 = vld [vmem:[%s5 + $0x18] sm:$0xff]
        %v3029 = vld [vmem:[%s5 + $0x20] sm:$0xff]
        %v3030 = vld [vmem:[%s5 + $0x28] sm:$0xff]
        %v3031 = vld [vmem:[%s5 + $0x30] sm:$0xff]
        %v3032 = vld [vmem:[%s5 + $0x38] sm:$0xff]
        %v3033 = vld [vmem:[%s5 + $0x40] sm:$0xff]
        %v3034 = vld [vmem:[%s5 + $0x48] sm:$0xff]
        %v3035 = vld [vmem:[%s5 + $0x50] sm:$0xff]
        %v3036 = vld [vmem:[%s5 + $0x58] sm:$0xff]
        %v3037 = vld [vmem:[%s5 + $0x60] sm:$0xff]
        %v3038 = vld [vmem:[%s5 + $0x68] sm:$0xff]
        %v3039 = vld [vmem:[%s5 + $0x70] sm:$0xff]
        %v3040 = vld [vmem:[%s5 + $0x78] sm:$0xff]
        %v3041 = vld [vmem:[%s5 + $0x80] sm:$0xff]
        %v3042 = vld [vmem:[%s5 + $0x88] sm:$0xff]
        %v3043 = vld [vmem:[%s5 + $0x90] sm:$0xff]
        %v3044 = vld [vmem:[%s5 + $0x98] sm:$0xff]
        %v3045 = vld [vmem:[%s5 + $0xa0] sm:$0xff]
        %v3046 = vld [vmem:[%s5 + $0xa8] sm:$0xff]
        %v3047 = vld [vmem:[%s5 + $0xb0] sm:$0xff]
        %v3048 = vld [vmem:[%s5 + $0xb8] sm:$0xff]
        %v3049 = vld [vmem:[%s5 + $0xc0] sm:$0xff]
        %v3050 = vld [vmem:[%s5 + $0xc8] sm:$0xff]
        %v3051 = vld [vmem:[%s5 + $0xd0] sm:$0xff]
        %v3052 = vld [vmem:[%s5 + $0xd8] sm:$0xff]
        %v3053 = vld [vmem:[%s5 + $0xe0] sm:$0xff]
        %v3054 = vld [vmem:[%s5 + $0xe8] sm:$0xff]
        %v3055 = vld [vmem:[%s5 + $0xf0] sm:$0xff]
        %v3056 = vld [vmem:[%s5 + $0xf8] sm:$0xff]
        %v3057 = vld [vmem:[%s6] sm:$0x1]
        %v3059 = vlaneseq
        %v3060 = vshrl.u32 %v3059, 7
        %v3061 = vsub.s32 0, %v3060
        %v3062 = vrot.slane %v3057, %v3061
        %3064 = vmatprep.subr.mxu0 0.0
        %3065 = vmatpush1.msra.mxu0 %v3025
        %3066 = vmatprep.subr.mxu0 0.0
        %3067 = vmatpush1.msra.mxu0 %v3026
        %3068 = vmatprep.subr.mxu0 0.0
        %3069 = vmatpush1.msra.mxu0 %v3027
        %3070 = vmatprep.subr.mxu0 0.0
        %3071 = vmatpush1.msra.mxu0 %v3028
        %3072 = vmatprep.subr.mxu0 0.0
        %3073 = vmatpush1.msra.mxu0 %v3029
        %3074 = vmatprep.subr.mxu0 0.0
        %3075 = vmatpush1.msra.mxu0 %v3030
        %3076 = vmatprep.subr.mxu0 0.0
        %3077 = vmatpush1.msra.mxu0 %v3031
        %3078 = vmatprep.subr.mxu0 0.0
        %3079 = vmatpush1.msra.mxu0 %v3032
        %3080 = vmatprep.subr.mxu0 0.0
        %3081 = vmatpush1.msra.mxu0 %v3033
        %3082 = vmatprep.subr.mxu0 0.0
        %3083 = vmatpush1.msra.mxu0 %v3034
        %3084 = vmatprep.subr.mxu0 0.0
        %3085 = vmatpush1.msra.mxu0 %v3035
        %3086 = vmatprep.subr.mxu0 0.0
        %3087 = vmatpush1.msra.mxu0 %v3036
        %3088 = vmatprep.subr.mxu0 0.0
        %3089 = vmatpush1.msra.mxu0 %v3037
        %3090 = vmatprep.subr.mxu0 0.0
        %3091 = vmatpush1.msra.mxu0 %v3038
        %3092 = vmatprep.subr.mxu0 0.0
        %3093 = vmatpush1.msra.mxu0 %v3039
        %3094 = vmatprep.subr.mxu0 0.0
        %3095 = vmatpush1.msra.mxu0 %v3040
        %3096 = vmatprep.subr.mxu0 0.0
        %3097 = vmatpush1.msra.mxu0 %v3041
        %3098 = vmatprep.subr.mxu0 0.0
        %3099 = vmatpush1.msra.mxu0 %v3042
        %3100 = vmatprep.subr.mxu0 0.0
        %3101 = vmatpush1.msra.mxu0 %v3043
        %3102 = vmatprep.subr.mxu0 0.0
        %3103 = vmatpush1.msra.mxu0 %v3044
        %3104 = vmatprep.subr.mxu0 0.0
        %3105 = vmatpush1.msra.mxu0 %v3045
        %3106 = vmatprep.subr.mxu0 0.0
        %3107 = vmatpush1.msra.mxu0 %v3046
        %3108 = vmatprep.subr.mxu0 0.0
        %3109 = vmatpush1.msra.mxu0 %v3047
        %3110 = vmatprep.subr.mxu0 0.0
        %3111 = vmatpush1.msra.mxu0 %v3048
        %3112 = vmatprep.subr.mxu0 0.0
        %3113 = vmatpush1.msra.mxu0 %v3049
        %3114 = vmatprep.subr.mxu0 0.0
        %3115 = vmatpush1.msra.mxu0 %v3050
        %3116 = vmatprep.subr.mxu0 0.0
        %3117 = vmatpush1.msra.mxu0 %v3051
        %3118 = vmatprep.subr.mxu0 0.0
        %3119 = vmatpush1.msra.mxu0 %v3052
        %3120 = vmatprep.subr.mxu0 0.0
        %3121 = vmatpush1.msra.mxu0 %v3053
        %3122 = vmatprep.subr.mxu0 0.0
        %3123 = vmatpush1.msra.mxu0 %v3054
        %3124 = vmatprep.subr.mxu0 0.0
        %3125 = vmatpush1.msra.mxu0 %v3055
        %3126 = vmatprep.subr.mxu0 0.0
        %3127 = vmatpush1.msra.mxu0 %v3056
        %3128 = vmatprep.mubr.f32.mxu0 %v2818
        %3129 = vmatmul.mubr.f32.gmra.mrb[0].mxu0 %v2715
        %v3130 = vpop.f32.mrb[0].mxu0
        %v3131 = vadd.f32 %v3062, %v3130
        %v3132 = vpop.f32.mrb[0].mxu0
        %3133 = vmatprep.mubr.f32.mxu0 %v3024
        %3134 = vmatmul.mubr.f32.gmra.mrb[0].mxu0 %v2921
        %v3135 = vpop.f32.mrb[0].mxu0
        %v3136 = vadd.f32 %v3062, %v3135
        %v3137 = vpop.f32.mrb[0].mxu0
        %3138 = vdwg.mxu0
        %v3139 = vld [vmem:[#allocation2] sm:$0x1]
        %vm3140 = vcmask 261120
        %v3141 = vsel %vm3140, %v3131, -inf
        %v3142 = vsel %vm3140, %v3136, -inf
        %v3143 = vmax.f32 %v3141, %v3142
        %v3144 = vrot.slane %v3143, 4
        %v3145 = vmax.f32 %v3143, %v3144
        %v3146 = vrot.slane %v3145, 2
        %v3147 = vmax.f32 %v3145, %v3146
        %v3148 = vrot.slane %v3147, 1
        %v3149 = vmax.f32 %v3147, %v3148
        %v3150 = vmax.f32 %v3139, %v3149
        %vm3151 = vcmask 253952
        %3152 = vst.msk [vmem:[#allocation2] sm:$0x1] %vm3151, %v3150
        %v3153 = vld [vmem:[#allocation3] sm:$0x1]
        %v3154 = vsel %vm3140, %v3131, 0.0
        %v3155 = vsel %vm3140, %v3136, 0.0
        %v3156 = vadd.f32 %v3154, %v3155
        %v3157 = vrot.slane %v3156, 4
        %v3158 = vadd.f32 %v3156, %v3157
        %v3159 = vrot.slane %v3158, 2
        %v3160 = vadd.f32 %v3158, %v3159
        %v3161 = vrot.slane %v3160, 1
        %v3162 = vadd.f32 %v3160, %v3161
        %v3163 = vadd.f32 %v3153, %v3162
        %3164 = vst.msk [vmem:[#allocation3] sm:$0x1] %vm3151, %v3163
        // Predicated region
        $region61: #{tpu_custom_call.1} parent=55 // pred_check
          %p3165 = pneg %p358
        $region62: #{tpu_custom_call.1} parent=55 // pred_check_branch
          %3167 = sbr.rel (%p3165) target = $region64
        $region63: #{tpu_custom_call.1} parent=55 // pred_region
          %v3168 = vld [vmem:[#allocation2] sm:$0x1]
          %v3169 = vld [vmem:[#allocation3] sm:$0x1]
          %v3170 = vmul.f32 %v3169, 0.0625
          %v3172 = vlaneseq
          %v3173 = vshrl.u32 %v3172, 7
          %v3174 = vsub.s32 0, %v3173
          %v3175 = vrot.slane %v3170, %v3174
          %3176 = vrot.lane.b32.xlu0 %v3175, 32
          %v3177 = vpop.permute.xlu0 %3176
          %v3179 = vsel %vm3140, %v3168, %v3177
          %v3180 = vsub.f32 %v3179, 1.5707964
          %3182 = vrot.lane.b32.xlu0 %v3180, 64
          %v3183 = vpop.permute.xlu0 %3182
          %v3185 = vsel %vm1429, %v3179, %v3183
          %v3186 = vand.u32 2147483647, %v3185
          %vm3187 = vcmp.le.f32.partialorder %v3186, 0.7853982
          %vm3188 = vcmp.lt.s32.totalorder %v3185, 0
          %v3189 = vand.u32 %v3185, 2139095040
          %v3190 = vshrl.u32 %v3189, 23
          %v3191 = vsub.s32 %v3190, 127
          %v3192 = vand.u32 2147483647, %v3185
          %v3193 = vand.u32 %v3192, 8388607
          %v3194 = vor.u32 %v3193, 8388608
          %v3195 = vsub.s32 0, %v3194
          %v3196 = vadd.s32 %v3191, 1
          %vm3197 = vcmp.gt.s32.totalorder %v3196, 0
          %v3198 = vsel %vm3197, %v3196, 0
          %v3199 = vshrl.u32 %v3198, 5
          %v3200 = vand.u32 %v3198, 31
          %v3201 = vsub.s32 32, %v3200
          %v3202 = vshrl.u32 683565275, %v3201
          %v3203 = vshll.u32 683565275, %v3200
          %v3204 = vshrl.u32 2475754826, %v3201
          %v3205 = vor.u32 %v3203, %v3204
          %v3206 = vshll.u32 2475754826, %v3200
          %v3207 = vshrl.u32 2131351028, %v3201
          %v3208 = vor.u32 %v3206, %v3207
          %v3209 = vshll.u32 2131351028, %v3200
          %v3210 = vshrl.u32 2102212464, %v3201
          %v3211 = vor.u32 %v3209, %v3210
          %v3212 = vshll.u32 2102212464, %v3200
          %v3213 = vshrl.u32 920167782, %v3201
          %v3214 = vor.u32 %v3212, %v3213
          %v3215 = vshll.u32 920167782, %v3200
          %v3216 = vshrl.u32 1326507024, %v3201
          %v3217 = vor.u32 %v3215, %v3216
          %vm3218 = vcmp.lt.s32.totalorder %v3199, 1
          %vm3219 = vcmp.lt.s32.totalorder %v3199, 2
          %vm3220 = vcmp.lt.s32.totalorder %v3199, 3
          %vm3221 = vcmp.lt.s32.totalorder %v3199, 4
          %v3222 = vsel %vm3218, %v3202, %v3205
          %v3223 = vsel %vm3221, %v3211, 2102212464
          %v3224 = vsel %vm3220, %v3208, %v3223
          %v3225 = vsel %vm3219, %v3222, %v3224
          %v3226 = vsel %vm3218, %v3205, %v3208
          %v3227 = vsel %vm3221, %v3214, 920167782
          %v3228 = vsel %vm3220, %v3211, %v3227
          %v3229 = vsel %vm3219, %v3226, %v3228
          %v3230 = vsel %vm3218, %v3208, %v3211
          %v3231 = vsel %vm3221, %v3217, 1326507024
          %v3232 = vsel %vm3220, %v3214, %v3231
          %v3233 = vsel %vm3219, %v3230, %v3232
          %v3234 = vshll.u32 %v3194, 8
          %v3235 = vmul.u32.u64.compose %v3234, %v3233
          %v3236 = vextract.low.u32 %v3235
          %v3237 = vextract.high.u32 %v3235
          %v3238 = vmul.u32.u64.compose %v3234, %v3229
          %v3239 = vextract.low.u32 %v3238
          %v3240 = vextract.high.u32 %v3238
          %v3241 = vmul.u32 %v3234, %v3225
          %v3242 = vadd.s32 %v3237, %v3239
          %vm3243 = vc.u32 %v3237, %v3239
          %v3244 = vadd.s32 %v3240, 1
          %v3245 = vsel %vm3243, %v3244, %v3240
          %v3246 = vadd.s32 %v3241, %v3245
          %v3247 = vadd.s32 %v3246, 536870912
          %v3248 = vshrl.u32 %v3247, 30
          %v3249 = vshll.u32 %v3248, 30
          %v3250 = vsub.s32 %v3246, %v3249
          %vm3251 = vcmp.lt.s32.totalorder %v3250, 0
          %v3252 = vsub.s32 0, %v3250
          %v3253 = vsel %vm3251, %v3252, %v3250
          %v3254 = vclz %v3253
          %v3255 = vsub.s32 %v3254, 2
          %vm3256 = vcmp.gt.s32.totalorder 0, %v3255
          %v3257 = vsel %vm3256, 0, %v3255
          %v3258 = vsub.s32 32, %v3257
          %v3259 = vshll.u32 %v3250, %v3257
          %v3260 = vshrl.u32 %v3242, %v3258
          %v3261 = vor.u32 %v3259, %v3260
          %v3262 = vsub.s32 4294967266, %v3257
          %v3263 = vadd.s32 %v3262, 127
          %v3264 = vshll.u32 %v3263, 23
          %v3265 = vor.u32 4788187, %v3264
          %v3266 = vand.u32 2147483647, %v3265
          %v3268 = vcvt.s32.f32 %v3261
          %v3269 = vmul.f32 %v3268, %v3266
          %v3270 = vxor.u32 %v3269, 2147483648
          %v3271 = vsel %vm3188, %v3270, %v3269
          %v3272 = vsub.s32 4, %v3248
          %v3273 = vsel %vm3188, %v3272, %v3248
          %v3274 = vsel %vm3187, %v3185, %v3271
          %v3275 = vsel %vm3187, 0, %v3273
          %v3276 = vcosq.f32.pop %v3274
          %v3277 = vsinq.f32.pop %v3274
          %vm3278 = vweird.f32 %v3185
          %v3279 = vand.u32 %v3275, 3
          %vm3280 = vcmp.lt.s32.totalorder %v3279, 2
          %vm3281 = vcmp.eq.s32.totalorder %v3279, 0
          %v3282 = vxor.u32 %v3277, 2147483648
          %v3283 = vsel %vm3281, %v3276, %v3282
          %vm3284 = vcmp.eq.s32.totalorder %v3279, 2
          %v3285 = vxor.u32 %v3276, 2147483648
          %v3286 = vsel %vm3284, %v3285, %v3277
          %v3287 = vsel %vm3280, %v3283, %v3286
          %v3288 = vsel %vm3278, nan, %v3287
          %v3289 = vld [vmem:[%s7] sm:$0xff]
          %v3290 = vld [vmem:[%s7 + $0x8] sm:$0xff]
          %v3291 = vld [vmem:[%s7 + $0x10] sm:$0xff]
          %v3292 = vld [vmem:[%s7 + $0x18] sm:$0xff]
          %v3293 = vld [vmem:[%s7 + $0x20] sm:$0xff]
          %v3294 = vld [vmem:[%s7 + $0x28] sm:$0xff]
          %v3295 = vld [vmem:[%s7 + $0x30] sm:$0xff]
          %v3296 = vld [vmem:[%s7 + $0x38] sm:$0xff]
          %v3297 = vld [vmem:[%s7 + $0x40] sm:$0xff]
          %v3298 = vld [vmem:[%s7 + $0x48] sm:$0xff]
          %v3299 = vld [vmem:[%s7 + $0x50] sm:$0xff]
          %v3300 = vld [vmem:[%s7 + $0x58] sm:$0xff]
          %v3301 = vld [vmem:[%s7 + $0x60] sm:$0xff]
          %v3302 = vld [vmem:[%s7 + $0x68] sm:$0xff]
          %v3303 = vld [vmem:[%s7 + $0x70] sm:$0xff]
          %v3304 = vld [vmem:[%s7 + $0x78] sm:$0xff]
          %v3305 = vld [vmem:[%s8] sm:$0x1]
          %3306 = vmatprep.subr.mxu0 0.0
          %3307 = vmatpush1.msra.mxu0 %v3289
          %3308 = vmatprep.subr.mxu0 0.0
          %3309 = vmatpush1.msra.mxu0 %v3290
          %3310 = vmatprep.subr.mxu0 0.0
          %3311 = vmatpush1.msra.mxu0 %v3291
          %3312 = vmatprep.subr.mxu0 0.0
          %3313 = vmatpush1.msra.mxu0 %v3292
          %3314 = vmatprep.subr.mxu0 0.0
          %3315 = vmatpush1.msra.mxu0 %v3293
          %3316 = vmatprep.subr.mxu0 0.0
          %3317 = vmatpush1.msra.mxu0 %v3294
          %3318 = vmatprep.subr.mxu0 0.0
          %3319 = vmatpush1.msra.mxu0 %v3295
          %3320 = vmatprep.subr.mxu0 0.0
          %3321 = vmatpush1.msra.mxu0 %v3296
          %3322 = vmatprep.subr.mxu0 0.0
          %3323 = vmatpush1.msra.mxu0 %v3297
          %3324 = vmatprep.subr.mxu0 0.0
          %3325 = vmatpush1.msra.mxu0 %v3298
          %3326 = vmatprep.subr.mxu0 0.0
          %3327 = vmatpush1.msra.mxu0 %v3299
          %3328 = vmatprep.subr.mxu0 0.0
          %3329 = vmatpush1.msra.mxu0 %v3300
          %3330 = vmatprep.subr.mxu0 0.0
          %3331 = vmatpush1.msra.mxu0 %v3301
          %3332 = vmatprep.subr.mxu0 0.0
          %3333 = vmatpush1.msra.mxu0 %v3302
          %3334 = vmatprep.subr.mxu0 0.0
          %3335 = vmatpush1.msra.mxu0 %v3303
          %3336 = vmatprep.subr.mxu0 0.0
          %3337 = vmatpush1.msra.mxu0 %v3304
          %3338 = vmatprep.subr.mxu0 0.0
          %3339 = vmatpush1.msra.mxu0 0.0
          %3340 = vmatprep.subr.mxu0 0.0
          %3341 = vmatpush1.msra.mxu0 0.0
          %3342 = vmatprep.subr.mxu0 0.0
          %3343 = vmatpush1.msra.mxu0 0.0
          %3344 = vmatprep.subr.mxu0 0.0
          %3345 = vmatpush1.msra.mxu0 0.0
          %3346 = vmatprep.subr.mxu0 0.0
          %3347 = vmatpush1.msra.mxu0 0.0
          %3348 = vmatprep.subr.mxu0 0.0
          %3349 = vmatpush1.msra.mxu0 0.0
          %3350 = vmatprep.subr.mxu0 0.0
          %3351 = vmatpush1.msra.mxu0 0.0
          %3352 = vmatprep.subr.mxu0 0.0
          %3353 = vmatpush1.msra.mxu0 0.0
          %3354 = vmatprep.subr.mxu0 0.0
          %3355 = vmatpush1.msra.mxu0 0.0
          %3356 = vmatprep.subr.mxu0 0.0
          %3357 = vmatpush1.msra.mxu0 0.0
          %3358 = vmatprep.subr.mxu0 0.0
          %3359 = vmatpush1.msra.mxu0 0.0
          %3360 = vmatprep.subr.mxu0 0.0
          %3361 = vmatpush1.msra.mxu0 0.0
          %3362 = vmatprep.subr.mxu0 0.0
          %3363 = vmatpush1.msra.mxu0 0.0
          %3364 = vmatprep.subr.mxu0 0.0
          %3365 = vmatpush1.msra.mxu0 0.0
          %3366 = vmatprep.subr.mxu0 0.0
          %3367 = vmatpush1.msra.mxu0 0.0
          %3368 = vmatprep.subr.mxu0 0.0
          %3369 = vmatpush1.msra.mxu0 0.0
          %3370 = vmatprep.mubr.f32.mxu0 0.0
          %3371 = vmatmul.mubr.f32.gmra.mrb[0].mxu0 %v3288
          %v3372 = vpop.f32.mrb[0].mxu0
          %v3373 = vadd.f32 %v3305, %v3372
          %v3374 = vpop.f32.mrb[0].mxu0
          %3375 = vdwg.mxu0
          %vm3376 = vcmask 49152
          %3377 = vst.msk [vmem:[%s347] sm:$0x1] %vm3376, %v3373
        $region64: #{tpu_custom_call.1} parent=55 // pred_fallthru
          _
        %s3378 = sand.u32 %s239, 1
        %s3379 = scalar_lea.sflag [#allocation5], %s3378
        %s3380 = sand.u32 %s239, 1
        %s3381 = scalar_lea.vmem [#allocation4], %s3380
        // Predicated region
        $region65: #{tpu_custom_call.1} parent=55 // pred_check
          %p3382 = pneg %p249
        $region66: #{tpu_custom_call.1} parent=55 // pred_check_branch
          %3384 = sbr.rel (%p3382) target = $region68
        $region67: #{tpu_custom_call.1} parent=55 // pred_region
          %s3386 = ssub.s32 16, 16
          %3387 = vsyncadd %s3379, %s3386
          %s3388 = smul.addr %s27, 16
          %s3389 = scalar_lea.hbm %s9, %s3388
          %s3391 = sshll.u32 %s3381, 4
          %s3392 = int_to_ptr.vmem [resolvable:$true] %s3391
          %3394 = dma.vmem_to_hbm [thread:$0]  %s3392, 16, %s3389, %s3379
        $region68: #{tpu_custom_call.1} parent=55 // pred_fallthru
          _
      $region56: #{tpu_custom_call.1} parent=5 // pred_fallthru
        _
      %p3395 = scmp.le.s32.totalorder 2, %s18
      // Predicated region
      $region69: #{tpu_custom_call.1} parent=5 // pred_check
        %p3396 = pneg %p3395
      $region70: #{tpu_custom_call.1} parent=5 // pred_check_branch
        %3398 = sbr.rel (%p3396) target = $region72
      $region71: #{tpu_custom_call.1} parent=5 // pred_region
        %s3399 = ssub.s32 %s18, 2
        // Predicated region
        $region73: #{tpu_custom_call.1} parent=71 // pred_check
          %p3400 = pneg %p255
        $region74: #{tpu_custom_call.1} parent=71 // pred_check_branch
          %3402 = sbr.rel (%p3400) target = $region76
        $region75: #{tpu_custom_call.1} parent=71 // pred_region
          %s3403 = sand.u32 %s240, 1
          %s3404 = scalar_lea.sflag [#allocation5], %s3403
          %s3405 = sand.u32 %s240, 1
          %s3406 = scalar_lea.vmem [#allocation4], %s3405
          %3407 = dma.done %s3404, 16
        $region76: #{tpu_custom_call.1} parent=71 // pred_fallthru
          _
      $region72: #{tpu_custom_call.1} parent=5 // pred_fallthru
        _
    $region6: #{tpu_custom_call.1} parent=1 // loop_footer
      %s22 = sadd.s32 1, %s18
    $region7: #{tpu_custom_call.1} parent=1 // loop_footer_branch
      %17 = sbr.rel target = $region3
    $region8: #{tpu_custom_call.1} parent=1 // loop_exit
      _
    %3408 = vsyncpa [#allocation5], 1
    %s3409 = scalar_lea.sflag [#allocation5], 1
    %3410 = vsyncpa %s3409, 1

</llo_original>
